<compile_context>
chip_gen: v5e
topology: v5e:2x2
jax: 0.10.0
libtpu: 0.0.40
codegen_flags: <defaults>
</compile_context>

<pallas_src>
import jax
import jax.numpy as jnp
from jax import lax
from jax.experimental import pallas as pl
from jax.experimental.pallas import tpu as pltpu

BN_EPS = 1e-5  # nn.BatchNorm2d default eps


def _relation_net_kernel(xs_ref, w1_ref, b1_ref, w2_ref, b2_ref,
                         wf1_ref, bf1_ref, wf2_ref, bf2_ref,
                         o_ref, p1_scr, a2_scr, hm_scr):
    f32 = jnp.float32
    bf16 = jnp.bfloat16

    # ---- layer1: conv3x3(128->64, VALID) + BN + ReLU + MaxPool(2).
    # Pool is fused by computing the conv on the four (di, dj) pooling phases
    # (input arrives parity-split, so every patch is a contiguous slice) and
    # taking an elementwise max.  Rows of the (64, 64) result are (i*8 + j)
    # over the pooled 8x8 grid.
    pooled = None
    for di in range(2):
        for dj in range(2):
            acc = jnp.zeros((64, 64), f32)
            for dy in range(3):
                for dx in range(3):
                    ar, ac = di + dy, dj + dx
                    pr, qr = ar & 1, ar >> 1
                    pc, qc = ac & 1, ac >> 1
                    patch = xs_ref[pr * 2 + pc, qr:qr + 8, qc:qc + 8, :]
                    patch = patch.reshape(64, 128).astype(bf16)
                    acc = acc + jnp.dot(patch, w1_ref[dy * 3 + dx],
                                        preferred_element_type=f32)
            pooled = acc if pooled is None else jnp.maximum(pooled, acc)
    # BN bias + ReLU commute with the max over phases (both are monotone).
    p1_scr[...] = jnp.maximum(pooled + b1_ref[...], 0.0).astype(bf16)

    # ---- layer2: conv3x3(64->64, VALID) on the pooled 8x8 map.
    # A_dx[r, c] = sum_dy p1[r+dy, c] @ W2[dy, dx]   (r in 0..5, c in 0..7)
    # h2[r, s]   = sum_dx A_dx[r, s+dx]              (s in 0..5)
    accs = [jnp.zeros((48, 64), f32) for _ in range(3)]
    for dy in range(3):
        patch = p1_scr[dy * 8:dy * 8 + 48, :]          # (48, 64) bf16, rows = r*8 + c
        for dx in range(3):
            accs[dx] = accs[dx] + jnp.dot(patch, w2_ref[dy * 3 + dx],
                                          preferred_element_type=f32)
    for dx in range(3):
        a2_scr[dx] = accs[dx]

    def h2_row(r):                                      # one conv2 output row, (6, 64) f32
        return (a2_scr[0, r * 8 + 0:r * 8 + 6, :]
                + a2_scr[1, r * 8 + 1:r * 8 + 7, :]
                + a2_scr[2, r * 8 + 2:r * 8 + 8, :])

    # MaxPool(2) + BN bias + ReLU, then fc1 as nine K=64 matmul-accumulations
    # in (h, w) spatial order (avoids a lane-relayout flatten of the 3x3x64 map).
    facc = jnp.zeros((1, 8), f32)
    for i in range(3):
        hm_scr[...] = jnp.maximum(h2_row(2 * i), h2_row(2 * i + 1))   # pooled over rows
        for j in range(3):
            wm = jnp.maximum(hm_scr[2 * j:2 * j + 1, :],
                             hm_scr[2 * j + 1:2 * j + 2, :])          # pooled over cols
            p2 = jnp.maximum(wm + b2_ref[...], 0.0)                   # (1, 64) f32
            facc = facc + jnp.dot(p2, wf1_ref[i * 3 + j],
                                  preferred_element_type=f32)

    f1 = jnp.maximum(facc + bf1_ref[...], 0.0)                        # fc1 + ReLU, (1, 8)
    logit = jnp.sum(f1 * wf2_ref[...], axis=-1, keepdims=True) + bf2_ref[...]
    o_ref[0] = 1.0 / (1.0 + jnp.exp(-logit))                          # sigmoid


def relation_network_forward(x_nchw, params):
    """RelationNetwork.forward (eval-mode BatchNorm) as a single fused Pallas kernel."""
    B, C, H, W = x_nchw.shape
    if (C, H, W) != (128, 18, 18):
        raise ValueError("kernel is specialized to (128, 18, 18) inputs")
    f32, bf16 = jnp.float32, jnp.bfloat16

    # NCHW -> NHWC, then parity-split rows/cols (space-to-depth by the pool
    # stride) so every conv+pool phase patch is a contiguous in-kernel slice.
    x = jnp.transpose(x_nchw, (0, 2, 3, 1)).astype(f32)               # (B, 18, 18, 128)
    xs = x.reshape(B, 9, 2, 9, 2, 128).transpose(0, 2, 4, 1, 3, 5)
    xs = xs.reshape(B * 4, 9, 9, 128)                                 # row = b*4 + pr*2 + pc

    def fold_conv(w_oihw, b_conv, bn):
        gamma, beta, mean, var = bn
        scale = gamma / jnp.sqrt(var + BN_EPS)                        # (Cout,)
        w_eff = w_oihw * scale[:, None, None, None]
        b_eff = beta + (b_conv - mean) * scale
        cout, cin = w_oihw.shape[0], w_oihw.shape[1]
        w_taps = jnp.transpose(w_eff, (2, 3, 1, 0)).reshape(9, cin, cout)
        return w_taps.astype(bf16), b_eff.reshape(1, cout).astype(f32)

    w1, b1 = fold_conv(params["conv1_w"], params["conv1_b"], params["bn1"])
    w2, b2 = fold_conv(params["conv2_w"], params["conv2_b"], params["bn2"])

    # fc1 weight: PyTorch flatten order is (c, h, w); regroup per spatial tap
    # (h*3+w, cin, cout) to match the kernel's NHWC pooled layout.
    wf1 = params["fc1_w"].reshape(8, 64, 9).transpose(2, 1, 0).astype(f32)   # (9, 64, 8)
    bf1 = params["fc1_b"].reshape(1, 8).astype(f32)
    wf2 = params["fc2_w"].reshape(1, 8).astype(f32)
    bf2 = params["fc2_b"].reshape(1, 1).astype(f32)

    out = pl.pallas_call(
        _relation_net_kernel,
        out_shape=jax.ShapeDtypeStruct((B, 1, 1), f32),
        grid=(B,),
        in_specs=[
            pl.BlockSpec((4, 9, 9, 128), lambda n: (n, 0, 0, 0)),   # parity-split image
            pl.BlockSpec((9, 128, 64), lambda n: (0, 0, 0)),        # conv1 taps (BN folded)
            pl.BlockSpec((1, 64), lambda n: (0, 0)),                # conv1+BN bias
            pl.BlockSpec((9, 64, 64), lambda n: (0, 0, 0)),         # conv2 taps (BN folded)
            pl.BlockSpec((1, 64), lambda n: (0, 0)),                # conv2+BN bias
            pl.BlockSpec((9, 64, 8), lambda n: (0, 0, 0)),          # fc1 per-tap weight
            pl.BlockSpec((1, 8), lambda n: (0, 0)),                 # fc1 bias
            pl.BlockSpec((1, 8), lambda n: (0, 0)),                 # fc2 weight
            pl.BlockSpec((1, 1), lambda n: (0, 0)),                 # fc2 bias
        ],
        out_specs=pl.BlockSpec((1, 1, 1), lambda n: (n, 0, 0)),
        scratch_shapes=[
            pltpu.VMEM((64, 64), bf16),     # pooled layer1 output (8x8x64, rows i*8+j)
            pltpu.VMEM((3, 48, 64), f32),   # per-dx partial conv2 sums
            pltpu.VMEM((6, 64), f32),       # row-pair max buffer for pool2
        ],
        compiler_params=pltpu.CompilerParams(dimension_semantics=("parallel",)),
    )(xs, w1, b1, w2, b2, wf1, bf1, wf2, bf2)
    return out.reshape(B, 1)


def init_params(key):
    """Deterministic synthetic parameters matching the module's shapes (PyTorch layouts)."""
    ks = jax.random.split(key, 16)

    def n(k, shape, scale):
        return scale * jax.random.normal(k, shape, jnp.float32)

    def bn(k1, k2, k3, k4, c):
        return (1.0 + 0.1 * jax.random.normal(k1, (c,), jnp.float32),   # gamma
                n(k2, (c,), 0.1),                                       # beta
                n(k3, (c,), 0.1),                                       # running mean
                jax.random.uniform(k4, (c,), jnp.float32, 0.5, 1.5))    # running var

    return {
        "conv1_w": n(ks[0], (64, 128, 3, 3), 0.03),
        "conv1_b": n(ks[1], (64,), 0.02),
        "bn1": bn(ks[2], ks[3], ks[4], ks[5], 64),
        "conv2_w": n(ks[6], (64, 64, 3, 3), 0.05),
        "conv2_b": n(ks[7], (64,), 0.02),
        "bn2": bn(ks[8], ks[9], ks[10], ks[11], 64),
        "fc1_w": n(ks[12], (8, 576), 1.0 / 24.0),
        "fc1_b": n(ks[13], (8,), 0.05),
        "fc2_w": n(ks[14], (1, 8), 0.3),
        "fc2_b": n(ks[15], (1,), 0.1),
    }


def ref_forward(x_nchw, params):
    """Pure-JAX f32 reference of the same forward (eval-mode BatchNorm)."""
    x = x_nchw.astype(jnp.float32)

    def block(h, w, b, bnp):
        out = lax.conv_general_dilated(
            h, w, window_strides=(1, 1), padding="VALID",
            dimension_numbers=("NCHW", "OIHW", "NCHW"),
            precision=lax.Precision.HIGHEST)
        out = out + b.reshape(1, -1, 1, 1)
        g, be, m, v = bnp
        out = (out - m.reshape(1, -1, 1, 1)) / jnp.sqrt(v.reshape(1, -1, 1, 1) + BN_EPS)
        out = out * g.reshape(1, -1, 1, 1) + be.reshape(1, -1, 1, 1)
        out = jnp.maximum(out, 0.0)
        return lax.reduce_window(out, -jnp.inf, lax.max,
                                 (1, 1, 2, 2), (1, 1, 2, 2), "VALID")

    h = block(x, params["conv1_w"], params["conv1_b"], params["bn1"])
    h = block(h, params["conv2_w"], params["conv2_b"], params["bn2"])
    flat = h.reshape(h.shape[0], -1)                                  # NCHW flatten order
    f1 = jnp.maximum(jnp.dot(flat, params["fc1_w"].T,
                             precision=lax.Precision.HIGHEST) + params["fc1_b"], 0.0)
    logit = jnp.dot(f1, params["fc2_w"].T,
                    precision=lax.Precision.HIGHEST) + params["fc2_b"]
    return jax.nn.sigmoid(logit)


if __name__ == "__main__":
    key = jax.random.PRNGKey(0)
    k_x, k_p = jax.random.split(key)

    # Smallest input consistent with fc1 = Linear(64*3*3, 8): 18x18 spatial.
    B = 2
    x = jax.random.normal(k_x, (B, 128, 18, 18), jnp.float32)
    params = init_params(k_p)

    out = jax.block_until_ready(relation_network_forward(x, params))
    ref = jax.block_until_ready(ref_forward(x, params))

    if out.shape != (B, 1):
        raise AssertionError(f"bad output shape {out.shape}")
    max_err = float(jnp.max(jnp.abs(out - ref)))
    if not jnp.allclose(out, ref, atol=1e-2, rtol=1e-2):
        raise AssertionError(f"mismatch vs reference: max abs err = {max_err}")

    print("KERNEL_OK")
</pallas_src>

<mosaic_0001>
module attributes {stable_mosaic.version = 11 : i64} {
  func.func @_relation_net_kernel(%arg0: i32, %arg1: memref<4x9x9x128xf32, #tpu.memory_space<vmem>>, %arg2: memref<9x128x64xbf16, #tpu.memory_space<vmem>>, %arg3: memref<1x64xf32, #tpu.memory_space<vmem>>, %arg4: memref<9x64x64xbf16, #tpu.memory_space<vmem>>, %arg5: memref<1x64xf32, #tpu.memory_space<vmem>>, %arg6: memref<9x64x8xf32, #tpu.memory_space<vmem>>, %arg7: memref<1x8xf32, #tpu.memory_space<vmem>>, %arg8: memref<1x8xf32, #tpu.memory_space<vmem>>, %arg9: memref<1x1xf32, #tpu.memory_space<vmem>>, %arg10: memref<1x1x1xf32, #tpu.memory_space<vmem>>, %arg11: memref<64x64xbf16, #tpu.memory_space<vmem>>, %arg12: memref<3x48x64xf32, #tpu.memory_space<vmem>>, %arg13: memref<6x64xf32, #tpu.memory_space<vmem>>) attributes {dimension_semantics = [#tpu.dimension_semantics<parallel>], iteration_bounds = array<i64: 2>, scalar_prefetch = 0 : i64, scratch_operands = 3 : i64, tpu.core_type = #tpu.core_type<tc>, window_params = [{transform_indices = @transform_0, window_bounds = array<i64: 4, 9, 9, 128>}, {pipeline_mode = #tpu.pipeline_mode<synchronous>, transform_indices = @transform_1, window_bounds = array<i64: 9, 128, 64>}, {pipeline_mode = #tpu.pipeline_mode<synchronous>, transform_indices = @transform_2, window_bounds = array<i64: 1, 64>}, {pipeline_mode = #tpu.pipeline_mode<synchronous>, transform_indices = @transform_3, window_bounds = array<i64: 9, 64, 64>}, {pipeline_mode = #tpu.pipeline_mode<synchronous>, transform_indices = @transform_4, window_bounds = array<i64: 1, 64>}, {pipeline_mode = #tpu.pipeline_mode<synchronous>, transform_indices = @transform_5, window_bounds = array<i64: 9, 64, 8>}, {pipeline_mode = #tpu.pipeline_mode<synchronous>, transform_indices = @transform_6, window_bounds = array<i64: 1, 8>}, {pipeline_mode = #tpu.pipeline_mode<synchronous>, transform_indices = @transform_7, window_bounds = array<i64: 1, 8>}, {pipeline_mode = #tpu.pipeline_mode<synchronous>, transform_indices = @transform_8, window_bounds = array<i64: 1, 1>}, {transform_indices = @transform_9, window_bounds = array<i64: 1, 1, 1>}]} {
    %cst = arith.constant 0.000000e+00 : f32
    %0 = vector.broadcast %cst : f32 to vector<64x64xf32>
    %c0 = arith.constant 0 : index
    %c0_0 = arith.constant 0 : index
    %c0_1 = arith.constant 0 : index
    %c0_2 = arith.constant 0 : index
    %1 = vector.load %arg1[%c0, %c0_0, %c0_1, %c0_2] : memref<4x9x9x128xf32, #tpu.memory_space<vmem>>, vector<1x8x8x128xf32>
    %2 = vector.shape_cast %1 : vector<1x8x8x128xf32> to vector<8x8x128xf32>
    %3 = vector.shape_cast %2 : vector<8x8x128xf32> to vector<64x128xf32>
    %4 = arith.truncf %3 : vector<64x128xf32> to vector<64x128xbf16>
    %c0_3 = arith.constant 0 : index
    %c0_4 = arith.constant 0 : index
    %c0_5 = arith.constant 0 : index
    %5 = vector.load %arg2[%c0_3, %c0_4, %c0_5] : memref<9x128x64xbf16, #tpu.memory_space<vmem>>, vector<1x128x64xbf16>
    %6 = vector.shape_cast %5 : vector<1x128x64xbf16> to vector<128x64xbf16>
    %cst_6 = arith.constant dense<0.000000e+00> : vector<64x64xf32>
    %7 = tpu.matmul %4, %6, %cst_6 {dimension_numbers = #tpu.dot_dimension_numbers<[1], [0], [0], [1], [0, 0, 1, 1], [], []>} : vector<64x128xbf16>, vector<128x64xbf16>, vector<64x64xf32> -> vector<64x64xf32>
    %8 = arith.addf %0, %7 : vector<64x64xf32>
    %c1 = arith.constant 1 : index
    %c0_7 = arith.constant 0 : index
    %c0_8 = arith.constant 0 : index
    %c0_9 = arith.constant 0 : index
    %9 = vector.load %arg1[%c1, %c0_7, %c0_8, %c0_9] : memref<4x9x9x128xf32, #tpu.memory_space<vmem>>, vector<1x8x8x128xf32>
    %10 = vector.shape_cast %9 : vector<1x8x8x128xf32> to vector<8x8x128xf32>
    %11 = vector.shape_cast %10 : vector<8x8x128xf32> to vector<64x128xf32>
    %12 = arith.truncf %11 : vector<64x128xf32> to vector<64x128xbf16>
    %c1_10 = arith.constant 1 : index
    %c0_11 = arith.constant 0 : index
    %c0_12 = arith.constant 0 : index
    %13 = vector.load %arg2[%c1_10, %c0_11, %c0_12] : memref<9x128x64xbf16, #tpu.memory_space<vmem>>, vector<1x128x64xbf16>
    %14 = vector.shape_cast %13 : vector<1x128x64xbf16> to vector<128x64xbf16>
    %cst_13 = arith.constant dense<0.000000e+00> : vector<64x64xf32>
    %15 = tpu.matmul %12, %14, %cst_13 {dimension_numbers = #tpu.dot_dimension_numbers<[1], [0], [0], [1], [0, 0, 1, 1], [], []>} : vector<64x128xbf16>, vector<128x64xbf16>, vector<64x64xf32> -> vector<64x64xf32>
    %16 = arith.addf %8, %15 : vector<64x64xf32>
    %c0_14 = arith.constant 0 : index
    %c0_15 = arith.constant 0 : index
    %c1_16 = arith.constant 1 : index
    %c0_17 = arith.constant 0 : index
    %17 = vector.load %arg1[%c0_14, %c0_15, %c1_16, %c0_17] : memref<4x9x9x128xf32, #tpu.memory_space<vmem>>, vector<1x8x8x128xf32>
    %18 = vector.shape_cast %17 : vector<1x8x8x128xf32> to vector<8x8x128xf32>
    %19 = vector.shape_cast %18 : vector<8x8x128xf32> to vector<64x128xf32>
    %20 = arith.truncf %19 : vector<64x128xf32> to vector<64x128xbf16>
    %c2 = arith.constant 2 : index
    %c0_18 = arith.constant 0 : index
    %c0_19 = arith.constant 0 : index
    %21 = vector.load %arg2[%c2, %c0_18, %c0_19] : memref<9x128x64xbf16, #tpu.memory_space<vmem>>, vector<1x128x64xbf16>
    %22 = vector.shape_cast %21 : vector<1x128x64xbf16> to vector<128x64xbf16>
    %cst_20 = arith.constant dense<0.000000e+00> : vector<64x64xf32>
    %23 = tpu.matmul %20, %22, %cst_20 {dimension_numbers = #tpu.dot_dimension_numbers<[1], [0], [0], [1], [0, 0, 1, 1], [], []>} : vector<64x128xbf16>, vector<128x64xbf16>, vector<64x64xf32> -> vector<64x64xf32>
    %24 = arith.addf %16, %23 : vector<64x64xf32>
    %c2_21 = arith.constant 2 : index
    %c0_22 = arith.constant 0 : index
    %c0_23 = arith.constant 0 : index
    %c0_24 = arith.constant 0 : index
    %25 = vector.load %arg1[%c2_21, %c0_22, %c0_23, %c0_24] : memref<4x9x9x128xf32, #tpu.memory_space<vmem>>, vector<1x8x8x128xf32>
    %26 = vector.shape_cast %25 : vector<1x8x8x128xf32> to vector<8x8x128xf32>
    %27 = vector.shape_cast %26 : vector<8x8x128xf32> to vector<64x128xf32>
    %28 = arith.truncf %27 : vector<64x128xf32> to vector<64x128xbf16>
    %c3 = arith.constant 3 : index
    %c0_25 = arith.constant 0 : index
    %c0_26 = arith.constant 0 : index
    %29 = vector.load %arg2[%c3, %c0_25, %c0_26] : memref<9x128x64xbf16, #tpu.memory_space<vmem>>, vector<1x128x64xbf16>
    %30 = vector.shape_cast %29 : vector<1x128x64xbf16> to vector<128x64xbf16>
    %cst_27 = arith.constant dense<0.000000e+00> : vector<64x64xf32>
    %31 = tpu.matmul %28, %30, %cst_27 {dimension_numbers = #tpu.dot_dimension_numbers<[1], [0], [0], [1], [0, 0, 1, 1], [], []>} : vector<64x128xbf16>, vector<128x64xbf16>, vector<64x64xf32> -> vector<64x64xf32>
    %32 = arith.addf %24, %31 : vector<64x64xf32>
    %c3_28 = arith.constant 3 : index
    %c0_29 = arith.constant 0 : index
    %c0_30 = arith.constant 0 : index
    %c0_31 = arith.constant 0 : index
    %33 = vector.load %arg1[%c3_28, %c0_29, %c0_30, %c0_31] : memref<4x9x9x128xf32, #tpu.memory_space<vmem>>, vector<1x8x8x128xf32>
    %34 = vector.shape_cast %33 : vector<1x8x8x128xf32> to vector<8x8x128xf32>
    %35 = vector.shape_cast %34 : vector<8x8x128xf32> to vector<64x128xf32>
    %36 = arith.truncf %35 : vector<64x128xf32> to vector<64x128xbf16>
    %c4 = arith.constant 4 : index
    %c0_32 = arith.constant 0 : index
    %c0_33 = arith.constant 0 : index
    %37 = vector.load %arg2[%c4, %c0_32, %c0_33] : memref<9x128x64xbf16, #tpu.memory_space<vmem>>, vector<1x128x64xbf16>
    %38 = vector.shape_cast %37 : vector<1x128x64xbf16> to vector<128x64xbf16>
    %cst_34 = arith.constant dense<0.000000e+00> : vector<64x64xf32>
    %39 = tpu.matmul %36, %38, %cst_34 {dimension_numbers = #tpu.dot_dimension_numbers<[1], [0], [0], [1], [0, 0, 1, 1], [], []>} : vector<64x128xbf16>, vector<128x64xbf16>, vector<64x64xf32> -> vector<64x64xf32>
    %40 = arith.addf %32, %39 : vector<64x64xf32>
    %c2_35 = arith.constant 2 : index
    %c0_36 = arith.constant 0 : index
    %c1_37 = arith.constant 1 : index
    %c0_38 = arith.constant 0 : index
    %41 = vector.load %arg1[%c2_35, %c0_36, %c1_37, %c0_38] : memref<4x9x9x128xf32, #tpu.memory_space<vmem>>, vector<1x8x8x128xf32>
    %42 = vector.shape_cast %41 : vector<1x8x8x128xf32> to vector<8x8x128xf32>
    %43 = vector.shape_cast %42 : vector<8x8x128xf32> to vector<64x128xf32>
    %44 = arith.truncf %43 : vector<64x128xf32> to vector<64x128xbf16>
    %c5 = arith.constant 5 : index
    %c0_39 = arith.constant 0 : index
    %c0_40 = arith.constant 0 : index
    %45 = vector.load %arg2[%c5, %c0_39, %c0_40] : memref<9x128x64xbf16, #tpu.memory_space<vmem>>, vector<1x128x64xbf16>
    %46 = vector.shape_cast %45 : vector<1x128x64xbf16> to vector<128x64xbf16>
    %cst_41 = arith.constant dense<0.000000e+00> : vector<64x64xf32>
    %47 = tpu.matmul %44, %46, %cst_41 {dimension_numbers = #tpu.dot_dimension_numbers<[1], [0], [0], [1], [0, 0, 1, 1], [], []>} : vector<64x128xbf16>, vector<128x64xbf16>, vector<64x64xf32> -> vector<64x64xf32>
    %48 = arith.addf %40, %47 : vector<64x64xf32>
    %c0_42 = arith.constant 0 : index
    %c1_43 = arith.constant 1 : index
    %c0_44 = arith.constant 0 : index
    %c0_45 = arith.constant 0 : index
    %49 = vector.load %arg1[%c0_42, %c1_43, %c0_44, %c0_45] : memref<4x9x9x128xf32, #tpu.memory_space<vmem>>, vector<1x8x8x128xf32>
    %50 = vector.shape_cast %49 : vector<1x8x8x128xf32> to vector<8x8x128xf32>
    %51 = vector.shape_cast %50 : vector<8x8x128xf32> to vector<64x128xf32>
    %52 = arith.truncf %51 : vector<64x128xf32> to vector<64x128xbf16>
    %c6 = arith.constant 6 : index
    %c0_46 = arith.constant 0 : index
    %c0_47 = arith.constant 0 : index
    %53 = vector.load %arg2[%c6, %c0_46, %c0_47] : memref<9x128x64xbf16, #tpu.memory_space<vmem>>, vector<1x128x64xbf16>
    %54 = vector.shape_cast %53 : vector<1x128x64xbf16> to vector<128x64xbf16>
    %cst_48 = arith.constant dense<0.000000e+00> : vector<64x64xf32>
    %55 = tpu.matmul %52, %54, %cst_48 {dimension_numbers = #tpu.dot_dimension_numbers<[1], [0], [0], [1], [0, 0, 1, 1], [], []>} : vector<64x128xbf16>, vector<128x64xbf16>, vector<64x64xf32> -> vector<64x64xf32>
    %56 = arith.addf %48, %55 : vector<64x64xf32>
    %c1_49 = arith.constant 1 : index
    %c1_50 = arith.constant 1 : index
    %c0_51 = arith.constant 0 : index
    %c0_52 = arith.constant 0 : index
    %57 = vector.load %arg1[%c1_49, %c1_50, %c0_51, %c0_52] : memref<4x9x9x128xf32, #tpu.memory_space<vmem>>, vector<1x8x8x128xf32>
    %58 = vector.shape_cast %57 : vector<1x8x8x128xf32> to vector<8x8x128xf32>
    %59 = vector.shape_cast %58 : vector<8x8x128xf32> to vector<64x128xf32>
    %60 = arith.truncf %59 : vector<64x128xf32> to vector<64x128xbf16>
    %c7 = arith.constant 7 : index
    %c0_53 = arith.constant 0 : index
    %c0_54 = arith.constant 0 : index
    %61 = vector.load %arg2[%c7, %c0_53, %c0_54] : memref<9x128x64xbf16, #tpu.memory_space<vmem>>, vector<1x128x64xbf16>
    %62 = vector.shape_cast %61 : vector<1x128x64xbf16> to vector<128x64xbf16>
    %cst_55 = arith.constant dense<0.000000e+00> : vector<64x64xf32>
    %63 = tpu.matmul %60, %62, %cst_55 {dimension_numbers = #tpu.dot_dimension_numbers<[1], [0], [0], [1], [0, 0, 1, 1], [], []>} : vector<64x128xbf16>, vector<128x64xbf16>, vector<64x64xf32> -> vector<64x64xf32>
    %64 = arith.addf %56, %63 : vector<64x64xf32>
    %c0_56 = arith.constant 0 : index
    %c1_57 = arith.constant 1 : index
    %c1_58 = arith.constant 1 : index
    %c0_59 = arith.constant 0 : index
    %65 = vector.load %arg1[%c0_56, %c1_57, %c1_58, %c0_59] : memref<4x9x9x128xf32, #tpu.memory_space<vmem>>, vector<1x8x8x128xf32>
    %66 = vector.shape_cast %65 : vector<1x8x8x128xf32> to vector<8x8x128xf32>
    %67 = vector.shape_cast %66 : vector<8x8x128xf32> to vector<64x128xf32>
    %68 = arith.truncf %67 : vector<64x128xf32> to vector<64x128xbf16>
    %c8 = arith.constant 8 : index
    %c0_60 = arith.constant 0 : index
    %c0_61 = arith.constant 0 : index
    %69 = vector.load %arg2[%c8, %c0_60, %c0_61] : memref<9x128x64xbf16, #tpu.memory_space<vmem>>, vector<1x128x64xbf16>
    %70 = vector.shape_cast %69 : vector<1x128x64xbf16> to vector<128x64xbf16>
    %cst_62 = arith.constant dense<0.000000e+00> : vector<64x64xf32>
    %71 = tpu.matmul %68, %70, %cst_62 {dimension_numbers = #tpu.dot_dimension_numbers<[1], [0], [0], [1], [0, 0, 1, 1], [], []>} : vector<64x128xbf16>, vector<128x64xbf16>, vector<64x64xf32> -> vector<64x64xf32>
    %72 = arith.addf %64, %71 : vector<64x64xf32>
    %cst_63 = arith.constant 0.000000e+00 : f32
    %73 = vector.broadcast %cst_63 : f32 to vector<64x64xf32>
    %c1_64 = arith.constant 1 : index
    %c0_65 = arith.constant 0 : index
    %c0_66 = arith.constant 0 : index
    %c0_67 = arith.constant 0 : index
    %74 = vector.load %arg1[%c1_64, %c0_65, %c0_66, %c0_67] : memref<4x9x9x128xf32, #tpu.memory_space<vmem>>, vector<1x8x8x128xf32>
    %75 = vector.shape_cast %74 : vector<1x8x8x128xf32> to vector<8x8x128xf32>
    %76 = vector.shape_cast %75 : vector<8x8x128xf32> to vector<64x128xf32>
    %77 = arith.truncf %76 : vector<64x128xf32> to vector<64x128xbf16>
    %c0_68 = arith.constant 0 : index
    %c0_69 = arith.constant 0 : index
    %c0_70 = arith.constant 0 : index
    %78 = vector.load %arg2[%c0_68, %c0_69, %c0_70] : memref<9x128x64xbf16, #tpu.memory_space<vmem>>, vector<1x128x64xbf16>
    %79 = vector.shape_cast %78 : vector<1x128x64xbf16> to vector<128x64xbf16>
    %cst_71 = arith.constant dense<0.000000e+00> : vector<64x64xf32>
    %80 = tpu.matmul %77, %79, %cst_71 {dimension_numbers = #tpu.dot_dimension_numbers<[1], [0], [0], [1], [0, 0, 1, 1], [], []>} : vector<64x128xbf16>, vector<128x64xbf16>, vector<64x64xf32> -> vector<64x64xf32>
    %81 = arith.addf %73, %80 : vector<64x64xf32>
    %c0_72 = arith.constant 0 : index
    %c0_73 = arith.constant 0 : index
    %c1_74 = arith.constant 1 : index
    %c0_75 = arith.constant 0 : index
    %82 = vector.load %arg1[%c0_72, %c0_73, %c1_74, %c0_75] : memref<4x9x9x128xf32, #tpu.memory_space<vmem>>, vector<1x8x8x128xf32>
    %83 = vector.shape_cast %82 : vector<1x8x8x128xf32> to vector<8x8x128xf32>
    %84 = vector.shape_cast %83 : vector<8x8x128xf32> to vector<64x128xf32>
    %85 = arith.truncf %84 : vector<64x128xf32> to vector<64x128xbf16>
    %c1_76 = arith.constant 1 : index
    %c0_77 = arith.constant 0 : index
    %c0_78 = arith.constant 0 : index
    %86 = vector.load %arg2[%c1_76, %c0_77, %c0_78] : memref<9x128x64xbf16, #tpu.memory_space<vmem>>, vector<1x128x64xbf16>
    %87 = vector.shape_cast %86 : vector<1x128x64xbf16> to vector<128x64xbf16>
    %cst_79 = arith.constant dense<0.000000e+00> : vector<64x64xf32>
    %88 = tpu.matmul %85, %87, %cst_79 {dimension_numbers = #tpu.dot_dimension_numbers<[1], [0], [0], [1], [0, 0, 1, 1], [], []>} : vector<64x128xbf16>, vector<128x64xbf16>, vector<64x64xf32> -> vector<64x64xf32>
    %89 = arith.addf %81, %88 : vector<64x64xf32>
    %c1_80 = arith.constant 1 : index
    %c0_81 = arith.constant 0 : index
    %c1_82 = arith.constant 1 : index
    %c0_83 = arith.constant 0 : index
    %90 = vector.load %arg1[%c1_80, %c0_81, %c1_82, %c0_83] : memref<4x9x9x128xf32, #tpu.memory_space<vmem>>, vector<1x8x8x128xf32>
    %91 = vector.shape_cast %90 : vector<1x8x8x128xf32> to vector<8x8x128xf32>
    %92 = vector.shape_cast %91 : vector<8x8x128xf32> to vector<64x128xf32>
    %93 = arith.truncf %92 : vector<64x128xf32> to vector<64x128xbf16>
    %c2_84 = arith.constant 2 : index
    %c0_85 = arith.constant 0 : index
    %c0_86 = arith.constant 0 : index
    %94 = vector.load %arg2[%c2_84, %c0_85, %c0_86] : memref<9x128x64xbf16, #tpu.memory_space<vmem>>, vector<1x128x64xbf16>
    %95 = vector.shape_cast %94 : vector<1x128x64xbf16> to vector<128x64xbf16>
    %cst_87 = arith.constant dense<0.000000e+00> : vector<64x64xf32>
    %96 = tpu.matmul %93, %95, %cst_87 {dimension_numbers = #tpu.dot_dimension_numbers<[1], [0], [0], [1], [0, 0, 1, 1], [], []>} : vector<64x128xbf16>, vector<128x64xbf16>, vector<64x64xf32> -> vector<64x64xf32>
    %97 = arith.addf %89, %96 : vector<64x64xf32>
    %c3_88 = arith.constant 3 : index
    %c0_89 = arith.constant 0 : index
    %c0_90 = arith.constant 0 : index
    %c0_91 = arith.constant 0 : index
    %98 = vector.load %arg1[%c3_88, %c0_89, %c0_90, %c0_91] : memref<4x9x9x128xf32, #tpu.memory_space<vmem>>, vector<1x8x8x128xf32>
    %99 = vector.shape_cast %98 : vector<1x8x8x128xf32> to vector<8x8x128xf32>
    %100 = vector.shape_cast %99 : vector<8x8x128xf32> to vector<64x128xf32>
    %101 = arith.truncf %100 : vector<64x128xf32> to vector<64x128xbf16>
    %c3_92 = arith.constant 3 : index
    %c0_93 = arith.constant 0 : index
    %c0_94 = arith.constant 0 : index
    %102 = vector.load %arg2[%c3_92, %c0_93, %c0_94] : memref<9x128x64xbf16, #tpu.memory_space<vmem>>, vector<1x128x64xbf16>
    %103 = vector.shape_cast %102 : vector<1x128x64xbf16> to vector<128x64xbf16>
    %cst_95 = arith.constant dense<0.000000e+00> : vector<64x64xf32>
    %104 = tpu.matmul %101, %103, %cst_95 {dimension_numbers = #tpu.dot_dimension_numbers<[1], [0], [0], [1], [0, 0, 1, 1], [], []>} : vector<64x128xbf16>, vector<128x64xbf16>, vector<64x64xf32> -> vector<64x64xf32>
    %105 = arith.addf %97, %104 : vector<64x64xf32>
    %c2_96 = arith.constant 2 : index
    %c0_97 = arith.constant 0 : index
    %c1_98 = arith.constant 1 : index
    %c0_99 = arith.constant 0 : index
    %106 = vector.load %arg1[%c2_96, %c0_97, %c1_98, %c0_99] : memref<4x9x9x128xf32, #tpu.memory_space<vmem>>, vector<1x8x8x128xf32>
    %107 = vector.shape_cast %106 : vector<1x8x8x128xf32> to vector<8x8x128xf32>
    %108 = vector.shape_cast %107 : vector<8x8x128xf32> to vector<64x128xf32>
    %109 = arith.truncf %108 : vector<64x128xf32> to vector<64x128xbf16>
    %c4_100 = arith.constant 4 : index
    %c0_101 = arith.constant 0 : index
    %c0_102 = arith.constant 0 : index
    %110 = vector.load %arg2[%c4_100, %c0_101, %c0_102] : memref<9x128x64xbf16, #tpu.memory_space<vmem>>, vector<1x128x64xbf16>
    %111 = vector.shape_cast %110 : vector<1x128x64xbf16> to vector<128x64xbf16>
    %cst_103 = arith.constant dense<0.000000e+00> : vector<64x64xf32>
    %112 = tpu.matmul %109, %111, %cst_103 {dimension_numbers = #tpu.dot_dimension_numbers<[1], [0], [0], [1], [0, 0, 1, 1], [], []>} : vector<64x128xbf16>, vector<128x64xbf16>, vector<64x64xf32> -> vector<64x64xf32>
    %113 = arith.addf %105, %112 : vector<64x64xf32>
    %c3_104 = arith.constant 3 : index
    %c0_105 = arith.constant 0 : index
    %c1_106 = arith.constant 1 : index
    %c0_107 = arith.constant 0 : index
    %114 = vector.load %arg1[%c3_104, %c0_105, %c1_106, %c0_107] : memref<4x9x9x128xf32, #tpu.memory_space<vmem>>, vector<1x8x8x128xf32>
    %115 = vector.shape_cast %114 : vector<1x8x8x128xf32> to vector<8x8x128xf32>
    %116 = vector.shape_cast %115 : vector<8x8x128xf32> to vector<64x128xf32>
    %117 = arith.truncf %116 : vector<64x128xf32> to vector<64x128xbf16>
    %c5_108 = arith.constant 5 : index
    %c0_109 = arith.constant 0 : index
    %c0_110 = arith.constant 0 : index
    %118 = vector.load %arg2[%c5_108, %c0_109, %c0_110] : memref<9x128x64xbf16, #tpu.memory_space<vmem>>, vector<1x128x64xbf16>
    %119 = vector.shape_cast %118 : vector<1x128x64xbf16> to vector<128x64xbf16>
    %cst_111 = arith.constant dense<0.000000e+00> : vector<64x64xf32>
    %120 = tpu.matmul %117, %119, %cst_111 {dimension_numbers = #tpu.dot_dimension_numbers<[1], [0], [0], [1], [0, 0, 1, 1], [], []>} : vector<64x128xbf16>, vector<128x64xbf16>, vector<64x64xf32> -> vector<64x64xf32>
    %121 = arith.addf %113, %120 : vector<64x64xf32>
    %c1_112 = arith.constant 1 : index
    %c1_113 = arith.constant 1 : index
    %c0_114 = arith.constant 0 : index
    %c0_115 = arith.constant 0 : index
    %122 = vector.load %arg1[%c1_112, %c1_113, %c0_114, %c0_115] : memref<4x9x9x128xf32, #tpu.memory_space<vmem>>, vector<1x8x8x128xf32>
    %123 = vector.shape_cast %122 : vector<1x8x8x128xf32> to vector<8x8x128xf32>
    %124 = vector.shape_cast %123 : vector<8x8x128xf32> to vector<64x128xf32>
    %125 = arith.truncf %124 : vector<64x128xf32> to vector<64x128xbf16>
    %c6_116 = arith.constant 6 : index
    %c0_117 = arith.constant 0 : index
    %c0_118 = arith.constant 0 : index
    %126 = vector.load %arg2[%c6_116, %c0_117, %c0_118] : memref<9x128x64xbf16, #tpu.memory_space<vmem>>, vector<1x128x64xbf16>
    %127 = vector.shape_cast %126 : vector<1x128x64xbf16> to vector<128x64xbf16>
    %cst_119 = arith.constant dense<0.000000e+00> : vector<64x64xf32>
    %128 = tpu.matmul %125, %127, %cst_119 {dimension_numbers = #tpu.dot_dimension_numbers<[1], [0], [0], [1], [0, 0, 1, 1], [], []>} : vector<64x128xbf16>, vector<128x64xbf16>, vector<64x64xf32> -> vector<64x64xf32>
    %129 = arith.addf %121, %128 : vector<64x64xf32>
    %c0_120 = arith.constant 0 : index
    %c1_121 = arith.constant 1 : index
    %c1_122 = arith.constant 1 : index
    %c0_123 = arith.constant 0 : index
    %130 = vector.load %arg1[%c0_120, %c1_121, %c1_122, %c0_123] : memref<4x9x9x128xf32, #tpu.memory_space<vmem>>, vector<1x8x8x128xf32>
    %131 = vector.shape_cast %130 : vector<1x8x8x128xf32> to vector<8x8x128xf32>
    %132 = vector.shape_cast %131 : vector<8x8x128xf32> to vector<64x128xf32>
    %133 = arith.truncf %132 : vector<64x128xf32> to vector<64x128xbf16>
    %c7_124 = arith.constant 7 : index
    %c0_125 = arith.constant 0 : index
    %c0_126 = arith.constant 0 : index
    %134 = vector.load %arg2[%c7_124, %c0_125, %c0_126] : memref<9x128x64xbf16, #tpu.memory_space<vmem>>, vector<1x128x64xbf16>
    %135 = vector.shape_cast %134 : vector<1x128x64xbf16> to vector<128x64xbf16>
    %cst_127 = arith.constant dense<0.000000e+00> : vector<64x64xf32>
    %136 = tpu.matmul %133, %135, %cst_127 {dimension_numbers = #tpu.dot_dimension_numbers<[1], [0], [0], [1], [0, 0, 1, 1], [], []>} : vector<64x128xbf16>, vector<128x64xbf16>, vector<64x64xf32> -> vector<64x64xf32>
    %137 = arith.addf %129, %136 : vector<64x64xf32>
    %c1_128 = arith.constant 1 : index
    %c1_129 = arith.constant 1 : index
    %c1_130 = arith.constant 1 : index
    %c0_131 = arith.constant 0 : index
    %138 = vector.load %arg1[%c1_128, %c1_129, %c1_130, %c0_131] : memref<4x9x9x128xf32, #tpu.memory_space<vmem>>, vector<1x8x8x128xf32>
    %139 = vector.shape_cast %138 : vector<1x8x8x128xf32> to vector<8x8x128xf32>
    %140 = vector.shape_cast %139 : vector<8x8x128xf32> to vector<64x128xf32>
    %141 = arith.truncf %140 : vector<64x128xf32> to vector<64x128xbf16>
    %c8_132 = arith.constant 8 : index
    %c0_133 = arith.constant 0 : index
    %c0_134 = arith.constant 0 : index
    %142 = vector.load %arg2[%c8_132, %c0_133, %c0_134] : memref<9x128x64xbf16, #tpu.memory_space<vmem>>, vector<1x128x64xbf16>
    %143 = vector.shape_cast %142 : vector<1x128x64xbf16> to vector<128x64xbf16>
    %cst_135 = arith.constant dense<0.000000e+00> : vector<64x64xf32>
    %144 = tpu.matmul %141, %143, %cst_135 {dimension_numbers = #tpu.dot_dimension_numbers<[1], [0], [0], [1], [0, 0, 1, 1], [], []>} : vector<64x128xbf16>, vector<128x64xbf16>, vector<64x64xf32> -> vector<64x64xf32>
    %145 = arith.addf %137, %144 : vector<64x64xf32>
    %146 = arith.maximumf %72, %145 : vector<64x64xf32>
    %cst_136 = arith.constant 0.000000e+00 : f32
    %147 = vector.broadcast %cst_136 : f32 to vector<64x64xf32>
    %c2_137 = arith.constant 2 : index
    %c0_138 = arith.constant 0 : index
    %c0_139 = arith.constant 0 : index
    %c0_140 = arith.constant 0 : index
    %148 = vector.load %arg1[%c2_137, %c0_138, %c0_139, %c0_140] : memref<4x9x9x128xf32, #tpu.memory_space<vmem>>, vector<1x8x8x128xf32>
    %149 = vector.shape_cast %148 : vector<1x8x8x128xf32> to vector<8x8x128xf32>
    %150 = vector.shape_cast %149 : vector<8x8x128xf32> to vector<64x128xf32>
    %151 = arith.truncf %150 : vector<64x128xf32> to vector<64x128xbf16>
    %c0_141 = arith.constant 0 : index
    %c0_142 = arith.constant 0 : index
    %c0_143 = arith.constant 0 : index
    %152 = vector.load %arg2[%c0_141, %c0_142, %c0_143] : memref<9x128x64xbf16, #tpu.memory_space<vmem>>, vector<1x128x64xbf16>
    %153 = vector.shape_cast %152 : vector<1x128x64xbf16> to vector<128x64xbf16>
    %cst_144 = arith.constant dense<0.000000e+00> : vector<64x64xf32>
    %154 = tpu.matmul %151, %153, %cst_144 {dimension_numbers = #tpu.dot_dimension_numbers<[1], [0], [0], [1], [0, 0, 1, 1], [], []>} : vector<64x128xbf16>, vector<128x64xbf16>, vector<64x64xf32> -> vector<64x64xf32>
    %155 = arith.addf %147, %154 : vector<64x64xf32>
    %c3_145 = arith.constant 3 : index
    %c0_146 = arith.constant 0 : index
    %c0_147 = arith.constant 0 : index
    %c0_148 = arith.constant 0 : index
    %156 = vector.load %arg1[%c3_145, %c0_146, %c0_147, %c0_148] : memref<4x9x9x128xf32, #tpu.memory_space<vmem>>, vector<1x8x8x128xf32>
    %157 = vector.shape_cast %156 : vector<1x8x8x128xf32> to vector<8x8x128xf32>
    %158 = vector.shape_cast %157 : vector<8x8x128xf32> to vector<64x128xf32>
    %159 = arith.truncf %158 : vector<64x128xf32> to vector<64x128xbf16>
    %c1_149 = arith.constant 1 : index
    %c0_150 = arith.constant 0 : index
    %c0_151 = arith.constant 0 : index
    %160 = vector.load %arg2[%c1_149, %c0_150, %c0_151] : memref<9x128x64xbf16, #tpu.memory_space<vmem>>, vector<1x128x64xbf16>
    %161 = vector.shape_cast %160 : vector<1x128x64xbf16> to vector<128x64xbf16>
    %cst_152 = arith.constant dense<0.000000e+00> : vector<64x64xf32>
    %162 = tpu.matmul %159, %161, %cst_152 {dimension_numbers = #tpu.dot_dimension_numbers<[1], [0], [0], [1], [0, 0, 1, 1], [], []>} : vector<64x128xbf16>, vector<128x64xbf16>, vector<64x64xf32> -> vector<64x64xf32>
    %163 = arith.addf %155, %162 : vector<64x64xf32>
    %c2_153 = arith.constant 2 : index
    %c0_154 = arith.constant 0 : index
    %c1_155 = arith.constant 1 : index
    %c0_156 = arith.constant 0 : index
    %164 = vector.load %arg1[%c2_153, %c0_154, %c1_155, %c0_156] : memref<4x9x9x128xf32, #tpu.memory_space<vmem>>, vector<1x8x8x128xf32>
    %165 = vector.shape_cast %164 : vector<1x8x8x128xf32> to vector<8x8x128xf32>
    %166 = vector.shape_cast %165 : vector<8x8x128xf32> to vector<64x128xf32>
    %167 = arith.truncf %166 : vector<64x128xf32> to vector<64x128xbf16>
    %c2_157 = arith.constant 2 : index
    %c0_158 = arith.constant 0 : index
    %c0_159 = arith.constant 0 : index
    %168 = vector.load %arg2[%c2_157, %c0_158, %c0_159] : memref<9x128x64xbf16, #tpu.memory_space<vmem>>, vector<1x128x64xbf16>
    %169 = vector.shape_cast %168 : vector<1x128x64xbf16> to vector<128x64xbf16>
    %cst_160 = arith.constant dense<0.000000e+00> : vector<64x64xf32>
    %170 = tpu.matmul %167, %169, %cst_160 {dimension_numbers = #tpu.dot_dimension_numbers<[1], [0], [0], [1], [0, 0, 1, 1], [], []>} : vector<64x128xbf16>, vector<128x64xbf16>, vector<64x64xf32> -> vector<64x64xf32>
    %171 = arith.addf %163, %170 : vector<64x64xf32>
    %c0_161 = arith.constant 0 : index
    %c1_162 = arith.constant 1 : index
    %c0_163 = arith.constant 0 : index
    %c0_164 = arith.constant 0 : index
    %172 = vector.load %arg1[%c0_161, %c1_162, %c0_163, %c0_164] : memref<4x9x9x128xf32, #tpu.memory_space<vmem>>, vector<1x8x8x128xf32>
    %173 = vector.shape_cast %172 : vector<1x8x8x128xf32> to vector<8x8x128xf32>
    %174 = vector.shape_cast %173 : vector<8x8x128xf32> to vector<64x128xf32>
    %175 = arith.truncf %174 : vector<64x128xf32> to vector<64x128xbf16>
    %c3_165 = arith.constant 3 : index
    %c0_166 = arith.constant 0 : index
    %c0_167 = arith.constant 0 : index
    %176 = vector.load %arg2[%c3_165, %c0_166, %c0_167] : memref<9x128x64xbf16, #tpu.memory_space<vmem>>, vector<1x128x64xbf16>
    %177 = vector.shape_cast %176 : vector<1x128x64xbf16> to vector<128x64xbf16>
    %cst_168 = arith.constant dense<0.000000e+00> : vector<64x64xf32>
    %178 = tpu.matmul %175, %177, %cst_168 {dimension_numbers = #tpu.dot_dimension_numbers<[1], [0], [0], [1], [0, 0, 1, 1], [], []>} : vector<64x128xbf16>, vector<128x64xbf16>, vector<64x64xf32> -> vector<64x64xf32>
    %179 = arith.addf %171, %178 : vector<64x64xf32>
    %c1_169 = arith.constant 1 : index
    %c1_170 = arith.constant 1 : index
    %c0_171 = arith.constant 0 : index
    %c0_172 = arith.constant 0 : index
    %180 = vector.load %arg1[%c1_169, %c1_170, %c0_171, %c0_172] : memref<4x9x9x128xf32, #tpu.memory_space<vmem>>, vector<1x8x8x128xf32>
    %181 = vector.shape_cast %180 : vector<1x8x8x128xf32> to vector<8x8x128xf32>
    %182 = vector.shape_cast %181 : vector<8x8x128xf32> to vector<64x128xf32>
    %183 = arith.truncf %182 : vector<64x128xf32> to vector<64x128xbf16>
    %c4_173 = arith.constant 4 : index
    %c0_174 = arith.constant 0 : index
    %c0_175 = arith.constant 0 : index
    %184 = vector.load %arg2[%c4_173, %c0_174, %c0_175] : memref<9x128x64xbf16, #tpu.memory_space<vmem>>, vector<1x128x64xbf16>
    %185 = vector.shape_cast %184 : vector<1x128x64xbf16> to vector<128x64xbf16>
    %cst_176 = arith.constant dense<0.000000e+00> : vector<64x64xf32>
    %186 = tpu.matmul %183, %185, %cst_176 {dimension_numbers = #tpu.dot_dimension_numbers<[1], [0], [0], [1], [0, 0, 1, 1], [], []>} : vector<64x128xbf16>, vector<128x64xbf16>, vector<64x64xf32> -> vector<64x64xf32>
    %187 = arith.addf %179, %186 : vector<64x64xf32>
    %c0_177 = arith.constant 0 : index
    %c1_178 = arith.constant 1 : index
    %c1_179 = arith.constant 1 : index
    %c0_180 = arith.constant 0 : index
    %188 = vector.load %arg1[%c0_177, %c1_178, %c1_179, %c0_180] : memref<4x9x9x128xf32, #tpu.memory_space<vmem>>, vector<1x8x8x128xf32>
    %189 = vector.shape_cast %188 : vector<1x8x8x128xf32> to vector<8x8x128xf32>
    %190 = vector.shape_cast %189 : vector<8x8x128xf32> to vector<64x128xf32>
    %191 = arith.truncf %190 : vector<64x128xf32> to vector<64x128xbf16>
    %c5_181 = arith.constant 5 : index
    %c0_182 = arith.constant 0 : index
    %c0_183 = arith.constant 0 : index
    %192 = vector.load %arg2[%c5_181, %c0_182, %c0_183] : memref<9x128x64xbf16, #tpu.memory_space<vmem>>, vector<1x128x64xbf16>
    %193 = vector.shape_cast %192 : vector<1x128x64xbf16> to vector<128x64xbf16>
    %cst_184 = arith.constant dense<0.000000e+00> : vector<64x64xf32>
    %194 = tpu.matmul %191, %193, %cst_184 {dimension_numbers = #tpu.dot_dimension_numbers<[1], [0], [0], [1], [0, 0, 1, 1], [], []>} : vector<64x128xbf16>, vector<128x64xbf16>, vector<64x64xf32> -> vector<64x64xf32>
    %195 = arith.addf %187, %194 : vector<64x64xf32>
    %c2_185 = arith.constant 2 : index
    %c1_186 = arith.constant 1 : index
    %c0_187 = arith.constant 0 : index
    %c0_188 = arith.constant 0 : index
    %196 = vector.load %arg1[%c2_185, %c1_186, %c0_187, %c0_188] : memref<4x9x9x128xf32, #tpu.memory_space<vmem>>, vector<1x8x8x128xf32>
    %197 = vector.shape_cast %196 : vector<1x8x8x128xf32> to vector<8x8x128xf32>
    %198 = vector.shape_cast %197 : vector<8x8x128xf32> to vector<64x128xf32>
    %199 = arith.truncf %198 : vector<64x128xf32> to vector<64x128xbf16>
    %c6_189 = arith.constant 6 : index
    %c0_190 = arith.constant 0 : index
    %c0_191 = arith.constant 0 : index
    %200 = vector.load %arg2[%c6_189, %c0_190, %c0_191] : memref<9x128x64xbf16, #tpu.memory_space<vmem>>, vector<1x128x64xbf16>
    %201 = vector.shape_cast %200 : vector<1x128x64xbf16> to vector<128x64xbf16>
    %cst_192 = arith.constant dense<0.000000e+00> : vector<64x64xf32>
    %202 = tpu.matmul %199, %201, %cst_192 {dimension_numbers = #tpu.dot_dimension_numbers<[1], [0], [0], [1], [0, 0, 1, 1], [], []>} : vector<64x128xbf16>, vector<128x64xbf16>, vector<64x64xf32> -> vector<64x64xf32>
    %203 = arith.addf %195, %202 : vector<64x64xf32>
    %c3_193 = arith.constant 3 : index
    %c1_194 = arith.constant 1 : index
    %c0_195 = arith.constant 0 : index
    %c0_196 = arith.constant 0 : index
    %204 = vector.load %arg1[%c3_193, %c1_194, %c0_195, %c0_196] : memref<4x9x9x128xf32, #tpu.memory_space<vmem>>, vector<1x8x8x128xf32>
    %205 = vector.shape_cast %204 : vector<1x8x8x128xf32> to vector<8x8x128xf32>
    %206 = vector.shape_cast %205 : vector<8x8x128xf32> to vector<64x128xf32>
    %207 = arith.truncf %206 : vector<64x128xf32> to vector<64x128xbf16>
    %c7_197 = arith.constant 7 : index
    %c0_198 = arith.constant 0 : index
    %c0_199 = arith.constant 0 : index
    %208 = vector.load %arg2[%c7_197, %c0_198, %c0_199] : memref<9x128x64xbf16, #tpu.memory_space<vmem>>, vector<1x128x64xbf16>
    %209 = vector.shape_cast %208 : vector<1x128x64xbf16> to vector<128x64xbf16>
    %cst_200 = arith.constant dense<0.000000e+00> : vector<64x64xf32>
    %210 = tpu.matmul %207, %209, %cst_200 {dimension_numbers = #tpu.dot_dimension_numbers<[1], [0], [0], [1], [0, 0, 1, 1], [], []>} : vector<64x128xbf16>, vector<128x64xbf16>, vector<64x64xf32> -> vector<64x64xf32>
    %211 = arith.addf %203, %210 : vector<64x64xf32>
    %c2_201 = arith.constant 2 : index
    %c1_202 = arith.constant 1 : index
    %c1_203 = arith.constant 1 : index
    %c0_204 = arith.constant 0 : index
    %212 = vector.load %arg1[%c2_201, %c1_202, %c1_203, %c0_204] : memref<4x9x9x128xf32, #tpu.memory_space<vmem>>, vector<1x8x8x128xf32>
    %213 = vector.shape_cast %212 : vector<1x8x8x128xf32> to vector<8x8x128xf32>
    %214 = vector.shape_cast %213 : vector<8x8x128xf32> to vector<64x128xf32>
    %215 = arith.truncf %214 : vector<64x128xf32> to vector<64x128xbf16>
    %c8_205 = arith.constant 8 : index
    %c0_206 = arith.constant 0 : index
    %c0_207 = arith.constant 0 : index
    %216 = vector.load %arg2[%c8_205, %c0_206, %c0_207] : memref<9x128x64xbf16, #tpu.memory_space<vmem>>, vector<1x128x64xbf16>
    %217 = vector.shape_cast %216 : vector<1x128x64xbf16> to vector<128x64xbf16>
    %cst_208 = arith.constant dense<0.000000e+00> : vector<64x64xf32>
    %218 = tpu.matmul %215, %217, %cst_208 {dimension_numbers = #tpu.dot_dimension_numbers<[1], [0], [0], [1], [0, 0, 1, 1], [], []>} : vector<64x128xbf16>, vector<128x64xbf16>, vector<64x64xf32> -> vector<64x64xf32>
    %219 = arith.addf %211, %218 : vector<64x64xf32>
    %220 = arith.maximumf %146, %219 : vector<64x64xf32>
    %cst_209 = arith.constant 0.000000e+00 : f32
    %221 = vector.broadcast %cst_209 : f32 to vector<64x64xf32>
    %c3_210 = arith.constant 3 : index
    %c0_211 = arith.constant 0 : index
    %c0_212 = arith.constant 0 : index
    %c0_213 = arith.constant 0 : index
    %222 = vector.load %arg1[%c3_210, %c0_211, %c0_212, %c0_213] : memref<4x9x9x128xf32, #tpu.memory_space<vmem>>, vector<1x8x8x128xf32>
    %223 = vector.shape_cast %222 : vector<1x8x8x128xf32> to vector<8x8x128xf32>
    %224 = vector.shape_cast %223 : vector<8x8x128xf32> to vector<64x128xf32>
    %225 = arith.truncf %224 : vector<64x128xf32> to vector<64x128xbf16>
    %c0_214 = arith.constant 0 : index
    %c0_215 = arith.constant 0 : index
    %c0_216 = arith.constant 0 : index
    %226 = vector.load %arg2[%c0_214, %c0_215, %c0_216] : memref<9x128x64xbf16, #tpu.memory_space<vmem>>, vector<1x128x64xbf16>
    %227 = vector.shape_cast %226 : vector<1x128x64xbf16> to vector<128x64xbf16>
    %cst_217 = arith.constant dense<0.000000e+00> : vector<64x64xf32>
    %228 = tpu.matmul %225, %227, %cst_217 {dimension_numbers = #tpu.dot_dimension_numbers<[1], [0], [0], [1], [0, 0, 1, 1], [], []>} : vector<64x128xbf16>, vector<128x64xbf16>, vector<64x64xf32> -> vector<64x64xf32>
    %229 = arith.addf %221, %228 : vector<64x64xf32>
    %c2_218 = arith.constant 2 : index
    %c0_219 = arith.constant 0 : index
    %c1_220 = arith.constant 1 : index
    %c0_221 = arith.constant 0 : index
    %230 = vector.load %arg1[%c2_218, %c0_219, %c1_220, %c0_221] : memref<4x9x9x128xf32, #tpu.memory_space<vmem>>, vector<1x8x8x128xf32>
    %231 = vector.shape_cast %230 : vector<1x8x8x128xf32> to vector<8x8x128xf32>
    %232 = vector.shape_cast %231 : vector<8x8x128xf32> to vector<64x128xf32>
    %233 = arith.truncf %232 : vector<64x128xf32> to vector<64x128xbf16>
    %c1_222 = arith.constant 1 : index
    %c0_223 = arith.constant 0 : index
    %c0_224 = arith.constant 0 : index
    %234 = vector.load %arg2[%c1_222, %c0_223, %c0_224] : memref<9x128x64xbf16, #tpu.memory_space<vmem>>, vector<1x128x64xbf16>
    %235 = vector.shape_cast %234 : vector<1x128x64xbf16> to vector<128x64xbf16>
    %cst_225 = arith.constant dense<0.000000e+00> : vector<64x64xf32>
    %236 = tpu.matmul %233, %235, %cst_225 {dimension_numbers = #tpu.dot_dimension_numbers<[1], [0], [0], [1], [0, 0, 1, 1], [], []>} : vector<64x128xbf16>, vector<128x64xbf16>, vector<64x64xf32> -> vector<64x64xf32>
    %237 = arith.addf %229, %236 : vector<64x64xf32>
    %c3_226 = arith.constant 3 : index
    %c0_227 = arith.constant 0 : index
    %c1_228 = arith.constant 1 : index
    %c0_229 = arith.constant 0 : index
    %238 = vector.load %arg1[%c3_226, %c0_227, %c1_228, %c0_229] : memref<4x9x9x128xf32, #tpu.memory_space<vmem>>, vector<1x8x8x128xf32>
    %239 = vector.shape_cast %238 : vector<1x8x8x128xf32> to vector<8x8x128xf32>
    %240 = vector.shape_cast %239 : vector<8x8x128xf32> to vector<64x128xf32>
    %241 = arith.truncf %240 : vector<64x128xf32> to vector<64x128xbf16>
    %c2_230 = arith.constant 2 : index
    %c0_231 = arith.constant 0 : index
    %c0_232 = arith.constant 0 : index
    %242 = vector.load %arg2[%c2_230, %c0_231, %c0_232] : memref<9x128x64xbf16, #tpu.memory_space<vmem>>, vector<1x128x64xbf16>
    %243 = vector.shape_cast %242 : vector<1x128x64xbf16> to vector<128x64xbf16>
    %cst_233 = arith.constant dense<0.000000e+00> : vector<64x64xf32>
    %244 = tpu.matmul %241, %243, %cst_233 {dimension_numbers = #tpu.dot_dimension_numbers<[1], [0], [0], [1], [0, 0, 1, 1], [], []>} : vector<64x128xbf16>, vector<128x64xbf16>, vector<64x64xf32> -> vector<64x64xf32>
    %245 = arith.addf %237, %244 : vector<64x64xf32>
    %c1_234 = arith.constant 1 : index
    %c1_235 = arith.constant 1 : index
    %c0_236 = arith.constant 0 : index
    %c0_237 = arith.constant 0 : index
    %246 = vector.load %arg1[%c1_234, %c1_235, %c0_236, %c0_237] : memref<4x9x9x128xf32, #tpu.memory_space<vmem>>, vector<1x8x8x128xf32>
    %247 = vector.shape_cast %246 : vector<1x8x8x128xf32> to vector<8x8x128xf32>
    %248 = vector.shape_cast %247 : vector<8x8x128xf32> to vector<64x128xf32>
    %249 = arith.truncf %248 : vector<64x128xf32> to vector<64x128xbf16>
    %c3_238 = arith.constant 3 : index
    %c0_239 = arith.constant 0 : index
    %c0_240 = arith.constant 0 : index
    %250 = vector.load %arg2[%c3_238, %c0_239, %c0_240] : memref<9x128x64xbf16, #tpu.memory_space<vmem>>, vector<1x128x64xbf16>
    %251 = vector.shape_cast %250 : vector<1x128x64xbf16> to vector<128x64xbf16>
    %cst_241 = arith.constant dense<0.000000e+00> : vector<64x64xf32>
    %252 = tpu.matmul %249, %251, %cst_241 {dimension_numbers = #tpu.dot_dimension_numbers<[1], [0], [0], [1], [0, 0, 1, 1], [], []>} : vector<64x128xbf16>, vector<128x64xbf16>, vector<64x64xf32> -> vector<64x64xf32>
    %253 = arith.addf %245, %252 : vector<64x64xf32>
    %c0_242 = arith.constant 0 : index
    %c1_243 = arith.constant 1 : index
    %c1_244 = arith.constant 1 : index
    %c0_245 = arith.constant 0 : index
    %254 = vector.load %arg1[%c0_242, %c1_243, %c1_244, %c0_245] : memref<4x9x9x128xf32, #tpu.memory_space<vmem>>, vector<1x8x8x128xf32>
    %255 = vector.shape_cast %254 : vector<1x8x8x128xf32> to vector<8x8x128xf32>
    %256 = vector.shape_cast %255 : vector<8x8x128xf32> to vector<64x128xf32>
    %257 = arith.truncf %256 : vector<64x128xf32> to vector<64x128xbf16>
    %c4_246 = arith.constant 4 : index
    %c0_247 = arith.constant 0 : index
    %c0_248 = arith.constant 0 : index
    %258 = vector.load %arg2[%c4_246, %c0_247, %c0_248] : memref<9x128x64xbf16, #tpu.memory_space<vmem>>, vector<1x128x64xbf16>
    %259 = vector.shape_cast %258 : vector<1x128x64xbf16> to vector<128x64xbf16>
    %cst_249 = arith.constant dense<0.000000e+00> : vector<64x64xf32>
    %260 = tpu.matmul %257, %259, %cst_249 {dimension_numbers = #tpu.dot_dimension_numbers<[1], [0], [0], [1], [0, 0, 1, 1], [], []>} : vector<64x128xbf16>, vector<128x64xbf16>, vector<64x64xf32> -> vector<64x64xf32>
    %261 = arith.addf %253, %260 : vector<64x64xf32>
    %c1_250 = arith.constant 1 : index
    %c1_251 = arith.constant 1 : index
    %c1_252 = arith.constant 1 : index
    %c0_253 = arith.constant 0 : index
    %262 = vector.load %arg1[%c1_250, %c1_251, %c1_252, %c0_253] : memref<4x9x9x128xf32, #tpu.memory_space<vmem>>, vector<1x8x8x128xf32>
    %263 = vector.shape_cast %262 : vector<1x8x8x128xf32> to vector<8x8x128xf32>
    %264 = vector.shape_cast %263 : vector<8x8x128xf32> to vector<64x128xf32>
    %265 = arith.truncf %264 : vector<64x128xf32> to vector<64x128xbf16>
    %c5_254 = arith.constant 5 : index
    %c0_255 = arith.constant 0 : index
    %c0_256 = arith.constant 0 : index
    %266 = vector.load %arg2[%c5_254, %c0_255, %c0_256] : memref<9x128x64xbf16, #tpu.memory_space<vmem>>, vector<1x128x64xbf16>
    %267 = vector.shape_cast %266 : vector<1x128x64xbf16> to vector<128x64xbf16>
    %cst_257 = arith.constant dense<0.000000e+00> : vector<64x64xf32>
    %268 = tpu.matmul %265, %267, %cst_257 {dimension_numbers = #tpu.dot_dimension_numbers<[1], [0], [0], [1], [0, 0, 1, 1], [], []>} : vector<64x128xbf16>, vector<128x64xbf16>, vector<64x64xf32> -> vector<64x64xf32>
    %269 = arith.addf %261, %268 : vector<64x64xf32>
    %c3_258 = arith.constant 3 : index
    %c1_259 = arith.constant 1 : index
    %c0_260 = arith.constant 0 : index
    %c0_261 = arith.constant 0 : index
    %270 = vector.load %arg1[%c3_258, %c1_259, %c0_260, %c0_261] : memref<4x9x9x128xf32, #tpu.memory_space<vmem>>, vector<1x8x8x128xf32>
    %271 = vector.shape_cast %270 : vector<1x8x8x128xf32> to vector<8x8x128xf32>
    %272 = vector.shape_cast %271 : vector<8x8x128xf32> to vector<64x128xf32>
    %273 = arith.truncf %272 : vector<64x128xf32> to vector<64x128xbf16>
    %c6_262 = arith.constant 6 : index
    %c0_263 = arith.constant 0 : index
    %c0_264 = arith.constant 0 : index
    %274 = vector.load %arg2[%c6_262, %c0_263, %c0_264] : memref<9x128x64xbf16, #tpu.memory_space<vmem>>, vector<1x128x64xbf16>
    %275 = vector.shape_cast %274 : vector<1x128x64xbf16> to vector<128x64xbf16>
    %cst_265 = arith.constant dense<0.000000e+00> : vector<64x64xf32>
    %276 = tpu.matmul %273, %275, %cst_265 {dimension_numbers = #tpu.dot_dimension_numbers<[1], [0], [0], [1], [0, 0, 1, 1], [], []>} : vector<64x128xbf16>, vector<128x64xbf16>, vector<64x64xf32> -> vector<64x64xf32>
    %277 = arith.addf %269, %276 : vector<64x64xf32>
    %c2_266 = arith.constant 2 : index
    %c1_267 = arith.constant 1 : index
    %c1_268 = arith.constant 1 : index
    %c0_269 = arith.constant 0 : index
    %278 = vector.load %arg1[%c2_266, %c1_267, %c1_268, %c0_269] : memref<4x9x9x128xf32, #tpu.memory_space<vmem>>, vector<1x8x8x128xf32>
    %279 = vector.shape_cast %278 : vector<1x8x8x128xf32> to vector<8x8x128xf32>
    %280 = vector.shape_cast %279 : vector<8x8x128xf32> to vector<64x128xf32>
    %281 = arith.truncf %280 : vector<64x128xf32> to vector<64x128xbf16>
    %c7_270 = arith.constant 7 : index
    %c0_271 = arith.constant 0 : index
    %c0_272 = arith.constant 0 : index
    %282 = vector.load %arg2[%c7_270, %c0_271, %c0_272] : memref<9x128x64xbf16, #tpu.memory_space<vmem>>, vector<1x128x64xbf16>
    %283 = vector.shape_cast %282 : vector<1x128x64xbf16> to vector<128x64xbf16>
    %cst_273 = arith.constant dense<0.000000e+00> : vector<64x64xf32>
    %284 = tpu.matmul %281, %283, %cst_273 {dimension_numbers = #tpu.dot_dimension_numbers<[1], [0], [0], [1], [0, 0, 1, 1], [], []>} : vector<64x128xbf16>, vector<128x64xbf16>, vector<64x64xf32> -> vector<64x64xf32>
    %285 = arith.addf %277, %284 : vector<64x64xf32>
    %c3_274 = arith.constant 3 : index
    %c1_275 = arith.constant 1 : index
    %c1_276 = arith.constant 1 : index
    %c0_277 = arith.constant 0 : index
    %286 = vector.load %arg1[%c3_274, %c1_275, %c1_276, %c0_277] : memref<4x9x9x128xf32, #tpu.memory_space<vmem>>, vector<1x8x8x128xf32>
    %287 = vector.shape_cast %286 : vector<1x8x8x128xf32> to vector<8x8x128xf32>
    %288 = vector.shape_cast %287 : vector<8x8x128xf32> to vector<64x128xf32>
    %289 = arith.truncf %288 : vector<64x128xf32> to vector<64x128xbf16>
    %c8_278 = arith.constant 8 : index
    %c0_279 = arith.constant 0 : index
    %c0_280 = arith.constant 0 : index
    %290 = vector.load %arg2[%c8_278, %c0_279, %c0_280] : memref<9x128x64xbf16, #tpu.memory_space<vmem>>, vector<1x128x64xbf16>
    %291 = vector.shape_cast %290 : vector<1x128x64xbf16> to vector<128x64xbf16>
    %cst_281 = arith.constant dense<0.000000e+00> : vector<64x64xf32>
    %292 = tpu.matmul %289, %291, %cst_281 {dimension_numbers = #tpu.dot_dimension_numbers<[1], [0], [0], [1], [0, 0, 1, 1], [], []>} : vector<64x128xbf16>, vector<128x64xbf16>, vector<64x64xf32> -> vector<64x64xf32>
    %293 = arith.addf %285, %292 : vector<64x64xf32>
    %294 = arith.maximumf %220, %293 : vector<64x64xf32>
    %c0_282 = arith.constant 0 : index
    %c0_283 = arith.constant 0 : index
    %295 = vector.load %arg3[%c0_282, %c0_283] : memref<1x64xf32, #tpu.memory_space<vmem>>, vector<1x64xf32>
    %296 = vector.broadcast %295 : vector<1x64xf32> to vector<64x64xf32>
    %297 = arith.addf %294, %296 : vector<64x64xf32>
    %cst_284 = arith.constant 0.000000e+00 : f32
    %298 = vector.broadcast %cst_284 : f32 to vector<64x64xf32>
    %299 = arith.maximumf %297, %298 : vector<64x64xf32>
    %300 = arith.truncf %299 : vector<64x64xf32> to vector<64x64xbf16>
    %c0_285 = arith.constant 0 : index
    %c0_286 = arith.constant 0 : index
    %301 = vector.load %arg11[%c0_285, %c0_286] : memref<64x64xbf16, #tpu.memory_space<vmem>>, vector<64x64xbf16>
    tpu.vector_store %arg11[%c0_285, %c0_286], %300 {strides = array<i32>} : memref<64x64xbf16, #tpu.memory_space<vmem>>, vector<64x64xbf16>,
    %cst_287 = arith.constant 0.000000e+00 : f32
    %302 = vector.broadcast %cst_287 : f32 to vector<48x64xf32>
    %cst_288 = arith.constant 0.000000e+00 : f32
    %303 = vector.broadcast %cst_288 : f32 to vector<48x64xf32>
    %cst_289 = arith.constant 0.000000e+00 : f32
    %304 = vector.broadcast %cst_289 : f32 to vector<48x64xf32>
    %c0_290 = arith.constant 0 : index
    %c0_291 = arith.constant 0 : index
    %305 = vector.load %arg11[%c0_290, %c0_291] : memref<64x64xbf16, #tpu.memory_space<vmem>>, vector<48x64xbf16>
    %c0_292 = arith.constant 0 : index
    %c0_293 = arith.constant 0 : index
    %c0_294 = arith.constant 0 : index
    %306 = vector.load %arg4[%c0_292, %c0_293, %c0_294] : memref<9x64x64xbf16, #tpu.memory_space<vmem>>, vector<1x64x64xbf16>
    %307 = vector.shape_cast %306 : vector<1x64x64xbf16> to vector<64x64xbf16>
    %cst_295 = arith.constant dense<0.000000e+00> : vector<48x64xf32>
    %308 = tpu.matmul %305, %307, %cst_295 {dimension_numbers = #tpu.dot_dimension_numbers<[1], [0], [0], [1], [0, 0, 1, 1], [], []>} : vector<48x64xbf16>, vector<64x64xbf16>, vector<48x64xf32> -> vector<48x64xf32>
    %309 = arith.addf %302, %308 : vector<48x64xf32>
    %c1_296 = arith.constant 1 : index
    %c0_297 = arith.constant 0 : index
    %c0_298 = arith.constant 0 : index
    %310 = vector.load %arg4[%c1_296, %c0_297, %c0_298] : memref<9x64x64xbf16, #tpu.memory_space<vmem>>, vector<1x64x64xbf16>
    %311 = vector.shape_cast %310 : vector<1x64x64xbf16> to vector<64x64xbf16>
    %cst_299 = arith.constant dense<0.000000e+00> : vector<48x64xf32>
    %312 = tpu.matmul %305, %311, %cst_299 {dimension_numbers = #tpu.dot_dimension_numbers<[1], [0], [0], [1], [0, 0, 1, 1], [], []>} : vector<48x64xbf16>, vector<64x64xbf16>, vector<48x64xf32> -> vector<48x64xf32>
    %313 = arith.addf %303, %312 : vector<48x64xf32>
    %c2_300 = arith.constant 2 : index
    %c0_301 = arith.constant 0 : index
    %c0_302 = arith.constant 0 : index
    %314 = vector.load %arg4[%c2_300, %c0_301, %c0_302] : memref<9x64x64xbf16, #tpu.memory_space<vmem>>, vector<1x64x64xbf16>
    %315 = vector.shape_cast %314 : vector<1x64x64xbf16> to vector<64x64xbf16>
    %cst_303 = arith.constant dense<0.000000e+00> : vector<48x64xf32>
    %316 = tpu.matmul %305, %315, %cst_303 {dimension_numbers = #tpu.dot_dimension_numbers<[1], [0], [0], [1], [0, 0, 1, 1], [], []>} : vector<48x64xbf16>, vector<64x64xbf16>, vector<48x64xf32> -> vector<48x64xf32>
    %317 = arith.addf %304, %316 : vector<48x64xf32>
    %c8_304 = arith.constant 8 : index
    %c0_305 = arith.constant 0 : index
    %318 = vector.load %arg11[%c8_304, %c0_305] : memref<64x64xbf16, #tpu.memory_space<vmem>>, vector<48x64xbf16>
    %c3_306 = arith.constant 3 : index
    %c0_307 = arith.constant 0 : index
    %c0_308 = arith.constant 0 : index
    %319 = vector.load %arg4[%c3_306, %c0_307, %c0_308] : memref<9x64x64xbf16, #tpu.memory_space<vmem>>, vector<1x64x64xbf16>
    %320 = vector.shape_cast %319 : vector<1x64x64xbf16> to vector<64x64xbf16>
    %cst_309 = arith.constant dense<0.000000e+00> : vector<48x64xf32>
    %321 = tpu.matmul %318, %320, %cst_309 {dimension_numbers = #tpu.dot_dimension_numbers<[1], [0], [0], [1], [0, 0, 1, 1], [], []>} : vector<48x64xbf16>, vector<64x64xbf16>, vector<48x64xf32> -> vector<48x64xf32>
    %322 = arith.addf %309, %321 : vector<48x64xf32>
    %c4_310 = arith.constant 4 : index
    %c0_311 = arith.constant 0 : index
    %c0_312 = arith.constant 0 : index
    %323 = vector.load %arg4[%c4_310, %c0_311, %c0_312] : memref<9x64x64xbf16, #tpu.memory_space<vmem>>, vector<1x64x64xbf16>
    %324 = vector.shape_cast %323 : vector<1x64x64xbf16> to vector<64x64xbf16>
    %cst_313 = arith.constant dense<0.000000e+00> : vector<48x64xf32>
    %325 = tpu.matmul %318, %324, %cst_313 {dimension_numbers = #tpu.dot_dimension_numbers<[1], [0], [0], [1], [0, 0, 1, 1], [], []>} : vector<48x64xbf16>, vector<64x64xbf16>, vector<48x64xf32> -> vector<48x64xf32>
    %326 = arith.addf %313, %325 : vector<48x64xf32>
    %c5_314 = arith.constant 5 : index
    %c0_315 = arith.constant 0 : index
    %c0_316 = arith.constant 0 : index
    %327 = vector.load %arg4[%c5_314, %c0_315, %c0_316] : memref<9x64x64xbf16, #tpu.memory_space<vmem>>, vector<1x64x64xbf16>
    %328 = vector.shape_cast %327 : vector<1x64x64xbf16> to vector<64x64xbf16>
    %cst_317 = arith.constant dense<0.000000e+00> : vector<48x64xf32>
    %329 = tpu.matmul %318, %328, %cst_317 {dimension_numbers = #tpu.dot_dimension_numbers<[1], [0], [0], [1], [0, 0, 1, 1], [], []>} : vector<48x64xbf16>, vector<64x64xbf16>, vector<48x64xf32> -> vector<48x64xf32>
    %330 = arith.addf %317, %329 : vector<48x64xf32>
    %c16 = arith.constant 16 : index
    %c0_318 = arith.constant 0 : index
    %331 = vector.load %arg11[%c16, %c0_318] : memref<64x64xbf16, #tpu.memory_space<vmem>>, vector<48x64xbf16>
    %c6_319 = arith.constant 6 : index
    %c0_320 = arith.constant 0 : index
    %c0_321 = arith.constant 0 : index
    %332 = vector.load %arg4[%c6_319, %c0_320, %c0_321] : memref<9x64x64xbf16, #tpu.memory_space<vmem>>, vector<1x64x64xbf16>
    %333 = vector.shape_cast %332 : vector<1x64x64xbf16> to vector<64x64xbf16>
    %cst_322 = arith.constant dense<0.000000e+00> : vector<48x64xf32>
    %334 = tpu.matmul %331, %333, %cst_322 {dimension_numbers = #tpu.dot_dimension_numbers<[1], [0], [0], [1], [0, 0, 1, 1], [], []>} : vector<48x64xbf16>, vector<64x64xbf16>, vector<48x64xf32> -> vector<48x64xf32>
    %335 = arith.addf %322, %334 : vector<48x64xf32>
    %c7_323 = arith.constant 7 : index
    %c0_324 = arith.constant 0 : index
    %c0_325 = arith.constant 0 : index
    %336 = vector.load %arg4[%c7_323, %c0_324, %c0_325] : memref<9x64x64xbf16, #tpu.memory_space<vmem>>, vector<1x64x64xbf16>
    %337 = vector.shape_cast %336 : vector<1x64x64xbf16> to vector<64x64xbf16>
    %cst_326 = arith.constant dense<0.000000e+00> : vector<48x64xf32>
    %338 = tpu.matmul %331, %337, %cst_326 {dimension_numbers = #tpu.dot_dimension_numbers<[1], [0], [0], [1], [0, 0, 1, 1], [], []>} : vector<48x64xbf16>, vector<64x64xbf16>, vector<48x64xf32> -> vector<48x64xf32>
    %339 = arith.addf %326, %338 : vector<48x64xf32>
    %c8_327 = arith.constant 8 : index
    %c0_328 = arith.constant 0 : index
    %c0_329 = arith.constant 0 : index
    %340 = vector.load %arg4[%c8_327, %c0_328, %c0_329] : memref<9x64x64xbf16, #tpu.memory_space<vmem>>, vector<1x64x64xbf16>
    %341 = vector.shape_cast %340 : vector<1x64x64xbf16> to vector<64x64xbf16>
    %cst_330 = arith.constant dense<0.000000e+00> : vector<48x64xf32>
    %342 = tpu.matmul %331, %341, %cst_330 {dimension_numbers = #tpu.dot_dimension_numbers<[1], [0], [0], [1], [0, 0, 1, 1], [], []>} : vector<48x64xbf16>, vector<64x64xbf16>, vector<48x64xf32> -> vector<48x64xf32>
    %343 = arith.addf %330, %342 : vector<48x64xf32>
    %c0_331 = arith.constant 0 : index
    %c0_332 = arith.constant 0 : index
    %c0_333 = arith.constant 0 : index
    %344 = vector.load %arg12[%c0_331, %c0_332, %c0_333] : memref<3x48x64xf32, #tpu.memory_space<vmem>>, vector<1x48x64xf32>
    %345 = vector.shape_cast %344 : vector<1x48x64xf32> to vector<48x64xf32>
    %346 = vector.shape_cast %335 : vector<48x64xf32> to vector<1x48x64xf32>
    tpu.vector_store %arg12[%c0_331, %c0_332, %c0_333], %346 {strides = array<i32>} : memref<3x48x64xf32, #tpu.memory_space<vmem>>, vector<1x48x64xf32>,
    %c1_334 = arith.constant 1 : index
    %c0_335 = arith.constant 0 : index
    %c0_336 = arith.constant 0 : index
    %347 = vector.load %arg12[%c1_334, %c0_335, %c0_336] : memref<3x48x64xf32, #tpu.memory_space<vmem>>, vector<1x48x64xf32>
    %348 = vector.shape_cast %347 : vector<1x48x64xf32> to vector<48x64xf32>
    %349 = vector.shape_cast %339 : vector<48x64xf32> to vector<1x48x64xf32>
    tpu.vector_store %arg12[%c1_334, %c0_335, %c0_336], %349 {strides = array<i32>} : memref<3x48x64xf32, #tpu.memory_space<vmem>>, vector<1x48x64xf32>,
    %c2_337 = arith.constant 2 : index
    %c0_338 = arith.constant 0 : index
    %c0_339 = arith.constant 0 : index
    %350 = vector.load %arg12[%c2_337, %c0_338, %c0_339] : memref<3x48x64xf32, #tpu.memory_space<vmem>>, vector<1x48x64xf32>
    %351 = vector.shape_cast %350 : vector<1x48x64xf32> to vector<48x64xf32>
    %352 = vector.shape_cast %343 : vector<48x64xf32> to vector<1x48x64xf32>
    tpu.vector_store %arg12[%c2_337, %c0_338, %c0_339], %352 {strides = array<i32>} : memref<3x48x64xf32, #tpu.memory_space<vmem>>, vector<1x48x64xf32>,
    %cst_340 = arith.constant 0.000000e+00 : f32
    %353 = vector.broadcast %cst_340 : f32 to vector<1x8xf32>
    %c0_341 = arith.constant 0 : index
    %c0_342 = arith.constant 0 : index
    %c0_343 = arith.constant 0 : index
    %354 = vector.load %arg12[%c0_341, %c0_342, %c0_343] : memref<3x48x64xf32, #tpu.memory_space<vmem>>, vector<1x6x64xf32>
    %355 = vector.shape_cast %354 : vector<1x6x64xf32> to vector<6x64xf32>
    %c1_344 = arith.constant 1 : index
    %c1_345 = arith.constant 1 : index
    %c0_346 = arith.constant 0 : index
    %356 = vector.load %arg12[%c1_344, %c1_345, %c0_346] : memref<3x48x64xf32, #tpu.memory_space<vmem>>, vector<1x6x64xf32>
    %357 = vector.shape_cast %356 : vector<1x6x64xf32> to vector<6x64xf32>
    %358 = arith.addf %355, %357 : vector<6x64xf32>
    %c2_347 = arith.constant 2 : index
    %c2_348 = arith.constant 2 : index
    %c0_349 = arith.constant 0 : index
    %359 = vector.load %arg12[%c2_347, %c2_348, %c0_349] : memref<3x48x64xf32, #tpu.memory_space<vmem>>, vector<1x6x64xf32>
    %360 = vector.shape_cast %359 : vector<1x6x64xf32> to vector<6x64xf32>
    %361 = arith.addf %358, %360 : vector<6x64xf32>
    %c0_350 = arith.constant 0 : index
    %c8_351 = arith.constant 8 : index
    %c0_352 = arith.constant 0 : index
    %362 = vector.load %arg12[%c0_350, %c8_351, %c0_352] : memref<3x48x64xf32, #tpu.memory_space<vmem>>, vector<1x6x64xf32>
    %363 = vector.shape_cast %362 : vector<1x6x64xf32> to vector<6x64xf32>
    %c1_353 = arith.constant 1 : index
    %c9 = arith.constant 9 : index
    %c0_354 = arith.constant 0 : index
    %364 = vector.load %arg12[%c1_353, %c9, %c0_354] : memref<3x48x64xf32, #tpu.memory_space<vmem>>, vector<1x6x64xf32>
    %365 = vector.shape_cast %364 : vector<1x6x64xf32> to vector<6x64xf32>
    %366 = arith.addf %363, %365 : vector<6x64xf32>
    %c2_355 = arith.constant 2 : index
    %c10 = arith.constant 10 : index
    %c0_356 = arith.constant 0 : index
    %367 = vector.load %arg12[%c2_355, %c10, %c0_356] : memref<3x48x64xf32, #tpu.memory_space<vmem>>, vector<1x6x64xf32>
    %368 = vector.shape_cast %367 : vector<1x6x64xf32> to vector<6x64xf32>
    %369 = arith.addf %366, %368 : vector<6x64xf32>
    %370 = arith.maximumf %361, %369 : vector<6x64xf32>
    %c0_357 = arith.constant 0 : index
    %c0_358 = arith.constant 0 : index
    %371 = vector.load %arg13[%c0_357, %c0_358] : memref<6x64xf32, #tpu.memory_space<vmem>>, vector<6x64xf32>
    tpu.vector_store %arg13[%c0_357, %c0_358], %370 {strides = array<i32>} : memref<6x64xf32, #tpu.memory_space<vmem>>, vector<6x64xf32>,
    %c0_359 = arith.constant 0 : index
    %c0_360 = arith.constant 0 : index
    %372 = vector.load %arg13[%c0_359, %c0_360] : memref<6x64xf32, #tpu.memory_space<vmem>>, vector<1x64xf32>
    %c1_361 = arith.constant 1 : index
    %c0_362 = arith.constant 0 : index
    %373 = vector.load %arg13[%c1_361, %c0_362] : memref<6x64xf32, #tpu.memory_space<vmem>>, vector<1x64xf32>
    %374 = arith.maximumf %372, %373 : vector<1x64xf32>
    %c0_363 = arith.constant 0 : index
    %c0_364 = arith.constant 0 : index
    %375 = vector.load %arg5[%c0_363, %c0_364] : memref<1x64xf32, #tpu.memory_space<vmem>>, vector<1x64xf32>
    %376 = arith.addf %374, %375 : vector<1x64xf32>
    %cst_365 = arith.constant 0.000000e+00 : f32
    %377 = vector.broadcast %cst_365 : f32 to vector<1x64xf32>
    %378 = arith.maximumf %376, %377 : vector<1x64xf32>
    %c0_366 = arith.constant 0 : index
    %c0_367 = arith.constant 0 : index
    %c0_368 = arith.constant 0 : index
    %379 = vector.load %arg6[%c0_366, %c0_367, %c0_368] : memref<9x64x8xf32, #tpu.memory_space<vmem>>, vector<1x64x8xf32>
    %380 = vector.shape_cast %379 : vector<1x64x8xf32> to vector<64x8xf32>
    %cst_369 = arith.constant dense<0.000000e+00> : vector<1x8xf32>
    %381 = tpu.matmul %378, %380, %cst_369 {dimension_numbers = #tpu.dot_dimension_numbers<[1], [0], [0], [1], [0, 0, 1, 1], [], []>} : vector<1x64xf32>, vector<64x8xf32>, vector<1x8xf32> -> vector<1x8xf32>
    %382 = arith.addf %353, %381 : vector<1x8xf32>
    %c2_370 = arith.constant 2 : index
    %c0_371 = arith.constant 0 : index
    %383 = vector.load %arg13[%c2_370, %c0_371] : memref<6x64xf32, #tpu.memory_space<vmem>>, vector<1x64xf32>
    %c3_372 = arith.constant 3 : index
    %c0_373 = arith.constant 0 : index
    %384 = vector.load %arg13[%c3_372, %c0_373] : memref<6x64xf32, #tpu.memory_space<vmem>>, vector<1x64xf32>
    %385 = arith.maximumf %383, %384 : vector<1x64xf32>
    %c0_374 = arith.constant 0 : index
    %c0_375 = arith.constant 0 : index
    %386 = vector.load %arg5[%c0_374, %c0_375] : memref<1x64xf32, #tpu.memory_space<vmem>>, vector<1x64xf32>
    %387 = arith.addf %385, %386 : vector<1x64xf32>
    %cst_376 = arith.constant 0.000000e+00 : f32
    %388 = vector.broadcast %cst_376 : f32 to vector<1x64xf32>
    %389 = arith.maximumf %387, %388 : vector<1x64xf32>
    %c1_377 = arith.constant 1 : index
    %c0_378 = arith.constant 0 : index
    %c0_379 = arith.constant 0 : index
    %390 = vector.load %arg6[%c1_377, %c0_378, %c0_379] : memref<9x64x8xf32, #tpu.memory_space<vmem>>, vector<1x64x8xf32>
    %391 = vector.shape_cast %390 : vector<1x64x8xf32> to vector<64x8xf32>
    %cst_380 = arith.constant dense<0.000000e+00> : vector<1x8xf32>
    %392 = tpu.matmul %389, %391, %cst_380 {dimension_numbers = #tpu.dot_dimension_numbers<[1], [0], [0], [1], [0, 0, 1, 1], [], []>} : vector<1x64xf32>, vector<64x8xf32>, vector<1x8xf32> -> vector<1x8xf32>
    %393 = arith.addf %382, %392 : vector<1x8xf32>
    %c4_381 = arith.constant 4 : index
    %c0_382 = arith.constant 0 : index
    %394 = vector.load %arg13[%c4_381, %c0_382] : memref<6x64xf32, #tpu.memory_space<vmem>>, vector<1x64xf32>
    %c5_383 = arith.constant 5 : index
    %c0_384 = arith.constant 0 : index
    %395 = vector.load %arg13[%c5_383, %c0_384] : memref<6x64xf32, #tpu.memory_space<vmem>>, vector<1x64xf32>
    %396 = arith.maximumf %394, %395 : vector<1x64xf32>
    %c0_385 = arith.constant 0 : index
    %c0_386 = arith.constant 0 : index
    %397 = vector.load %arg5[%c0_385, %c0_386] : memref<1x64xf32, #tpu.memory_space<vmem>>, vector<1x64xf32>
    %398 = arith.addf %396, %397 : vector<1x64xf32>
    %cst_387 = arith.constant 0.000000e+00 : f32
    %399 = vector.broadcast %cst_387 : f32 to vector<1x64xf32>
    %400 = arith.maximumf %398, %399 : vector<1x64xf32>
    %c2_388 = arith.constant 2 : index
    %c0_389 = arith.constant 0 : index
    %c0_390 = arith.constant 0 : index
    %401 = vector.load %arg6[%c2_388, %c0_389, %c0_390] : memref<9x64x8xf32, #tpu.memory_space<vmem>>, vector<1x64x8xf32>
    %402 = vector.shape_cast %401 : vector<1x64x8xf32> to vector<64x8xf32>
    %cst_391 = arith.constant dense<0.000000e+00> : vector<1x8xf32>
    %403 = tpu.matmul %400, %402, %cst_391 {dimension_numbers = #tpu.dot_dimension_numbers<[1], [0], [0], [1], [0, 0, 1, 1], [], []>} : vector<1x64xf32>, vector<64x8xf32>, vector<1x8xf32> -> vector<1x8xf32>
    %404 = arith.addf %393, %403 : vector<1x8xf32>
    %c0_392 = arith.constant 0 : index
    %c16_393 = arith.constant 16 : index
    %c0_394 = arith.constant 0 : index
    %405 = vector.load %arg12[%c0_392, %c16_393, %c0_394] : memref<3x48x64xf32, #tpu.memory_space<vmem>>, vector<1x6x64xf32>
    %406 = vector.shape_cast %405 : vector<1x6x64xf32> to vector<6x64xf32>
    %c1_395 = arith.constant 1 : index
    %c17 = arith.constant 17 : index
    %c0_396 = arith.constant 0 : index
    %407 = vector.load %arg12[%c1_395, %c17, %c0_396] : memref<3x48x64xf32, #tpu.memory_space<vmem>>, vector<1x6x64xf32>
    %408 = vector.shape_cast %407 : vector<1x6x64xf32> to vector<6x64xf32>
    %409 = arith.addf %406, %408 : vector<6x64xf32>
    %c2_397 = arith.constant 2 : index
    %c18 = arith.constant 18 : index
    %c0_398 = arith.constant 0 : index
    %410 = vector.load %arg12[%c2_397, %c18, %c0_398] : memref<3x48x64xf32, #tpu.memory_space<vmem>>, vector<1x6x64xf32>
    %411 = vector.shape_cast %410 : vector<1x6x64xf32> to vector<6x64xf32>
    %412 = arith.addf %409, %411 : vector<6x64xf32>
    %c0_399 = arith.constant 0 : index
    %c24 = arith.constant 24 : index
    %c0_400 = arith.constant 0 : index
    %413 = vector.load %arg12[%c0_399, %c24, %c0_400] : memref<3x48x64xf32, #tpu.memory_space<vmem>>, vector<1x6x64xf32>
    %414 = vector.shape_cast %413 : vector<1x6x64xf32> to vector<6x64xf32>
    %c1_401 = arith.constant 1 : index
    %c25 = arith.constant 25 : index
    %c0_402 = arith.constant 0 : index
    %415 = vector.load %arg12[%c1_401, %c25, %c0_402] : memref<3x48x64xf32, #tpu.memory_space<vmem>>, vector<1x6x64xf32>
    %416 = vector.shape_cast %415 : vector<1x6x64xf32> to vector<6x64xf32>
    %417 = arith.addf %414, %416 : vector<6x64xf32>
    %c2_403 = arith.constant 2 : index
    %c26 = arith.constant 26 : index
    %c0_404 = arith.constant 0 : index
    %418 = vector.load %arg12[%c2_403, %c26, %c0_404] : memref<3x48x64xf32, #tpu.memory_space<vmem>>, vector<1x6x64xf32>
    %419 = vector.shape_cast %418 : vector<1x6x64xf32> to vector<6x64xf32>
    %420 = arith.addf %417, %419 : vector<6x64xf32>
    %421 = arith.maximumf %412, %420 : vector<6x64xf32>
    %c0_405 = arith.constant 0 : index
    %c0_406 = arith.constant 0 : index
    %422 = vector.load %arg13[%c0_405, %c0_406] : memref<6x64xf32, #tpu.memory_space<vmem>>, vector<6x64xf32>
    tpu.vector_store %arg13[%c0_405, %c0_406], %421 {strides = array<i32>} : memref<6x64xf32, #tpu.memory_space<vmem>>, vector<6x64xf32>,
    %c0_407 = arith.constant 0 : index
    %c0_408 = arith.constant 0 : index
    %423 = vector.load %arg13[%c0_407, %c0_408] : memref<6x64xf32, #tpu.memory_space<vmem>>, vector<1x64xf32>
    %c1_409 = arith.constant 1 : index
    %c0_410 = arith.constant 0 : index
    %424 = vector.load %arg13[%c1_409, %c0_410] : memref<6x64xf32, #tpu.memory_space<vmem>>, vector<1x64xf32>
    %425 = arith.maximumf %423, %424 : vector<1x64xf32>
    %c0_411 = arith.constant 0 : index
    %c0_412 = arith.constant 0 : index
    %426 = vector.load %arg5[%c0_411, %c0_412] : memref<1x64xf32, #tpu.memory_space<vmem>>, vector<1x64xf32>
    %427 = arith.addf %425, %426 : vector<1x64xf32>
    %cst_413 = arith.constant 0.000000e+00 : f32
    %428 = vector.broadcast %cst_413 : f32 to vector<1x64xf32>
    %429 = arith.maximumf %427, %428 : vector<1x64xf32>
    %c3_414 = arith.constant 3 : index
    %c0_415 = arith.constant 0 : index
    %c0_416 = arith.constant 0 : index
    %430 = vector.load %arg6[%c3_414, %c0_415, %c0_416] : memref<9x64x8xf32, #tpu.memory_space<vmem>>, vector<1x64x8xf32>
    %431 = vector.shape_cast %430 : vector<1x64x8xf32> to vector<64x8xf32>
    %cst_417 = arith.constant dense<0.000000e+00> : vector<1x8xf32>
    %432 = tpu.matmul %429, %431, %cst_417 {dimension_numbers = #tpu.dot_dimension_numbers<[1], [0], [0], [1], [0, 0, 1, 1], [], []>} : vector<1x64xf32>, vector<64x8xf32>, vector<1x8xf32> -> vector<1x8xf32>
    %433 = arith.addf %404, %432 : vector<1x8xf32>
    %c2_418 = arith.constant 2 : index
    %c0_419 = arith.constant 0 : index
    %434 = vector.load %arg13[%c2_418, %c0_419] : memref<6x64xf32, #tpu.memory_space<vmem>>, vector<1x64xf32>
    %c3_420 = arith.constant 3 : index
    %c0_421 = arith.constant 0 : index
    %435 = vector.load %arg13[%c3_420, %c0_421] : memref<6x64xf32, #tpu.memory_space<vmem>>, vector<1x64xf32>
    %436 = arith.maximumf %434, %435 : vector<1x64xf32>
    %c0_422 = arith.constant 0 : index
    %c0_423 = arith.constant 0 : index
    %437 = vector.load %arg5[%c0_422, %c0_423] : memref<1x64xf32, #tpu.memory_space<vmem>>, vector<1x64xf32>
    %438 = arith.addf %436, %437 : vector<1x64xf32>
    %cst_424 = arith.constant 0.000000e+00 : f32
    %439 = vector.broadcast %cst_424 : f32 to vector<1x64xf32>
    %440 = arith.maximumf %438, %439 : vector<1x64xf32>
    %c4_425 = arith.constant 4 : index
    %c0_426 = arith.constant 0 : index
    %c0_427 = arith.constant 0 : index
    %441 = vector.load %arg6[%c4_425, %c0_426, %c0_427] : memref<9x64x8xf32, #tpu.memory_space<vmem>>, vector<1x64x8xf32>
    %442 = vector.shape_cast %441 : vector<1x64x8xf32> to vector<64x8xf32>
    %cst_428 = arith.constant dense<0.000000e+00> : vector<1x8xf32>
    %443 = tpu.matmul %440, %442, %cst_428 {dimension_numbers = #tpu.dot_dimension_numbers<[1], [0], [0], [1], [0, 0, 1, 1], [], []>} : vector<1x64xf32>, vector<64x8xf32>, vector<1x8xf32> -> vector<1x8xf32>
    %444 = arith.addf %433, %443 : vector<1x8xf32>
    %c4_429 = arith.constant 4 : index
    %c0_430 = arith.constant 0 : index
    %445 = vector.load %arg13[%c4_429, %c0_430] : memref<6x64xf32, #tpu.memory_space<vmem>>, vector<1x64xf32>
    %c5_431 = arith.constant 5 : index
    %c0_432 = arith.constant 0 : index
    %446 = vector.load %arg13[%c5_431, %c0_432] : memref<6x64xf32, #tpu.memory_space<vmem>>, vector<1x64xf32>
    %447 = arith.maximumf %445, %446 : vector<1x64xf32>
    %c0_433 = arith.constant 0 : index
    %c0_434 = arith.constant 0 : index
    %448 = vector.load %arg5[%c0_433, %c0_434] : memref<1x64xf32, #tpu.memory_space<vmem>>, vector<1x64xf32>
    %449 = arith.addf %447, %448 : vector<1x64xf32>
    %cst_435 = arith.constant 0.000000e+00 : f32
    %450 = vector.broadcast %cst_435 : f32 to vector<1x64xf32>
    %451 = arith.maximumf %449, %450 : vector<1x64xf32>
    %c5_436 = arith.constant 5 : index
    %c0_437 = arith.constant 0 : index
    %c0_438 = arith.constant 0 : index
    %452 = vector.load %arg6[%c5_436, %c0_437, %c0_438] : memref<9x64x8xf32, #tpu.memory_space<vmem>>, vector<1x64x8xf32>
    %453 = vector.shape_cast %452 : vector<1x64x8xf32> to vector<64x8xf32>
    %cst_439 = arith.constant dense<0.000000e+00> : vector<1x8xf32>
    %454 = tpu.matmul %451, %453, %cst_439 {dimension_numbers = #tpu.dot_dimension_numbers<[1], [0], [0], [1], [0, 0, 1, 1], [], []>} : vector<1x64xf32>, vector<64x8xf32>, vector<1x8xf32> -> vector<1x8xf32>
    %455 = arith.addf %444, %454 : vector<1x8xf32>
    %c0_440 = arith.constant 0 : index
    %c32 = arith.constant 32 : index
    %c0_441 = arith.constant 0 : index
    %456 = vector.load %arg12[%c0_440, %c32, %c0_441] : memref<3x48x64xf32, #tpu.memory_space<vmem>>, vector<1x6x64xf32>
    %457 = vector.shape_cast %456 : vector<1x6x64xf32> to vector<6x64xf32>
    %c1_442 = arith.constant 1 : index
    %c33 = arith.constant 33 : index
    %c0_443 = arith.constant 0 : index
    %458 = vector.load %arg12[%c1_442, %c33, %c0_443] : memref<3x48x64xf32, #tpu.memory_space<vmem>>, vector<1x6x64xf32>
    %459 = vector.shape_cast %458 : vector<1x6x64xf32> to vector<6x64xf32>
    %460 = arith.addf %457, %459 : vector<6x64xf32>
    %c2_444 = arith.constant 2 : index
    %c34 = arith.constant 34 : index
    %c0_445 = arith.constant 0 : index
    %461 = vector.load %arg12[%c2_444, %c34, %c0_445] : memref<3x48x64xf32, #tpu.memory_space<vmem>>, vector<1x6x64xf32>
    %462 = vector.shape_cast %461 : vector<1x6x64xf32> to vector<6x64xf32>
    %463 = arith.addf %460, %462 : vector<6x64xf32>
    %c0_446 = arith.constant 0 : index
    %c40 = arith.constant 40 : index
    %c0_447 = arith.constant 0 : index
    %464 = vector.load %arg12[%c0_446, %c40, %c0_447] : memref<3x48x64xf32, #tpu.memory_space<vmem>>, vector<1x6x64xf32>
    %465 = vector.shape_cast %464 : vector<1x6x64xf32> to vector<6x64xf32>
    %c1_448 = arith.constant 1 : index
    %c41 = arith.constant 41 : index
    %c0_449 = arith.constant 0 : index
    %466 = vector.load %arg12[%c1_448, %c41, %c0_449] : memref<3x48x64xf32, #tpu.memory_space<vmem>>, vector<1x6x64xf32>
    %467 = vector.shape_cast %466 : vector<1x6x64xf32> to vector<6x64xf32>
    %468 = arith.addf %465, %467 : vector<6x64xf32>
    %c2_450 = arith.constant 2 : index
    %c42 = arith.constant 42 : index
    %c0_451 = arith.constant 0 : index
    %469 = vector.load %arg12[%c2_450, %c42, %c0_451] : memref<3x48x64xf32, #tpu.memory_space<vmem>>, vector<1x6x64xf32>
    %470 = vector.shape_cast %469 : vector<1x6x64xf32> to vector<6x64xf32>
    %471 = arith.addf %468, %470 : vector<6x64xf32>
    %472 = arith.maximumf %463, %471 : vector<6x64xf32>
    %c0_452 = arith.constant 0 : index
    %c0_453 = arith.constant 0 : index
    %473 = vector.load %arg13[%c0_452, %c0_453] : memref<6x64xf32, #tpu.memory_space<vmem>>, vector<6x64xf32>
    tpu.vector_store %arg13[%c0_452, %c0_453], %472 {strides = array<i32>} : memref<6x64xf32, #tpu.memory_space<vmem>>, vector<6x64xf32>,
    %c0_454 = arith.constant 0 : index
    %c0_455 = arith.constant 0 : index
    %474 = vector.load %arg13[%c0_454, %c0_455] : memref<6x64xf32, #tpu.memory_space<vmem>>, vector<1x64xf32>
    %c1_456 = arith.constant 1 : index
    %c0_457 = arith.constant 0 : index
    %475 = vector.load %arg13[%c1_456, %c0_457] : memref<6x64xf32, #tpu.memory_space<vmem>>, vector<1x64xf32>
    %476 = arith.maximumf %474, %475 : vector<1x64xf32>
    %c0_458 = arith.constant 0 : index
    %c0_459 = arith.constant 0 : index
    %477 = vector.load %arg5[%c0_458, %c0_459] : memref<1x64xf32, #tpu.memory_space<vmem>>, vector<1x64xf32>
    %478 = arith.addf %476, %477 : vector<1x64xf32>
    %cst_460 = arith.constant 0.000000e+00 : f32
    %479 = vector.broadcast %cst_460 : f32 to vector<1x64xf32>
    %480 = arith.maximumf %478, %479 : vector<1x64xf32>
    %c6_461 = arith.constant 6 : index
    %c0_462 = arith.constant 0 : index
    %c0_463 = arith.constant 0 : index
    %481 = vector.load %arg6[%c6_461, %c0_462, %c0_463] : memref<9x64x8xf32, #tpu.memory_space<vmem>>, vector<1x64x8xf32>
    %482 = vector.shape_cast %481 : vector<1x64x8xf32> to vector<64x8xf32>
    %cst_464 = arith.constant dense<0.000000e+00> : vector<1x8xf32>
    %483 = tpu.matmul %480, %482, %cst_464 {dimension_numbers = #tpu.dot_dimension_numbers<[1], [0], [0], [1], [0, 0, 1, 1], [], []>} : vector<1x64xf32>, vector<64x8xf32>, vector<1x8xf32> -> vector<1x8xf32>
    %484 = arith.addf %455, %483 : vector<1x8xf32>
    %c2_465 = arith.constant 2 : index
    %c0_466 = arith.constant 0 : index
    %485 = vector.load %arg13[%c2_465, %c0_466] : memref<6x64xf32, #tpu.memory_space<vmem>>, vector<1x64xf32>
    %c3_467 = arith.constant 3 : index
    %c0_468 = arith.constant 0 : index
    %486 = vector.load %arg13[%c3_467, %c0_468] : memref<6x64xf32, #tpu.memory_space<vmem>>, vector<1x64xf32>
    %487 = arith.maximumf %485, %486 : vector<1x64xf32>
    %c0_469 = arith.constant 0 : index
    %c0_470 = arith.constant 0 : index
    %488 = vector.load %arg5[%c0_469, %c0_470] : memref<1x64xf32, #tpu.memory_space<vmem>>, vector<1x64xf32>
    %489 = arith.addf %487, %488 : vector<1x64xf32>
    %cst_471 = arith.constant 0.000000e+00 : f32
    %490 = vector.broadcast %cst_471 : f32 to vector<1x64xf32>
    %491 = arith.maximumf %489, %490 : vector<1x64xf32>
    %c7_472 = arith.constant 7 : index
    %c0_473 = arith.constant 0 : index
    %c0_474 = arith.constant 0 : index
    %492 = vector.load %arg6[%c7_472, %c0_473, %c0_474] : memref<9x64x8xf32, #tpu.memory_space<vmem>>, vector<1x64x8xf32>
    %493 = vector.shape_cast %492 : vector<1x64x8xf32> to vector<64x8xf32>
    %cst_475 = arith.constant dense<0.000000e+00> : vector<1x8xf32>
    %494 = tpu.matmul %491, %493, %cst_475 {dimension_numbers = #tpu.dot_dimension_numbers<[1], [0], [0], [1], [0, 0, 1, 1], [], []>} : vector<1x64xf32>, vector<64x8xf32>, vector<1x8xf32> -> vector<1x8xf32>
    %495 = arith.addf %484, %494 : vector<1x8xf32>
    %c4_476 = arith.constant 4 : index
    %c0_477 = arith.constant 0 : index
    %496 = vector.load %arg13[%c4_476, %c0_477] : memref<6x64xf32, #tpu.memory_space<vmem>>, vector<1x64xf32>
    %c5_478 = arith.constant 5 : index
    %c0_479 = arith.constant 0 : index
    %497 = vector.load %arg13[%c5_478, %c0_479] : memref<6x64xf32, #tpu.memory_space<vmem>>, vector<1x64xf32>
    %498 = arith.maximumf %496, %497 : vector<1x64xf32>
    %c0_480 = arith.constant 0 : index
    %c0_481 = arith.constant 0 : index
    %499 = vector.load %arg5[%c0_480, %c0_481] : memref<1x64xf32, #tpu.memory_space<vmem>>, vector<1x64xf32>
    %500 = arith.addf %498, %499 : vector<1x64xf32>
    %cst_482 = arith.constant 0.000000e+00 : f32
    %501 = vector.broadcast %cst_482 : f32 to vector<1x64xf32>
    %502 = arith.maximumf %500, %501 : vector<1x64xf32>
    %c8_483 = arith.constant 8 : index
    %c0_484 = arith.constant 0 : index
    %c0_485 = arith.constant 0 : index
    %503 = vector.load %arg6[%c8_483, %c0_484, %c0_485] : memref<9x64x8xf32, #tpu.memory_space<vmem>>, vector<1x64x8xf32>
    %504 = vector.shape_cast %503 : vector<1x64x8xf32> to vector<64x8xf32>
    %cst_486 = arith.constant dense<0.000000e+00> : vector<1x8xf32>
    %505 = tpu.matmul %502, %504, %cst_486 {dimension_numbers = #tpu.dot_dimension_numbers<[1], [0], [0], [1], [0, 0, 1, 1], [], []>} : vector<1x64xf32>, vector<64x8xf32>, vector<1x8xf32> -> vector<1x8xf32>
    %506 = arith.addf %495, %505 : vector<1x8xf32>
    %c0_487 = arith.constant 0 : index
    %c0_488 = arith.constant 0 : index
    %507 = vector.load %arg7[%c0_487, %c0_488] : memref<1x8xf32, #tpu.memory_space<vmem>>, vector<1x8xf32>
    %508 = arith.addf %506, %507 : vector<1x8xf32>
    %cst_489 = arith.constant 0.000000e+00 : f32
    %509 = vector.broadcast %cst_489 : f32 to vector<1x8xf32>
    %510 = arith.maximumf %508, %509 : vector<1x8xf32>
    %c0_490 = arith.constant 0 : index
    %c0_491 = arith.constant 0 : index
    %511 = vector.load %arg8[%c0_490, %c0_491] : memref<1x8xf32, #tpu.memory_space<vmem>>, vector<1x8xf32>
    %512 = arith.mulf %510, %511 : vector<1x8xf32>
    %cst_492 = arith.constant dense<0.000000e+00> : vector<1xf32>
    %513 = vector.multi_reduction <add>, %512, %cst_492 [1] : vector<1x8xf32> to vector<1xf32>
    %514 = vector.shape_cast %513 : vector<1xf32> to vector<1x1xf32>
    %c0_493 = arith.constant 0 : index
    %c0_494 = arith.constant 0 : index
    %515 = vector.load %arg9[%c0_493, %c0_494] : memref<1x1xf32, #tpu.memory_space<vmem>>, vector<1x1xf32>
    %516 = arith.addf %514, %515 : vector<1x1xf32>
    %cst_495 = arith.constant 0.000000e+00 : f32
    %517 = vector.broadcast %cst_495 : f32 to vector<1x1xf32>
    %518 = arith.subf %517, %516 : vector<1x1xf32>
    %519 = math.exp %518 : vector<1x1xf32>
    %cst_496 = arith.constant 1.000000e+00 : f32
    %520 = vector.broadcast %cst_496 : f32 to vector<1x1xf32>
    %521 = arith.addf %520, %519 : vector<1x1xf32>
    %cst_497 = arith.constant 1.000000e+00 : f32
    %522 = vector.broadcast %cst_497 : f32 to vector<1x1xf32>
    %523 = arith.divf %522, %521 : vector<1x1xf32>
    %c0_498 = arith.constant 0 : index
    %c0_499 = arith.constant 0 : index
    %c0_500 = arith.constant 0 : index
    %524 = vector.load %arg10[%c0_498, %c0_499, %c0_500] : memref<1x1x1xf32, #tpu.memory_space<vmem>>, vector<1x1x1xf32>
    %525 = vector.shape_cast %524 : vector<1x1x1xf32> to vector<1x1xf32>
    %526 = vector.shape_cast %523 : vector<1x1xf32> to vector<1x1x1xf32>
    tpu.vector_store %arg10[%c0_498, %c0_499, %c0_500], %526 {strides = array<i32>} : memref<1x1x1xf32, #tpu.memory_space<vmem>>, vector<1x1x1xf32>,
    return
  }
  func.func @transform_0(%arg0: i32) -> (i32, i32, i32, i32) {
    %c0_i32 = arith.constant 0 : i32
    %c0_i32_0 = arith.constant 0 : i32
    %c0_i32_1 = arith.constant 0 : i32
    %c0_i32_2 = arith.constant 0 : i32
    return %arg0, %c0_i32, %c0_i32_0, %c0_i32_1 : i32, i32, i32, i32
  }
  func.func @transform_1(%arg0: i32) -> (i32, i32, i32) {
    %c0_i32 = arith.constant 0 : i32
    %c0_i32_0 = arith.constant 0 : i32
    %c0_i32_1 = arith.constant 0 : i32
    %c0_i32_2 = arith.constant 0 : i32
    return %c0_i32, %c0_i32_0, %c0_i32_1 : i32, i32, i32
  }
  func.func @transform_2(%arg0: i32) -> (i32, i32) {
    %c0_i32 = arith.constant 0 : i32
    %c0_i32_0 = arith.constant 0 : i32
    %c0_i32_1 = arith.constant 0 : i32
    return %c0_i32, %c0_i32_0 : i32, i32
  }
  func.func @transform_3(%arg0: i32) -> (i32, i32, i32) {
    %c0_i32 = arith.constant 0 : i32
    %c0_i32_0 = arith.constant 0 : i32
    %c0_i32_1 = arith.constant 0 : i32
    %c0_i32_2 = arith.constant 0 : i32
    return %c0_i32, %c0_i32_0, %c0_i32_1 : i32, i32, i32
  }
  func.func @transform_4(%arg0: i32) -> (i32, i32) {
    %c0_i32 = arith.constant 0 : i32
    %c0_i32_0 = arith.constant 0 : i32
    %c0_i32_1 = arith.constant 0 : i32
    return %c0_i32, %c0_i32_0 : i32, i32
  }
  func.func @transform_5(%arg0: i32) -> (i32, i32, i32) {
    %c0_i32 = arith.constant 0 : i32
    %c0_i32_0 = arith.constant 0 : i32
    %c0_i32_1 = arith.constant 0 : i32
    %c0_i32_2 = arith.constant 0 : i32
    return %c0_i32, %c0_i32_0, %c0_i32_1 : i32, i32, i32
  }
  func.func @transform_6(%arg0: i32) -> (i32, i32) {
    %c0_i32 = arith.constant 0 : i32
    %c0_i32_0 = arith.constant 0 : i32
    %c0_i32_1 = arith.constant 0 : i32
    return %c0_i32, %c0_i32_0 : i32, i32
  }
  func.func @transform_7(%arg0: i32) -> (i32, i32) {
    %c0_i32 = arith.constant 0 : i32
    %c0_i32_0 = arith.constant 0 : i32
    %c0_i32_1 = arith.constant 0 : i32
    return %c0_i32, %c0_i32_0 : i32, i32
  }
  func.func @transform_8(%arg0: i32) -> (i32, i32) {
    %c0_i32 = arith.constant 0 : i32
    %c0_i32_0 = arith.constant 0 : i32
    %c0_i32_1 = arith.constant 0 : i32
    return %c0_i32, %c0_i32_0 : i32, i32
  }
  func.func @transform_9(%arg0: i32) -> (i32, i32, i32) {
    %c0_i32 = arith.constant 0 : i32
    %c0_i32_0 = arith.constant 0 : i32
    %c0_i32_1 = arith.constant 0 : i32
    return %arg0, %c0_i32, %c0_i32_0 : i32, i32, i32
  }
}

</mosaic_0001>

<llo_original>
// kernel: tpu_custom_call.1
$region0: #{tpu_custom_call.1}
  #allocation0 [shape = 'u32[]', space=smem, size = 0x4, offset = 0x4, fixed_abs, tag = 'smem constant byte address 0x4 - core index']
  #allocation1 [shape = 'u32[72,128]{1,0:T(1,128)}', space=vmem, size = 0x9000, scoped, tag = 'internal scratch']
  #allocation2 [shape = 'bf16[64,64]{1,0:T(8,128)(2,1)}', space=vmem, size = 0x4000, scoped, tag = 'scratch operand']
  #allocation3 [shape = 'f32[3,48,64]{2,1,0:T(8,128)}', space=vmem, size = 0x12000, scoped, tag = 'scratch operand']
  #allocation4 [shape = 'f32[6,64]{1,0:T(8,128)}', space=vmem, size = 0x1000, scoped, tag = 'scratch operand']
  #allocation5 [shape = 'f32[1,1]{1,0:T(1,128)S(1)}', space=vmem, size = 0x200, scoped, tag = 'scoped memory for tpu_custom_call.1']
  %s0 = inlined_call_operand.vmem [shape: f32[8,9,9,128], index: 0, kind: input, shape index: {}]
  %s1 = inlined_call_operand.vmem [shape: bf16[9,128,64], index: 1, kind: input, shape index: {}]
  %s2 = inlined_call_operand.vmem [shape: f32[1,64], index: 2, kind: input, shape index: {}]
  %s3 = inlined_call_operand.vmem [shape: bf16[9,64,64], index: 3, kind: input, shape index: {}]
  %s4 = inlined_call_operand.vmem [shape: f32[1,64], index: 4, kind: input, shape index: {}]
  %s5 = inlined_call_operand.vmem [shape: f32[9,64,8], index: 5, kind: input, shape index: {}]
  %s6 = inlined_call_operand.vmem [shape: f32[1,8], index: 6, kind: input, shape index: {}]
  %s7 = inlined_call_operand.vmem [shape: f32[1,8], index: 7, kind: input, shape index: {}]
  %s8 = inlined_call_operand.<no memory space> [shape: f32[1,1], index: 8, kind: input, shape index: {}]
  %s9 = inlined_call_operand.vmem [shape: f32[2,1,1], index: 9, kind: output, shape index: {}]
  %s10 = sld [smem:[#allocation0]]
  $region69: #{tpu_custom_call.1} parent=0
    _
  %s12 = ssub.s32 1, %s10
  %s13 = scalar_select 0, %s12, %s10
  %v14 = vstv %s8
  %15 = vst [vmem:[#allocation5] sm:$0x1] %v14
  loop: start=0, step=1, limit=4
  $region2: #{tpu_custom_call.1} parent=0 // loop_pre_header
    _
  $region3: #{tpu_custom_call.1} parent=0 // loop_header
    %s17 = sphi 0, %s21
    %p18 = scmp.ge.s32.totalorder %s17, 4
    %s27 = sphi 0, %s29
    %s30 = sphi 0, %s27
    %s31 = sphi 0, %s30
    %s47 = sphi 0, %s31
    %s51 = sphi 0, %s51
    %s53 = sphi 0, %s51
    %s54 = sphi 0, %s53
    %s68 = sphi 0, %s54
    %s72 = sphi 0, %s72
    %s74 = sphi 0, %s72
    %s75 = sphi 0, %s74
    %s89 = sphi 0, %s75
    %s93 = sphi 0, %s93
    %s95 = sphi 0, %s93
    %s96 = sphi 0, %s95
    %s110 = sphi 0, %s96
    %s114 = sphi 0, %s114
    %s116 = sphi 0, %s114
    %s117 = sphi 0, %s116
    %s131 = sphi 0, %s117
    %s135 = sphi 0, %s135
    %s137 = sphi 0, %s135
    %s138 = sphi 0, %s137
    %s152 = sphi 0, %s138
    %s156 = sphi 0, %s156
    %s158 = sphi 0, %s156
    %s159 = sphi 0, %s158
    %s173 = sphi 0, %s159
    %s177 = sphi 0, %s177
    %s179 = sphi 0, %s177
    %s180 = sphi 0, %s179
    %s194 = sphi 0, %s180
    %s198 = sphi 0, %s198
    %s200 = sphi 0, %s198
    %s201 = sphi 0, %s200
    %s215 = sphi 0, %s201
    %s221 = sphi 0, %s223
    %s224 = sphi 0, %s221
    %s225 = sphi 0, %s224
    %s241 = sphi 0, %s225
  $region4: #{tpu_custom_call.1} parent=0 // loop_header_branch
    %20 = sbr.rel (%p18) target = $region8
  $region5: #{tpu_custom_call.1} parent=0 // loop_body
    %s22 = ssub.s32 %s17, 1
    %s23 = ssub.s32 %s17, 2
    %s24 = sadd.s32 %s17, 1
    %s25 = ssub.s32 %s17, %s24
    %p26 = scmp.eq.s32.totalorder %s25, 0
    %s28 = sadd.s32 %s27, 1
    %s29 = scalar_select %p26, %s27, %s28
    %p32 = pneg %p26
    %p33 = scmp.eq.s32.totalorder %s17, 1
    %p34 = por %p32, %p33
    %p35 = scmp.ne.s32.totalorder %s27, %s30
    %p36 = scmp.eq.s32.totalorder %s17, 0
    %p37 = por %p35, %p36
    %p38 = scmp.ne.s32.totalorder %s27, %s30
    %p39 = scmp.eq.s32.totalorder %s22, 1
    %p40 = por %p38, %p39
    %p41 = scmp.ne.s32.totalorder %s30, %s31
    %p42 = scmp.eq.s32.totalorder %s22, 0
    %p43 = por %p41, %p42
    %p44 = scmp.ne.s32.totalorder %s30, %s31
    %p45 = scmp.eq.s32.totalorder %s23, 1
    %p46 = por %p44, %p45
    %p48 = scmp.ne.s32.totalorder %s31, %s47
    %p49 = scmp.eq.s32.totalorder %s23, 0
    %p50 = por %p48, %p49
    %s52 = sadd.s32 %s51, 1
    %p55 = scmp.eq.s32.totalorder %s17, 1
    %p56 = scmp.ne.s32.totalorder %s51, %s53
    %p57 = scmp.eq.s32.totalorder %s17, 0
    %p58 = por %p56, %p57
    %p59 = scmp.ne.s32.totalorder %s51, %s53
    %p60 = scmp.eq.s32.totalorder %s22, 1
    %p61 = por %p59, %p60
    %p62 = scmp.ne.s32.totalorder %s53, %s54
    %p63 = scmp.eq.s32.totalorder %s22, 0
    %p64 = por %p62, %p63
    %p65 = scmp.ne.s32.totalorder %s53, %s54
    %p66 = scmp.eq.s32.totalorder %s23, 1
    %p67 = por %p65, %p66
    %p69 = scmp.ne.s32.totalorder %s54, %s68
    %p70 = scmp.eq.s32.totalorder %s23, 0
    %p71 = por %p69, %p70
    %s73 = sadd.s32 %s72, 1
    %p76 = scmp.eq.s32.totalorder %s17, 1
    %p77 = scmp.ne.s32.totalorder %s72, %s74
    %p78 = scmp.eq.s32.totalorder %s17, 0
    %p79 = por %p77, %p78
    %p80 = scmp.ne.s32.totalorder %s72, %s74
    %p81 = scmp.eq.s32.totalorder %s22, 1
    %p82 = por %p80, %p81
    %p83 = scmp.ne.s32.totalorder %s74, %s75
    %p84 = scmp.eq.s32.totalorder %s22, 0
    %p85 = por %p83, %p84
    %p86 = scmp.ne.s32.totalorder %s74, %s75
    %p87 = scmp.eq.s32.totalorder %s23, 1
    %p88 = por %p86, %p87
    %p90 = scmp.ne.s32.totalorder %s75, %s89
    %p91 = scmp.eq.s32.totalorder %s23, 0
    %p92 = por %p90, %p91
    %s94 = sadd.s32 %s93, 1
    %p97 = scmp.eq.s32.totalorder %s17, 1
    %p98 = scmp.ne.s32.totalorder %s93, %s95
    %p99 = scmp.eq.s32.totalorder %s17, 0
    %p100 = por %p98, %p99
    %p101 = scmp.ne.s32.totalorder %s93, %s95
    %p102 = scmp.eq.s32.totalorder %s22, 1
    %p103 = por %p101, %p102
    %p104 = scmp.ne.s32.totalorder %s95, %s96
    %p105 = scmp.eq.s32.totalorder %s22, 0
    %p106 = por %p104, %p105
    %p107 = scmp.ne.s32.totalorder %s95, %s96
    %p108 = scmp.eq.s32.totalorder %s23, 1
    %p109 = por %p107, %p108
    %p111 = scmp.ne.s32.totalorder %s96, %s110
    %p112 = scmp.eq.s32.totalorder %s23, 0
    %p113 = por %p111, %p112
    %s115 = sadd.s32 %s114, 1
    %p118 = scmp.eq.s32.totalorder %s17, 1
    %p119 = scmp.ne.s32.totalorder %s114, %s116
    %p120 = scmp.eq.s32.totalorder %s17, 0
    %p121 = por %p119, %p120
    %p122 = scmp.ne.s32.totalorder %s114, %s116
    %p123 = scmp.eq.s32.totalorder %s22, 1
    %p124 = por %p122, %p123
    %p125 = scmp.ne.s32.totalorder %s116, %s117
    %p126 = scmp.eq.s32.totalorder %s22, 0
    %p127 = por %p125, %p126
    %p128 = scmp.ne.s32.totalorder %s116, %s117
    %p129 = scmp.eq.s32.totalorder %s23, 1
    %p130 = por %p128, %p129
    %p132 = scmp.ne.s32.totalorder %s117, %s131
    %p133 = scmp.eq.s32.totalorder %s23, 0
    %p134 = por %p132, %p133
    %s136 = sadd.s32 %s135, 1
    %p139 = scmp.eq.s32.totalorder %s17, 1
    %p140 = scmp.ne.s32.totalorder %s135, %s137
    %p141 = scmp.eq.s32.totalorder %s17, 0
    %p142 = por %p140, %p141
    %p143 = scmp.ne.s32.totalorder %s135, %s137
    %p144 = scmp.eq.s32.totalorder %s22, 1
    %p145 = por %p143, %p144
    %p146 = scmp.ne.s32.totalorder %s137, %s138
    %p147 = scmp.eq.s32.totalorder %s22, 0
    %p148 = por %p146, %p147
    %p149 = scmp.ne.s32.totalorder %s137, %s138
    %p150 = scmp.eq.s32.totalorder %s23, 1
    %p151 = por %p149, %p150
    %p153 = scmp.ne.s32.totalorder %s138, %s152
    %p154 = scmp.eq.s32.totalorder %s23, 0
    %p155 = por %p153, %p154
    %s157 = sadd.s32 %s156, 1
    %p160 = scmp.eq.s32.totalorder %s17, 1
    %p161 = scmp.ne.s32.totalorder %s156, %s158
    %p162 = scmp.eq.s32.totalorder %s17, 0
    %p163 = por %p161, %p162
    %p164 = scmp.ne.s32.totalorder %s156, %s158
    %p165 = scmp.eq.s32.totalorder %s22, 1
    %p166 = por %p164, %p165
    %p167 = scmp.ne.s32.totalorder %s158, %s159
    %p168 = scmp.eq.s32.totalorder %s22, 0
    %p169 = por %p167, %p168
    %p170 = scmp.ne.s32.totalorder %s158, %s159
    %p171 = scmp.eq.s32.totalorder %s23, 1
    %p172 = por %p170, %p171
    %p174 = scmp.ne.s32.totalorder %s159, %s173
    %p175 = scmp.eq.s32.totalorder %s23, 0
    %p176 = por %p174, %p175
    %s178 = sadd.s32 %s177, 1
    %p181 = scmp.eq.s32.totalorder %s17, 1
    %p182 = scmp.ne.s32.totalorder %s177, %s179
    %p183 = scmp.eq.s32.totalorder %s17, 0
    %p184 = por %p182, %p183
    %p185 = scmp.ne.s32.totalorder %s177, %s179
    %p186 = scmp.eq.s32.totalorder %s22, 1
    %p187 = por %p185, %p186
    %p188 = scmp.ne.s32.totalorder %s179, %s180
    %p189 = scmp.eq.s32.totalorder %s22, 0
    %p190 = por %p188, %p189
    %p191 = scmp.ne.s32.totalorder %s179, %s180
    %p192 = scmp.eq.s32.totalorder %s23, 1
    %p193 = por %p191, %p192
    %p195 = scmp.ne.s32.totalorder %s180, %s194
    %p196 = scmp.eq.s32.totalorder %s23, 0
    %p197 = por %p195, %p196
    %s199 = sadd.s32 %s198, 1
    %p202 = scmp.eq.s32.totalorder %s17, 1
    %p203 = scmp.ne.s32.totalorder %s198, %s200
    %p204 = scmp.eq.s32.totalorder %s17, 0
    %p205 = por %p203, %p204
    %p206 = scmp.ne.s32.totalorder %s198, %s200
    %p207 = scmp.eq.s32.totalorder %s22, 1
    %p208 = por %p206, %p207
    %p209 = scmp.ne.s32.totalorder %s200, %s201
    %p210 = scmp.eq.s32.totalorder %s22, 0
    %p211 = por %p209, %p210
    %p212 = scmp.ne.s32.totalorder %s200, %s201
    %p213 = scmp.eq.s32.totalorder %s23, 1
    %p214 = por %p212, %p213
    %p216 = scmp.ne.s32.totalorder %s201, %s215
    %p217 = scmp.eq.s32.totalorder %s23, 0
    %p218 = por %p216, %p217
    %s219 = ssub.s32 %s17, %s24
    %p220 = scmp.eq.s32.totalorder %s219, 0
    %s222 = sadd.s32 %s221, 1
    %s223 = scalar_select %p220, %s221, %s222
    %p226 = pneg %p220
    %p227 = scmp.eq.s32.totalorder %s17, 1
    %p228 = por %p226, %p227
    %p229 = scmp.ne.s32.totalorder %s221, %s224
    %p230 = scmp.eq.s32.totalorder %s17, 0
    %p231 = por %p229, %p230
    %p232 = scmp.ne.s32.totalorder %s221, %s224
    %p233 = scmp.eq.s32.totalorder %s22, 1
    %p234 = por %p232, %p233
    %p235 = scmp.ne.s32.totalorder %s224, %s225
    %p236 = scmp.eq.s32.totalorder %s22, 0
    %p237 = por %p235, %p236
    %p238 = scmp.ne.s32.totalorder %s224, %s225
    %p239 = scmp.eq.s32.totalorder %s23, 1
    %p240 = por %p238, %p239
    %p242 = scmp.ne.s32.totalorder %s225, %s241
    %p243 = scmp.eq.s32.totalorder %s23, 0
    %p244 = por %p242, %p243
    %p245 = scmp.le.s32.totalorder 1, %s17
    %p246 = scmp.lt.s32.totalorder %s17, 3
    %p247 = pnand %p245, %p246
    %p248 = pneg %p247
    // Predicated region
    $region9: #{tpu_custom_call.1} parent=5 // pred_check
      _
    $region10: #{tpu_custom_call.1} parent=5 // pred_check_branch
      %250 = sbr.rel (%p247) target = $region12
    $region11: #{tpu_custom_call.1} parent=5 // pred_region
      %s251 = ssub.s32 %s17, 1
      // Predicated region
      $region13: #{tpu_custom_call.1} parent=11 // pred_check
        %p252 = pneg %p64
      $region14: #{tpu_custom_call.1} parent=11 // pred_check_branch
        %254 = sbr.rel (%p252) target = $region16
      $region15: #{tpu_custom_call.1} parent=11 // pred_region
        _
      $region16: #{tpu_custom_call.1} parent=11 // pred_fallthru
        _
      // Predicated region
      $region17: #{tpu_custom_call.1} parent=11 // pred_check
        %p255 = pneg %p85
      $region18: #{tpu_custom_call.1} parent=11 // pred_check_branch
        %257 = sbr.rel (%p255) target = $region20
      $region19: #{tpu_custom_call.1} parent=11 // pred_region
        _
      $region20: #{tpu_custom_call.1} parent=11 // pred_fallthru
        _
      // Predicated region
      $region21: #{tpu_custom_call.1} parent=11 // pred_check
        %p258 = pneg %p106
      $region22: #{tpu_custom_call.1} parent=11 // pred_check_branch
        %260 = sbr.rel (%p258) target = $region24
      $region23: #{tpu_custom_call.1} parent=11 // pred_region
        _
      $region24: #{tpu_custom_call.1} parent=11 // pred_fallthru
        _
      // Predicated region
      $region25: #{tpu_custom_call.1} parent=11 // pred_check
        %p261 = pneg %p127
      $region26: #{tpu_custom_call.1} parent=11 // pred_check_branch
        %263 = sbr.rel (%p261) target = $region28
      $region27: #{tpu_custom_call.1} parent=11 // pred_region
        _
      $region28: #{tpu_custom_call.1} parent=11 // pred_fallthru
        _
      // Predicated region
      $region29: #{tpu_custom_call.1} parent=11 // pred_check
        %p264 = pneg %p148
      $region30: #{tpu_custom_call.1} parent=11 // pred_check_branch
        %266 = sbr.rel (%p264) target = $region32
      $region31: #{tpu_custom_call.1} parent=11 // pred_region
        _
      $region32: #{tpu_custom_call.1} parent=11 // pred_fallthru
        _
      // Predicated region
      $region33: #{tpu_custom_call.1} parent=11 // pred_check
        %p267 = pneg %p169
      $region34: #{tpu_custom_call.1} parent=11 // pred_check_branch
        %269 = sbr.rel (%p267) target = $region36
      $region35: #{tpu_custom_call.1} parent=11 // pred_region
        _
      $region36: #{tpu_custom_call.1} parent=11 // pred_fallthru
        _
      // Predicated region
      $region37: #{tpu_custom_call.1} parent=11 // pred_check
        %p270 = pneg %p190
      $region38: #{tpu_custom_call.1} parent=11 // pred_check_branch
        %272 = sbr.rel (%p270) target = $region40
      $region39: #{tpu_custom_call.1} parent=11 // pred_region
        _
      $region40: #{tpu_custom_call.1} parent=11 // pred_fallthru
        _
      // Predicated region
      $region41: #{tpu_custom_call.1} parent=11 // pred_check
        %p273 = pneg %p211
      $region42: #{tpu_custom_call.1} parent=11 // pred_check_branch
        %275 = sbr.rel (%p273) target = $region44
      $region43: #{tpu_custom_call.1} parent=11 // pred_region
        _
      $region44: #{tpu_custom_call.1} parent=11 // pred_fallthru
        _
    $region12: #{tpu_custom_call.1} parent=5 // pred_fallthru
      _
    %p276 = scmp.lt.s32.totalorder %s17, 2
    // Predicated region
    $region45: #{tpu_custom_call.1} parent=5 // pred_check
      %p277 = pneg %p276
    $region46: #{tpu_custom_call.1} parent=5 // pred_check_branch
      %279 = sbr.rel (%p277) target = $region48
    $region47: #{tpu_custom_call.1} parent=5 // pred_region
      // Predicated region
      $region49: #{tpu_custom_call.1} parent=47 // pred_check
        %p280 = pneg %p37
      $region50: #{tpu_custom_call.1} parent=47 // pred_check_branch
        %282 = sbr.rel (%p280) target = $region52
      $region51: #{tpu_custom_call.1} parent=47 // pred_region
        %s283 = smul.u32 4, %s17
        %p284 = scmp.lt.s32.totalorder %s283, 7
        %s285 = scalar_select %p284, %s283, 7
        %s286 = smul.addr %s285, 18
        %s287 = smul.addr %s286, 8
        %s288 = scalar_lea.vmem %s0, %s287
        %s289 = smul.u32 4, %s17
      $region52: #{tpu_custom_call.1} parent=47 // pred_fallthru
        _
    $region48: #{tpu_custom_call.1} parent=5 // pred_fallthru
      _
    %p290 = scmp.le.s32.totalorder 1, %s17
    %p291 = scmp.lt.s32.totalorder %s17, 3
    %p292 = pnand %p290, %p291
    %p293 = pneg %p292
    // Predicated region
    $region53: #{tpu_custom_call.1} parent=5 // pred_check
      _
    $region54: #{tpu_custom_call.1} parent=5 // pred_check_branch
      %295 = sbr.rel (%p292) target = $region56
    $region55: #{tpu_custom_call.1} parent=5 // pred_region
      %s296 = ssub.s32 %s17, 1
      %s297 = smul.u32 4, %s22
      %p298 = scmp.lt.s32.totalorder %s297, 7
      %s299 = scalar_select %p298, %s297, 7
      %s300 = smul.addr %s299, 18
      %s301 = smul.addr %s300, 8
      %s302 = scalar_lea.vmem %s0, %s301
      %p303 = pneg %p43
      %p304 = pneg %p40
      %p305 = pneg %p64
      %p306 = pneg %p61
      %p307 = pneg %p85
      %p308 = pneg %p82
      %p309 = pneg %p106
      %p310 = pneg %p103
      %p311 = pneg %p127
      %p312 = pneg %p124
      %p313 = pneg %p148
      %p314 = pneg %p145
      %p315 = pneg %p169
      %p316 = pneg %p166
      %p317 = pneg %p190
      %p318 = pneg %p187
      %p319 = pneg %p211
      %p320 = pneg %p208
      %p321 = pneg %p237
      %p322 = pneg %p234
      %p323 = scmp.lt.s32.totalorder %s22, 1
      %s324 = scalar_select %p323, %s22, 1
      %s325 = scalar_lea.vmem %s9, %s324
      %s326 = smul.u32 4, %s22
      %p327 = scmp.lt.s32.totalorder %s326, 7
      %s328 = scalar_select %p327, %s326, 7
      %s329 = smul.addr %s328, 18
      %s330 = smul.addr %s329, 8
      %s331 = scalar_lea.vmem %s0, %s330
      %s332 = smul.u32 4, %s22
      %p333 = scmp.lt.s32.totalorder %s22, 1
      %s334 = scalar_select %p333, %s22, 1
      %s335 = scalar_lea.vmem %s9, %s334
      %v337 = vld [vmem:[%s331] sm:$0xff]
      %v338 = vld [vmem:[%s331 + $0x10] sm:$0xff]
      %v339 = vld [vmem:[%s331 + $0x20] sm:$0xff]
      %v340 = vld [vmem:[%s331 + $0x30] sm:$0xff]
      %v341 = vld [vmem:[%s331 + $0x40] sm:$0xff]
      %v342 = vld [vmem:[%s331 + $0x50] sm:$0xff]
      %v343 = vld [vmem:[%s331 + $0x60] sm:$0xff]
      %v344 = vld [vmem:[%s331 + $0x70] sm:$0xff]
      %v345 = vpack.c.bf16 %v338, %v337
      %v346 = vpack.c.bf16 %v340, %v339
      %v347 = vpack.c.bf16 %v342, %v341
      %v348 = vpack.c.bf16 %v344, %v343
      %v349 = vld [vmem:[%s1] sm:$0xf]
      %v350 = vld [vmem:[%s1 + $0x4] sm:$0xf]
      %v351 = vld [vmem:[%s1 + $0x8] sm:$0xf]
      %v352 = vld [vmem:[%s1 + $0xc] sm:$0xf]
      %v353 = vld [vmem:[%s1 + $0x10] sm:$0xf]
      %v354 = vld [vmem:[%s1 + $0x14] sm:$0xf]
      %v355 = vld [vmem:[%s1 + $0x18] sm:$0xf]
      %v356 = vld [vmem:[%s1 + $0x1c] sm:$0xf]
      %v357 = vld [vmem:[%s1 + $0x20] sm:$0xf]
      %v358 = vld [vmem:[%s1 + $0x24] sm:$0xf]
      %v359 = vld [vmem:[%s1 + $0x28] sm:$0xf]
      %v360 = vld [vmem:[%s1 + $0x2c] sm:$0xf]
      %v361 = vld [vmem:[%s1 + $0x30] sm:$0xf]
      %v362 = vld [vmem:[%s1 + $0x34] sm:$0xf]
      %v363 = vld [vmem:[%s1 + $0x38] sm:$0xf]
      %v364 = vld [vmem:[%s1 + $0x3c] sm:$0xf]
      %s365 = scalar_lea.vmem %s331, 144
      %v366 = vld [vmem:[%s365] sm:$0xff]
      %v367 = vld [vmem:[%s365 + $0x10] sm:$0xff]
      %v368 = vld [vmem:[%s365 + $0x20] sm:$0xff]
      %v369 = vld [vmem:[%s365 + $0x30] sm:$0xff]
      %v370 = vld [vmem:[%s365 + $0x40] sm:$0xff]
      %v371 = vld [vmem:[%s365 + $0x50] sm:$0xff]
      %v372 = vld [vmem:[%s365 + $0x60] sm:$0xff]
      %v373 = vld [vmem:[%s365 + $0x70] sm:$0xff]
      %v374 = vpack.c.bf16 %v367, %v366
      %v375 = vpack.c.bf16 %v369, %v368
      %v376 = vpack.c.bf16 %v371, %v370
      %v377 = vpack.c.bf16 %v373, %v372
      %s378 = scalar_lea.vmem %s1, 64
      %v379 = vld [vmem:[%s378] sm:$0xf]
      %v380 = vld [vmem:[%s378 + $0x4] sm:$0xf]
      %v381 = vld [vmem:[%s378 + $0x8] sm:$0xf]
      %v382 = vld [vmem:[%s378 + $0xc] sm:$0xf]
      %v383 = vld [vmem:[%s378 + $0x10] sm:$0xf]
      %v384 = vld [vmem:[%s378 + $0x14] sm:$0xf]
      %v385 = vld [vmem:[%s378 + $0x18] sm:$0xf]
      %v386 = vld [vmem:[%s378 + $0x1c] sm:$0xf]
      %v387 = vld [vmem:[%s378 + $0x20] sm:$0xf]
      %v388 = vld [vmem:[%s378 + $0x24] sm:$0xf]
      %v389 = vld [vmem:[%s378 + $0x28] sm:$0xf]
      %v390 = vld [vmem:[%s378 + $0x2c] sm:$0xf]
      %v391 = vld [vmem:[%s378 + $0x30] sm:$0xf]
      %v392 = vld [vmem:[%s378 + $0x34] sm:$0xf]
      %v393 = vld [vmem:[%s378 + $0x38] sm:$0xf]
      %v394 = vld [vmem:[%s378 + $0x3c] sm:$0xf]
      %v411 = vunpack.c.l.b16 %v379
      %v412 = vunpack.c.l.b16 %v380
      %v413 = vunpack.c.l.b16 %v381
      %v414 = vunpack.c.l.b16 %v382
      %v415 = vunpack.c.l.b16 %v383
      %v416 = vunpack.c.l.b16 %v384
      %v417 = vunpack.c.l.b16 %v385
      %v418 = vunpack.c.l.b16 %v386
      %v419 = vunpack.c.l.b16 %v387
      %v420 = vunpack.c.l.b16 %v388
      %v421 = vunpack.c.l.b16 %v389
      %v422 = vunpack.c.l.b16 %v390
      %v423 = vunpack.c.l.b16 %v391
      %v424 = vunpack.c.l.b16 %v392
      %v425 = vunpack.c.l.b16 %v393
      %v426 = vunpack.c.l.b16 %v394
      %v427 = vpack.c.b16 %v412, %v411
      %v428 = vpack.c.b16 %v414, %v413
      %v429 = vpack.c.b16 %v416, %v415
      %v430 = vpack.c.b16 %v418, %v417
      %v431 = vpack.c.b16 %v420, %v419
      %v432 = vpack.c.b16 %v422, %v421
      %v433 = vpack.c.b16 %v424, %v423
      %v434 = vpack.c.b16 %v426, %v425
      %443 = vmatpush.bf16.msra.mxu0 %v434
      %444 = vmatpush.bf16.msra.mxu0 %v433
      %445 = vmatpush.bf16.msra.mxu0 %v432
      %446 = vmatpush.bf16.msra.mxu0 %v431
      %447 = vmatpush.bf16.msra.mxu0 %v430
      %448 = vmatpush.bf16.msra.mxu0 %v429
      %449 = vmatpush.bf16.msra.mxu0 %v428
      %450 = vmatpush.bf16.msra.mxu0 %v427
      %451 = vmatmul.bf16.gmra.mxu0 %v374
      %v452 = vpop.f32.mrf.mxu0
      %v453 = vadd.f32 0.0, %v452
      %v454 = vpop.f32.mrf.mxu0
      %v455 = vadd.f32 0.0, %v454
      %456 = vmatmul.bf16.gmra.mxu0 %v375
      %v457 = vpop.f32.mrf.mxu0
      %v458 = vadd.f32 0.0, %v457
      %v459 = vpop.f32.mrf.mxu0
      %v460 = vadd.f32 0.0, %v459
      %461 = vmatmul.bf16.gmra.mxu0 %v376
      %v462 = vpop.f32.mrf.mxu0
      %v463 = vadd.f32 0.0, %v462
      %v464 = vpop.f32.mrf.mxu0
      %v465 = vadd.f32 0.0, %v464
      %466 = vmatmul.bf16.gmra.mxu0 %v377
      %v467 = vpop.f32.mrf.mxu0
      %v468 = vadd.f32 0.0, %v467
      %v469 = vpop.f32.mrf.mxu0
      %v470 = vadd.f32 0.0, %v469
      %471 = vdwg.mxu0
      %v488 = vunpack.c.l.b16 %v349
      %v489 = vunpack.c.l.b16 %v350
      %v490 = vunpack.c.l.b16 %v351
      %v491 = vunpack.c.l.b16 %v352
      %v492 = vunpack.c.l.b16 %v353
      %v493 = vunpack.c.l.b16 %v354
      %v494 = vunpack.c.l.b16 %v355
      %v495 = vunpack.c.l.b16 %v356
      %v496 = vunpack.c.l.b16 %v357
      %v497 = vunpack.c.l.b16 %v358
      %v498 = vunpack.c.l.b16 %v359
      %v499 = vunpack.c.l.b16 %v360
      %v500 = vunpack.c.l.b16 %v361
      %v501 = vunpack.c.l.b16 %v362
      %v502 = vunpack.c.l.b16 %v363
      %v503 = vunpack.c.l.b16 %v364
      %v504 = vpack.c.b16 %v489, %v488
      %v505 = vpack.c.b16 %v491, %v490
      %v506 = vpack.c.b16 %v493, %v492
      %v507 = vpack.c.b16 %v495, %v494
      %v508 = vpack.c.b16 %v497, %v496
      %v509 = vpack.c.b16 %v499, %v498
      %v510 = vpack.c.b16 %v501, %v500
      %v511 = vpack.c.b16 %v503, %v502
      %520 = vmatpush.bf16.msra.mxu0 %v511
      %521 = vmatpush.bf16.msra.mxu0 %v510
      %522 = vmatpush.bf16.msra.mxu0 %v509
      %523 = vmatpush.bf16.msra.mxu0 %v508
      %524 = vmatpush.bf16.msra.mxu0 %v507
      %525 = vmatpush.bf16.msra.mxu0 %v506
      %526 = vmatpush.bf16.msra.mxu0 %v505
      %527 = vmatpush.bf16.msra.mxu0 %v504
      %528 = vmatmul.bf16.gmra.mxu0 %v345
      %v529 = vpop.f32.mrf.mxu0
      %v530 = vadd.f32 %v453, %v529
      %v531 = vpop.f32.mrf.mxu0
      %v532 = vadd.f32 %v455, %v531
      %533 = vmatmul.bf16.gmra.mxu0 %v346
      %v534 = vpop.f32.mrf.mxu0
      %v535 = vadd.f32 %v458, %v534
      %v536 = vpop.f32.mrf.mxu0
      %v537 = vadd.f32 %v460, %v536
      %538 = vmatmul.bf16.gmra.mxu0 %v347
      %v539 = vpop.f32.mrf.mxu0
      %v540 = vadd.f32 %v463, %v539
      %v541 = vpop.f32.mrf.mxu0
      %v542 = vadd.f32 %v465, %v541
      %543 = vmatmul.bf16.gmra.mxu0 %v348
      %v544 = vpop.f32.mrf.mxu0
      %v545 = vadd.f32 %v468, %v544
      %v546 = vpop.f32.mrf.mxu0
      %v547 = vadd.f32 %v470, %v546
      %548 = vdwg.mxu0
      %v549 = vld [vmem:[%s331 + $0x1] sm:$0xff]
      %v550 = vld [vmem:[%s331 + $0x11] sm:$0xff]
      %v551 = vld [vmem:[%s331 + $0x21] sm:$0xff]
      %v552 = vld [vmem:[%s331 + $0x31] sm:$0xff]
      %v553 = vld [vmem:[%s331 + $0x41] sm:$0xff]
      %v554 = vld [vmem:[%s331 + $0x51] sm:$0xff]
      %v555 = vld [vmem:[%s331 + $0x61] sm:$0xff]
      %v556 = vld [vmem:[%s331 + $0x71] sm:$0xff]
      %v557 = vpack.c.bf16 %v550, %v549
      %v558 = vpack.c.bf16 %v552, %v551
      %v559 = vpack.c.bf16 %v554, %v553
      %v560 = vpack.c.bf16 %v556, %v555
      %s561 = scalar_lea.vmem %s1, 128
      %v562 = vld [vmem:[%s561] sm:$0xf]
      %v563 = vld [vmem:[%s561 + $0x4] sm:$0xf]
      %v564 = vld [vmem:[%s561 + $0x8] sm:$0xf]
      %v565 = vld [vmem:[%s561 + $0xc] sm:$0xf]
      %v566 = vld [vmem:[%s561 + $0x10] sm:$0xf]
      %v567 = vld [vmem:[%s561 + $0x14] sm:$0xf]
      %v568 = vld [vmem:[%s561 + $0x18] sm:$0xf]
      %v569 = vld [vmem:[%s561 + $0x1c] sm:$0xf]
      %v570 = vld [vmem:[%s561 + $0x20] sm:$0xf]
      %v571 = vld [vmem:[%s561 + $0x24] sm:$0xf]
      %v572 = vld [vmem:[%s561 + $0x28] sm:$0xf]
      %v573 = vld [vmem:[%s561 + $0x2c] sm:$0xf]
      %v574 = vld [vmem:[%s561 + $0x30] sm:$0xf]
      %v575 = vld [vmem:[%s561 + $0x34] sm:$0xf]
      %v576 = vld [vmem:[%s561 + $0x38] sm:$0xf]
      %v577 = vld [vmem:[%s561 + $0x3c] sm:$0xf]
      %v594 = vunpack.c.l.b16 %v562
      %v595 = vunpack.c.l.b16 %v563
      %v596 = vunpack.c.l.b16 %v564
      %v597 = vunpack.c.l.b16 %v565
      %v598 = vunpack.c.l.b16 %v566
      %v599 = vunpack.c.l.b16 %v567
      %v600 = vunpack.c.l.b16 %v568
      %v601 = vunpack.c.l.b16 %v569
      %v602 = vunpack.c.l.b16 %v570
      %v603 = vunpack.c.l.b16 %v571
      %v604 = vunpack.c.l.b16 %v572
      %v605 = vunpack.c.l.b16 %v573
      %v606 = vunpack.c.l.b16 %v574
      %v607 = vunpack.c.l.b16 %v575
      %v608 = vunpack.c.l.b16 %v576
      %v609 = vunpack.c.l.b16 %v577
      %v610 = vpack.c.b16 %v595, %v594
      %v611 = vpack.c.b16 %v597, %v596
      %v612 = vpack.c.b16 %v599, %v598
      %v613 = vpack.c.b16 %v601, %v600
      %v614 = vpack.c.b16 %v603, %v602
      %v615 = vpack.c.b16 %v605, %v604
      %v616 = vpack.c.b16 %v607, %v606
      %v617 = vpack.c.b16 %v609, %v608
      %626 = vmatpush.bf16.msra.mxu0 %v617
      %627 = vmatpush.bf16.msra.mxu0 %v616
      %628 = vmatpush.bf16.msra.mxu0 %v615
      %629 = vmatpush.bf16.msra.mxu0 %v614
      %630 = vmatpush.bf16.msra.mxu0 %v613
      %631 = vmatpush.bf16.msra.mxu0 %v612
      %632 = vmatpush.bf16.msra.mxu0 %v611
      %633 = vmatpush.bf16.msra.mxu0 %v610
      %634 = vmatmul.bf16.gmra.mxu0 %v557
      %v635 = vpop.f32.mrf.mxu0
      %v636 = vadd.f32 0.0, %v635
      %v637 = vpop.f32.mrf.mxu0
      %v638 = vadd.f32 0.0, %v637
      %639 = vmatmul.bf16.gmra.mxu0 %v558
      %v640 = vpop.f32.mrf.mxu0
      %v641 = vadd.f32 0.0, %v640
      %v642 = vpop.f32.mrf.mxu0
      %v643 = vadd.f32 0.0, %v642
      %644 = vmatmul.bf16.gmra.mxu0 %v559
      %v645 = vpop.f32.mrf.mxu0
      %v646 = vadd.f32 0.0, %v645
      %v647 = vpop.f32.mrf.mxu0
      %v648 = vadd.f32 0.0, %v647
      %649 = vmatmul.bf16.gmra.mxu0 %v560
      %v650 = vpop.f32.mrf.mxu0
      %v651 = vadd.f32 0.0, %v650
      %v652 = vpop.f32.mrf.mxu0
      %v653 = vadd.f32 0.0, %v652
      %654 = vdwg.mxu0
      %v655 = vadd.f32 %v530, %v636
      %v656 = vadd.f32 %v532, %v638
      %v657 = vadd.f32 %v535, %v641
      %v658 = vadd.f32 %v537, %v643
      %v659 = vadd.f32 %v540, %v646
      %v660 = vadd.f32 %v542, %v648
      %v661 = vadd.f32 %v545, %v651
      %v662 = vadd.f32 %v547, %v653
      %s663 = scalar_lea.vmem %s331, 288
      %v664 = vld [vmem:[%s663] sm:$0xff]
      %v665 = vld [vmem:[%s663 + $0x10] sm:$0xff]
      %v666 = vld [vmem:[%s663 + $0x20] sm:$0xff]
      %v667 = vld [vmem:[%s663 + $0x30] sm:$0xff]
      %v668 = vld [vmem:[%s663 + $0x40] sm:$0xff]
      %v669 = vld [vmem:[%s663 + $0x50] sm:$0xff]
      %v670 = vld [vmem:[%s663 + $0x60] sm:$0xff]
      %v671 = vld [vmem:[%s663 + $0x70] sm:$0xff]
      %v672 = vpack.c.bf16 %v665, %v664
      %v673 = vpack.c.bf16 %v667, %v666
      %v674 = vpack.c.bf16 %v669, %v668
      %v675 = vpack.c.bf16 %v671, %v670
      %s676 = scalar_lea.vmem %s1, 192
      %v677 = vld [vmem:[%s676] sm:$0xf]
      %v678 = vld [vmem:[%s676 + $0x4] sm:$0xf]
      %v679 = vld [vmem:[%s676 + $0x8] sm:$0xf]
      %v680 = vld [vmem:[%s676 + $0xc] sm:$0xf]
      %v681 = vld [vmem:[%s676 + $0x10] sm:$0xf]
      %v682 = vld [vmem:[%s676 + $0x14] sm:$0xf]
      %v683 = vld [vmem:[%s676 + $0x18] sm:$0xf]
      %v684 = vld [vmem:[%s676 + $0x1c] sm:$0xf]
      %v685 = vld [vmem:[%s676 + $0x20] sm:$0xf]
      %v686 = vld [vmem:[%s676 + $0x24] sm:$0xf]
      %v687 = vld [vmem:[%s676 + $0x28] sm:$0xf]
      %v688 = vld [vmem:[%s676 + $0x2c] sm:$0xf]
      %v689 = vld [vmem:[%s676 + $0x30] sm:$0xf]
      %v690 = vld [vmem:[%s676 + $0x34] sm:$0xf]
      %v691 = vld [vmem:[%s676 + $0x38] sm:$0xf]
      %v692 = vld [vmem:[%s676 + $0x3c] sm:$0xf]
      %v709 = vunpack.c.l.b16 %v677
      %v710 = vunpack.c.l.b16 %v678
      %v711 = vunpack.c.l.b16 %v679
      %v712 = vunpack.c.l.b16 %v680
      %v713 = vunpack.c.l.b16 %v681
      %v714 = vunpack.c.l.b16 %v682
      %v715 = vunpack.c.l.b16 %v683
      %v716 = vunpack.c.l.b16 %v684
      %v717 = vunpack.c.l.b16 %v685
      %v718 = vunpack.c.l.b16 %v686
      %v719 = vunpack.c.l.b16 %v687
      %v720 = vunpack.c.l.b16 %v688
      %v721 = vunpack.c.l.b16 %v689
      %v722 = vunpack.c.l.b16 %v690
      %v723 = vunpack.c.l.b16 %v691
      %v724 = vunpack.c.l.b16 %v692
      %v725 = vpack.c.b16 %v710, %v709
      %v726 = vpack.c.b16 %v712, %v711
      %v727 = vpack.c.b16 %v714, %v713
      %v728 = vpack.c.b16 %v716, %v715
      %v729 = vpack.c.b16 %v718, %v717
      %v730 = vpack.c.b16 %v720, %v719
      %v731 = vpack.c.b16 %v722, %v721
      %v732 = vpack.c.b16 %v724, %v723
      %741 = vmatpush.bf16.msra.mxu0 %v732
      %742 = vmatpush.bf16.msra.mxu0 %v731
      %743 = vmatpush.bf16.msra.mxu0 %v730
      %744 = vmatpush.bf16.msra.mxu0 %v729
      %745 = vmatpush.bf16.msra.mxu0 %v728
      %746 = vmatpush.bf16.msra.mxu0 %v727
      %747 = vmatpush.bf16.msra.mxu0 %v726
      %748 = vmatpush.bf16.msra.mxu0 %v725
      %749 = vmatmul.bf16.gmra.mxu0 %v672
      %v750 = vpop.f32.mrf.mxu0
      %v751 = vadd.f32 0.0, %v750
      %v752 = vpop.f32.mrf.mxu0
      %v753 = vadd.f32 0.0, %v752
      %754 = vmatmul.bf16.gmra.mxu0 %v673
      %v755 = vpop.f32.mrf.mxu0
      %v756 = vadd.f32 0.0, %v755
      %v757 = vpop.f32.mrf.mxu0
      %v758 = vadd.f32 0.0, %v757
      %759 = vmatmul.bf16.gmra.mxu0 %v674
      %v760 = vpop.f32.mrf.mxu0
      %v761 = vadd.f32 0.0, %v760
      %v762 = vpop.f32.mrf.mxu0
      %v763 = vadd.f32 0.0, %v762
      %764 = vmatmul.bf16.gmra.mxu0 %v675
      %v765 = vpop.f32.mrf.mxu0
      %v766 = vadd.f32 0.0, %v765
      %v767 = vpop.f32.mrf.mxu0
      %v768 = vadd.f32 0.0, %v767
      %769 = vdwg.mxu0
      %v770 = vadd.f32 %v655, %v751
      %v771 = vadd.f32 %v656, %v753
      %v772 = vadd.f32 %v657, %v756
      %v773 = vadd.f32 %v658, %v758
      %v774 = vadd.f32 %v659, %v761
      %v775 = vadd.f32 %v660, %v763
      %v776 = vadd.f32 %v661, %v766
      %v777 = vadd.f32 %v662, %v768
      %s778 = scalar_lea.vmem %s331, 432
      %v779 = vld [vmem:[%s778] sm:$0xff]
      %v780 = vld [vmem:[%s778 + $0x10] sm:$0xff]
      %v781 = vld [vmem:[%s778 + $0x20] sm:$0xff]
      %v782 = vld [vmem:[%s778 + $0x30] sm:$0xff]
      %v783 = vld [vmem:[%s778 + $0x40] sm:$0xff]
      %v784 = vld [vmem:[%s778 + $0x50] sm:$0xff]
      %v785 = vld [vmem:[%s778 + $0x60] sm:$0xff]
      %v786 = vld [vmem:[%s778 + $0x70] sm:$0xff]
      %v787 = vpack.c.bf16 %v780, %v779
      %v788 = vpack.c.bf16 %v782, %v781
      %v789 = vpack.c.bf16 %v784, %v783
      %v790 = vpack.c.bf16 %v786, %v785
      %s791 = scalar_lea.vmem %s1, 256
      %v792 = vld [vmem:[%s791] sm:$0xf]
      %v793 = vld [vmem:[%s791 + $0x4] sm:$0xf]
      %v794 = vld [vmem:[%s791 + $0x8] sm:$0xf]
      %v795 = vld [vmem:[%s791 + $0xc] sm:$0xf]
      %v796 = vld [vmem:[%s791 + $0x10] sm:$0xf]
      %v797 = vld [vmem:[%s791 + $0x14] sm:$0xf]
      %v798 = vld [vmem:[%s791 + $0x18] sm:$0xf]
      %v799 = vld [vmem:[%s791 + $0x1c] sm:$0xf]
      %v800 = vld [vmem:[%s791 + $0x20] sm:$0xf]
      %v801 = vld [vmem:[%s791 + $0x24] sm:$0xf]
      %v802 = vld [vmem:[%s791 + $0x28] sm:$0xf]
      %v803 = vld [vmem:[%s791 + $0x2c] sm:$0xf]
      %v804 = vld [vmem:[%s791 + $0x30] sm:$0xf]
      %v805 = vld [vmem:[%s791 + $0x34] sm:$0xf]
      %v806 = vld [vmem:[%s791 + $0x38] sm:$0xf]
      %v807 = vld [vmem:[%s791 + $0x3c] sm:$0xf]
      %v824 = vunpack.c.l.b16 %v792
      %v825 = vunpack.c.l.b16 %v793
      %v826 = vunpack.c.l.b16 %v794
      %v827 = vunpack.c.l.b16 %v795
      %v828 = vunpack.c.l.b16 %v796
      %v829 = vunpack.c.l.b16 %v797
      %v830 = vunpack.c.l.b16 %v798
      %v831 = vunpack.c.l.b16 %v799
      %v832 = vunpack.c.l.b16 %v800
      %v833 = vunpack.c.l.b16 %v801
      %v834 = vunpack.c.l.b16 %v802
      %v835 = vunpack.c.l.b16 %v803
      %v836 = vunpack.c.l.b16 %v804
      %v837 = vunpack.c.l.b16 %v805
      %v838 = vunpack.c.l.b16 %v806
      %v839 = vunpack.c.l.b16 %v807
      %v840 = vpack.c.b16 %v825, %v824
      %v841 = vpack.c.b16 %v827, %v826
      %v842 = vpack.c.b16 %v829, %v828
      %v843 = vpack.c.b16 %v831, %v830
      %v844 = vpack.c.b16 %v833, %v832
      %v845 = vpack.c.b16 %v835, %v834
      %v846 = vpack.c.b16 %v837, %v836
      %v847 = vpack.c.b16 %v839, %v838
      %856 = vmatpush.bf16.msra.mxu0 %v847
      %857 = vmatpush.bf16.msra.mxu0 %v846
      %858 = vmatpush.bf16.msra.mxu0 %v845
      %859 = vmatpush.bf16.msra.mxu0 %v844
      %860 = vmatpush.bf16.msra.mxu0 %v843
      %861 = vmatpush.bf16.msra.mxu0 %v842
      %862 = vmatpush.bf16.msra.mxu0 %v841
      %863 = vmatpush.bf16.msra.mxu0 %v840
      %864 = vmatmul.bf16.gmra.mxu0 %v787
      %v865 = vpop.f32.mrf.mxu0
      %v866 = vadd.f32 0.0, %v865
      %v867 = vpop.f32.mrf.mxu0
      %v868 = vadd.f32 0.0, %v867
      %869 = vmatmul.bf16.gmra.mxu0 %v788
      %v870 = vpop.f32.mrf.mxu0
      %v871 = vadd.f32 0.0, %v870
      %v872 = vpop.f32.mrf.mxu0
      %v873 = vadd.f32 0.0, %v872
      %874 = vmatmul.bf16.gmra.mxu0 %v789
      %v875 = vpop.f32.mrf.mxu0
      %v876 = vadd.f32 0.0, %v875
      %v877 = vpop.f32.mrf.mxu0
      %v878 = vadd.f32 0.0, %v877
      %879 = vmatmul.bf16.gmra.mxu0 %v790
      %v880 = vpop.f32.mrf.mxu0
      %v881 = vadd.f32 0.0, %v880
      %v882 = vpop.f32.mrf.mxu0
      %v883 = vadd.f32 0.0, %v882
      %884 = vdwg.mxu0
      %v885 = vadd.f32 %v770, %v866
      %v886 = vadd.f32 %v771, %v868
      %v887 = vadd.f32 %v772, %v871
      %v888 = vadd.f32 %v773, %v873
      %v889 = vadd.f32 %v774, %v876
      %v890 = vadd.f32 %v775, %v878
      %v891 = vadd.f32 %v776, %v881
      %v892 = vadd.f32 %v777, %v883
      %v893 = vld [vmem:[%s663 + $0x1] sm:$0xff]
      %v894 = vld [vmem:[%s663 + $0x11] sm:$0xff]
      %v895 = vld [vmem:[%s663 + $0x21] sm:$0xff]
      %v896 = vld [vmem:[%s663 + $0x31] sm:$0xff]
      %v897 = vld [vmem:[%s663 + $0x41] sm:$0xff]
      %v898 = vld [vmem:[%s663 + $0x51] sm:$0xff]
      %v899 = vld [vmem:[%s663 + $0x61] sm:$0xff]
      %v900 = vld [vmem:[%s663 + $0x71] sm:$0xff]
      %v901 = vpack.c.bf16 %v894, %v893
      %v902 = vpack.c.bf16 %v896, %v895
      %v903 = vpack.c.bf16 %v898, %v897
      %v904 = vpack.c.bf16 %v900, %v899
      %s905 = scalar_lea.vmem %s1, 320
      %v906 = vld [vmem:[%s905] sm:$0xf]
      %v907 = vld [vmem:[%s905 + $0x4] sm:$0xf]
      %v908 = vld [vmem:[%s905 + $0x8] sm:$0xf]
      %v909 = vld [vmem:[%s905 + $0xc] sm:$0xf]
      %v910 = vld [vmem:[%s905 + $0x10] sm:$0xf]
      %v911 = vld [vmem:[%s905 + $0x14] sm:$0xf]
      %v912 = vld [vmem:[%s905 + $0x18] sm:$0xf]
      %v913 = vld [vmem:[%s905 + $0x1c] sm:$0xf]
      %v914 = vld [vmem:[%s905 + $0x20] sm:$0xf]
      %v915 = vld [vmem:[%s905 + $0x24] sm:$0xf]
      %v916 = vld [vmem:[%s905 + $0x28] sm:$0xf]
      %v917 = vld [vmem:[%s905 + $0x2c] sm:$0xf]
      %v918 = vld [vmem:[%s905 + $0x30] sm:$0xf]
      %v919 = vld [vmem:[%s905 + $0x34] sm:$0xf]
      %v920 = vld [vmem:[%s905 + $0x38] sm:$0xf]
      %v921 = vld [vmem:[%s905 + $0x3c] sm:$0xf]
      %v938 = vunpack.c.l.b16 %v906
      %v939 = vunpack.c.l.b16 %v907
      %v940 = vunpack.c.l.b16 %v908
      %v941 = vunpack.c.l.b16 %v909
      %v942 = vunpack.c.l.b16 %v910
      %v943 = vunpack.c.l.b16 %v911
      %v944 = vunpack.c.l.b16 %v912
      %v945 = vunpack.c.l.b16 %v913
      %v946 = vunpack.c.l.b16 %v914
      %v947 = vunpack.c.l.b16 %v915
      %v948 = vunpack.c.l.b16 %v916
      %v949 = vunpack.c.l.b16 %v917
      %v950 = vunpack.c.l.b16 %v918
      %v951 = vunpack.c.l.b16 %v919
      %v952 = vunpack.c.l.b16 %v920
      %v953 = vunpack.c.l.b16 %v921
      %v954 = vpack.c.b16 %v939, %v938
      %v955 = vpack.c.b16 %v941, %v940
      %v956 = vpack.c.b16 %v943, %v942
      %v957 = vpack.c.b16 %v945, %v944
      %v958 = vpack.c.b16 %v947, %v946
      %v959 = vpack.c.b16 %v949, %v948
      %v960 = vpack.c.b16 %v951, %v950
      %v961 = vpack.c.b16 %v953, %v952
      %970 = vmatpush.bf16.msra.mxu0 %v961
      %971 = vmatpush.bf16.msra.mxu0 %v960
      %972 = vmatpush.bf16.msra.mxu0 %v959
      %973 = vmatpush.bf16.msra.mxu0 %v958
      %974 = vmatpush.bf16.msra.mxu0 %v957
      %975 = vmatpush.bf16.msra.mxu0 %v956
      %976 = vmatpush.bf16.msra.mxu0 %v955
      %977 = vmatpush.bf16.msra.mxu0 %v954
      %978 = vmatmul.bf16.gmra.mxu0 %v901
      %v979 = vpop.f32.mrf.mxu0
      %v980 = vadd.f32 0.0, %v979
      %v981 = vpop.f32.mrf.mxu0
      %v982 = vadd.f32 0.0, %v981
      %983 = vmatmul.bf16.gmra.mxu0 %v902
      %v984 = vpop.f32.mrf.mxu0
      %v985 = vadd.f32 0.0, %v984
      %v986 = vpop.f32.mrf.mxu0
      %v987 = vadd.f32 0.0, %v986
      %988 = vmatmul.bf16.gmra.mxu0 %v903
      %v989 = vpop.f32.mrf.mxu0
      %v990 = vadd.f32 0.0, %v989
      %v991 = vpop.f32.mrf.mxu0
      %v992 = vadd.f32 0.0, %v991
      %993 = vmatmul.bf16.gmra.mxu0 %v904
      %v994 = vpop.f32.mrf.mxu0
      %v995 = vadd.f32 0.0, %v994
      %v996 = vpop.f32.mrf.mxu0
      %v997 = vadd.f32 0.0, %v996
      %998 = vdwg.mxu0
      %v999 = vadd.f32 %v885, %v980
      %v1000 = vadd.f32 %v886, %v982
      %v1001 = vadd.f32 %v887, %v985
      %v1002 = vadd.f32 %v888, %v987
      %v1003 = vadd.f32 %v889, %v990
      %v1004 = vadd.f32 %v890, %v992
      %v1005 = vadd.f32 %v891, %v995
      %v1006 = vadd.f32 %v892, %v997
      %s1007 = scalar_lea.vmem %s331, 16
      %v1008 = vld [vmem:[%s1007] sm:$0xff]
      %v1009 = vld [vmem:[%s1007 + $0x10] sm:$0xff]
      %v1010 = vld [vmem:[%s1007 + $0x20] sm:$0xff]
      %v1011 = vld [vmem:[%s1007 + $0x30] sm:$0xff]
      %v1012 = vld [vmem:[%s1007 + $0x40] sm:$0xff]
      %v1013 = vld [vmem:[%s1007 + $0x50] sm:$0xff]
      %v1014 = vld [vmem:[%s1007 + $0x60] sm:$0xff]
      %v1015 = vld [vmem:[%s1007 + $0x70] sm:$0xff]
      %v1016 = vpack.c.bf16 %v1009, %v1008
      %v1017 = vpack.c.bf16 %v1011, %v1010
      %v1018 = vpack.c.bf16 %v1013, %v1012
      %v1019 = vpack.c.bf16 %v1015, %v1014
      %s1020 = scalar_lea.vmem %s1, 384
      %v1021 = vld [vmem:[%s1020] sm:$0xf]
      %v1022 = vld [vmem:[%s1020 + $0x4] sm:$0xf]
      %v1023 = vld [vmem:[%s1020 + $0x8] sm:$0xf]
      %v1024 = vld [vmem:[%s1020 + $0xc] sm:$0xf]
      %v1025 = vld [vmem:[%s1020 + $0x10] sm:$0xf]
      %v1026 = vld [vmem:[%s1020 + $0x14] sm:$0xf]
      %v1027 = vld [vmem:[%s1020 + $0x18] sm:$0xf]
      %v1028 = vld [vmem:[%s1020 + $0x1c] sm:$0xf]
      %v1029 = vld [vmem:[%s1020 + $0x20] sm:$0xf]
      %v1030 = vld [vmem:[%s1020 + $0x24] sm:$0xf]
      %v1031 = vld [vmem:[%s1020 + $0x28] sm:$0xf]
      %v1032 = vld [vmem:[%s1020 + $0x2c] sm:$0xf]
      %v1033 = vld [vmem:[%s1020 + $0x30] sm:$0xf]
      %v1034 = vld [vmem:[%s1020 + $0x34] sm:$0xf]
      %v1035 = vld [vmem:[%s1020 + $0x38] sm:$0xf]
      %v1036 = vld [vmem:[%s1020 + $0x3c] sm:$0xf]
      %v1053 = vunpack.c.l.b16 %v1021
      %v1054 = vunpack.c.l.b16 %v1022
      %v1055 = vunpack.c.l.b16 %v1023
      %v1056 = vunpack.c.l.b16 %v1024
      %v1057 = vunpack.c.l.b16 %v1025
      %v1058 = vunpack.c.l.b16 %v1026
      %v1059 = vunpack.c.l.b16 %v1027
      %v1060 = vunpack.c.l.b16 %v1028
      %v1061 = vunpack.c.l.b16 %v1029
      %v1062 = vunpack.c.l.b16 %v1030
      %v1063 = vunpack.c.l.b16 %v1031
      %v1064 = vunpack.c.l.b16 %v1032
      %v1065 = vunpack.c.l.b16 %v1033
      %v1066 = vunpack.c.l.b16 %v1034
      %v1067 = vunpack.c.l.b16 %v1035
      %v1068 = vunpack.c.l.b16 %v1036
      %v1069 = vpack.c.b16 %v1054, %v1053
      %v1070 = vpack.c.b16 %v1056, %v1055
      %v1071 = vpack.c.b16 %v1058, %v1057
      %v1072 = vpack.c.b16 %v1060, %v1059
      %v1073 = vpack.c.b16 %v1062, %v1061
      %v1074 = vpack.c.b16 %v1064, %v1063
      %v1075 = vpack.c.b16 %v1066, %v1065
      %v1076 = vpack.c.b16 %v1068, %v1067
      %1085 = vmatpush.bf16.msra.mxu0 %v1076
      %1086 = vmatpush.bf16.msra.mxu0 %v1075
      %1087 = vmatpush.bf16.msra.mxu0 %v1074
      %1088 = vmatpush.bf16.msra.mxu0 %v1073
      %1089 = vmatpush.bf16.msra.mxu0 %v1072
      %1090 = vmatpush.bf16.msra.mxu0 %v1071
      %1091 = vmatpush.bf16.msra.mxu0 %v1070
      %1092 = vmatpush.bf16.msra.mxu0 %v1069
      %1093 = vmatmul.bf16.gmra.mxu0 %v1016
      %v1094 = vpop.f32.mrf.mxu0
      %v1095 = vadd.f32 0.0, %v1094
      %v1096 = vpop.f32.mrf.mxu0
      %v1097 = vadd.f32 0.0, %v1096
      %1098 = vmatmul.bf16.gmra.mxu0 %v1017
      %v1099 = vpop.f32.mrf.mxu0
      %v1100 = vadd.f32 0.0, %v1099
      %v1101 = vpop.f32.mrf.mxu0
      %v1102 = vadd.f32 0.0, %v1101
      %1103 = vmatmul.bf16.gmra.mxu0 %v1018
      %v1104 = vpop.f32.mrf.mxu0
      %v1105 = vadd.f32 0.0, %v1104
      %v1106 = vpop.f32.mrf.mxu0
      %v1107 = vadd.f32 0.0, %v1106
      %1108 = vmatmul.bf16.gmra.mxu0 %v1019
      %v1109 = vpop.f32.mrf.mxu0
      %v1110 = vadd.f32 0.0, %v1109
      %v1111 = vpop.f32.mrf.mxu0
      %v1112 = vadd.f32 0.0, %v1111
      %1113 = vdwg.mxu0
      %v1114 = vadd.f32 %v999, %v1095
      %v1115 = vadd.f32 %v1000, %v1097
      %v1116 = vadd.f32 %v1001, %v1100
      %v1117 = vadd.f32 %v1002, %v1102
      %v1118 = vadd.f32 %v1003, %v1105
      %v1119 = vadd.f32 %v1004, %v1107
      %v1120 = vadd.f32 %v1005, %v1110
      %v1121 = vadd.f32 %v1006, %v1112
      %s1122 = scalar_lea.vmem %s331, 160
      %v1123 = vld [vmem:[%s1122] sm:$0xff]
      %v1124 = vld [vmem:[%s1122 + $0x10] sm:$0xff]
      %v1125 = vld [vmem:[%s1122 + $0x20] sm:$0xff]
      %v1126 = vld [vmem:[%s1122 + $0x30] sm:$0xff]
      %v1127 = vld [vmem:[%s1122 + $0x40] sm:$0xff]
      %v1128 = vld [vmem:[%s1122 + $0x50] sm:$0xff]
      %v1129 = vld [vmem:[%s1122 + $0x60] sm:$0xff]
      %v1130 = vld [vmem:[%s1122 + $0x70] sm:$0xff]
      %v1131 = vpack.c.bf16 %v1124, %v1123
      %v1132 = vpack.c.bf16 %v1126, %v1125
      %v1133 = vpack.c.bf16 %v1128, %v1127
      %v1134 = vpack.c.bf16 %v1130, %v1129
      %s1135 = scalar_lea.vmem %s1, 448
      %v1136 = vld [vmem:[%s1135] sm:$0xf]
      %v1137 = vld [vmem:[%s1135 + $0x4] sm:$0xf]
      %v1138 = vld [vmem:[%s1135 + $0x8] sm:$0xf]
      %v1139 = vld [vmem:[%s1135 + $0xc] sm:$0xf]
      %v1140 = vld [vmem:[%s1135 + $0x10] sm:$0xf]
      %v1141 = vld [vmem:[%s1135 + $0x14] sm:$0xf]
      %v1142 = vld [vmem:[%s1135 + $0x18] sm:$0xf]
      %v1143 = vld [vmem:[%s1135 + $0x1c] sm:$0xf]
      %v1144 = vld [vmem:[%s1135 + $0x20] sm:$0xf]
      %v1145 = vld [vmem:[%s1135 + $0x24] sm:$0xf]
      %v1146 = vld [vmem:[%s1135 + $0x28] sm:$0xf]
      %v1147 = vld [vmem:[%s1135 + $0x2c] sm:$0xf]
      %v1148 = vld [vmem:[%s1135 + $0x30] sm:$0xf]
      %v1149 = vld [vmem:[%s1135 + $0x34] sm:$0xf]
      %v1150 = vld [vmem:[%s1135 + $0x38] sm:$0xf]
      %v1151 = vld [vmem:[%s1135 + $0x3c] sm:$0xf]
      %v1168 = vunpack.c.l.b16 %v1136
      %v1169 = vunpack.c.l.b16 %v1137
      %v1170 = vunpack.c.l.b16 %v1138
      %v1171 = vunpack.c.l.b16 %v1139
      %v1172 = vunpack.c.l.b16 %v1140
      %v1173 = vunpack.c.l.b16 %v1141
      %v1174 = vunpack.c.l.b16 %v1142
      %v1175 = vunpack.c.l.b16 %v1143
      %v1176 = vunpack.c.l.b16 %v1144
      %v1177 = vunpack.c.l.b16 %v1145
      %v1178 = vunpack.c.l.b16 %v1146
      %v1179 = vunpack.c.l.b16 %v1147
      %v1180 = vunpack.c.l.b16 %v1148
      %v1181 = vunpack.c.l.b16 %v1149
      %v1182 = vunpack.c.l.b16 %v1150
      %v1183 = vunpack.c.l.b16 %v1151
      %v1184 = vpack.c.b16 %v1169, %v1168
      %v1185 = vpack.c.b16 %v1171, %v1170
      %v1186 = vpack.c.b16 %v1173, %v1172
      %v1187 = vpack.c.b16 %v1175, %v1174
      %v1188 = vpack.c.b16 %v1177, %v1176
      %v1189 = vpack.c.b16 %v1179, %v1178
      %v1190 = vpack.c.b16 %v1181, %v1180
      %v1191 = vpack.c.b16 %v1183, %v1182
      %1200 = vmatpush.bf16.msra.mxu0 %v1191
      %1201 = vmatpush.bf16.msra.mxu0 %v1190
      %1202 = vmatpush.bf16.msra.mxu0 %v1189
      %1203 = vmatpush.bf16.msra.mxu0 %v1188
      %1204 = vmatpush.bf16.msra.mxu0 %v1187
      %1205 = vmatpush.bf16.msra.mxu0 %v1186
      %1206 = vmatpush.bf16.msra.mxu0 %v1185
      %1207 = vmatpush.bf16.msra.mxu0 %v1184
      %1208 = vmatmul.bf16.gmra.mxu0 %v1131
      %v1209 = vpop.f32.mrf.mxu0
      %v1210 = vadd.f32 0.0, %v1209
      %v1211 = vpop.f32.mrf.mxu0
      %v1212 = vadd.f32 0.0, %v1211
      %1213 = vmatmul.bf16.gmra.mxu0 %v1132
      %v1214 = vpop.f32.mrf.mxu0
      %v1215 = vadd.f32 0.0, %v1214
      %v1216 = vpop.f32.mrf.mxu0
      %v1217 = vadd.f32 0.0, %v1216
      %1218 = vmatmul.bf16.gmra.mxu0 %v1133
      %v1219 = vpop.f32.mrf.mxu0
      %v1220 = vadd.f32 0.0, %v1219
      %v1221 = vpop.f32.mrf.mxu0
      %v1222 = vadd.f32 0.0, %v1221
      %1223 = vmatmul.bf16.gmra.mxu0 %v1134
      %v1224 = vpop.f32.mrf.mxu0
      %v1225 = vadd.f32 0.0, %v1224
      %v1226 = vpop.f32.mrf.mxu0
      %v1227 = vadd.f32 0.0, %v1226
      %1228 = vdwg.mxu0
      %v1229 = vadd.f32 %v1114, %v1210
      %v1230 = vadd.f32 %v1115, %v1212
      %v1231 = vadd.f32 %v1116, %v1215
      %v1232 = vadd.f32 %v1117, %v1217
      %v1233 = vadd.f32 %v1118, %v1220
      %v1234 = vadd.f32 %v1119, %v1222
      %v1235 = vadd.f32 %v1120, %v1225
      %v1236 = vadd.f32 %v1121, %v1227
      %v1237 = vld [vmem:[%s1007 + $0x1] sm:$0xff]
      %v1238 = vld [vmem:[%s1007 + $0x11] sm:$0xff]
      %v1239 = vld [vmem:[%s1007 + $0x21] sm:$0xff]
      %v1240 = vld [vmem:[%s1007 + $0x31] sm:$0xff]
      %v1241 = vld [vmem:[%s1007 + $0x41] sm:$0xff]
      %v1242 = vld [vmem:[%s1007 + $0x51] sm:$0xff]
      %v1243 = vld [vmem:[%s1007 + $0x61] sm:$0xff]
      %v1244 = vld [vmem:[%s1007 + $0x71] sm:$0xff]
      %v1245 = vpack.c.bf16 %v1238, %v1237
      %v1246 = vpack.c.bf16 %v1240, %v1239
      %v1247 = vpack.c.bf16 %v1242, %v1241
      %v1248 = vpack.c.bf16 %v1244, %v1243
      %s1249 = scalar_lea.vmem %s1, 512
      %v1250 = vld [vmem:[%s1249] sm:$0xf]
      %v1251 = vld [vmem:[%s1249 + $0x4] sm:$0xf]
      %v1252 = vld [vmem:[%s1249 + $0x8] sm:$0xf]
      %v1253 = vld [vmem:[%s1249 + $0xc] sm:$0xf]
      %v1254 = vld [vmem:[%s1249 + $0x10] sm:$0xf]
      %v1255 = vld [vmem:[%s1249 + $0x14] sm:$0xf]
      %v1256 = vld [vmem:[%s1249 + $0x18] sm:$0xf]
      %v1257 = vld [vmem:[%s1249 + $0x1c] sm:$0xf]
      %v1258 = vld [vmem:[%s1249 + $0x20] sm:$0xf]
      %v1259 = vld [vmem:[%s1249 + $0x24] sm:$0xf]
      %v1260 = vld [vmem:[%s1249 + $0x28] sm:$0xf]
      %v1261 = vld [vmem:[%s1249 + $0x2c] sm:$0xf]
      %v1262 = vld [vmem:[%s1249 + $0x30] sm:$0xf]
      %v1263 = vld [vmem:[%s1249 + $0x34] sm:$0xf]
      %v1264 = vld [vmem:[%s1249 + $0x38] sm:$0xf]
      %v1265 = vld [vmem:[%s1249 + $0x3c] sm:$0xf]
      %v1282 = vunpack.c.l.b16 %v1250
      %v1283 = vunpack.c.l.b16 %v1251
      %v1284 = vunpack.c.l.b16 %v1252
      %v1285 = vunpack.c.l.b16 %v1253
      %v1286 = vunpack.c.l.b16 %v1254
      %v1287 = vunpack.c.l.b16 %v1255
      %v1288 = vunpack.c.l.b16 %v1256
      %v1289 = vunpack.c.l.b16 %v1257
      %v1290 = vunpack.c.l.b16 %v1258
      %v1291 = vunpack.c.l.b16 %v1259
      %v1292 = vunpack.c.l.b16 %v1260
      %v1293 = vunpack.c.l.b16 %v1261
      %v1294 = vunpack.c.l.b16 %v1262
      %v1295 = vunpack.c.l.b16 %v1263
      %v1296 = vunpack.c.l.b16 %v1264
      %v1297 = vunpack.c.l.b16 %v1265
      %v1298 = vpack.c.b16 %v1283, %v1282
      %v1299 = vpack.c.b16 %v1285, %v1284
      %v1300 = vpack.c.b16 %v1287, %v1286
      %v1301 = vpack.c.b16 %v1289, %v1288
      %v1302 = vpack.c.b16 %v1291, %v1290
      %v1303 = vpack.c.b16 %v1293, %v1292
      %v1304 = vpack.c.b16 %v1295, %v1294
      %v1305 = vpack.c.b16 %v1297, %v1296
      %1314 = vmatpush.bf16.msra.mxu0 %v1305
      %1315 = vmatpush.bf16.msra.mxu0 %v1304
      %1316 = vmatpush.bf16.msra.mxu0 %v1303
      %1317 = vmatpush.bf16.msra.mxu0 %v1302
      %1318 = vmatpush.bf16.msra.mxu0 %v1301
      %1319 = vmatpush.bf16.msra.mxu0 %v1300
      %1320 = vmatpush.bf16.msra.mxu0 %v1299
      %1321 = vmatpush.bf16.msra.mxu0 %v1298
      %1322 = vmatmul.bf16.gmra.mxu0 %v1245
      %v1323 = vpop.f32.mrf.mxu0
      %v1324 = vadd.f32 0.0, %v1323
      %v1325 = vpop.f32.mrf.mxu0
      %v1326 = vadd.f32 0.0, %v1325
      %1327 = vmatmul.bf16.gmra.mxu0 %v1246
      %v1328 = vpop.f32.mrf.mxu0
      %v1329 = vadd.f32 0.0, %v1328
      %v1330 = vpop.f32.mrf.mxu0
      %v1331 = vadd.f32 0.0, %v1330
      %1332 = vmatmul.bf16.gmra.mxu0 %v1247
      %v1333 = vpop.f32.mrf.mxu0
      %v1334 = vadd.f32 0.0, %v1333
      %v1335 = vpop.f32.mrf.mxu0
      %v1336 = vadd.f32 0.0, %v1335
      %1337 = vmatmul.bf16.gmra.mxu0 %v1248
      %v1338 = vpop.f32.mrf.mxu0
      %v1339 = vadd.f32 0.0, %v1338
      %v1340 = vpop.f32.mrf.mxu0
      %v1341 = vadd.f32 0.0, %v1340
      %1342 = vdwg.mxu0
      %v1343 = vadd.f32 %v1229, %v1324
      %v1344 = vadd.f32 %v1230, %v1326
      %v1345 = vadd.f32 %v1231, %v1329
      %v1346 = vadd.f32 %v1232, %v1331
      %v1347 = vadd.f32 %v1233, %v1334
      %v1348 = vadd.f32 %v1234, %v1336
      %v1349 = vadd.f32 %v1235, %v1339
      %v1350 = vadd.f32 %v1236, %v1341
      %1351 = vmatpush.bf16.msra.mxu0 %v434
      %1352 = vmatpush.bf16.msra.mxu0 %v433
      %1353 = vmatpush.bf16.msra.mxu0 %v432
      %1354 = vmatpush.bf16.msra.mxu0 %v431
      %1355 = vmatpush.bf16.msra.mxu0 %v430
      %1356 = vmatpush.bf16.msra.mxu0 %v429
      %1357 = vmatpush.bf16.msra.mxu0 %v428
      %1358 = vmatpush.bf16.msra.mxu0 %v427
      %1359 = vmatmul.bf16.gmra.mxu0 %v557
      %v1360 = vpop.f32.mrf.mxu0
      %v1361 = vadd.f32 0.0, %v1360
      %v1362 = vpop.f32.mrf.mxu0
      %v1363 = vadd.f32 0.0, %v1362
      %1364 = vmatmul.bf16.gmra.mxu0 %v558
      %v1365 = vpop.f32.mrf.mxu0
      %v1366 = vadd.f32 0.0, %v1365
      %v1367 = vpop.f32.mrf.mxu0
      %v1368 = vadd.f32 0.0, %v1367
      %1369 = vmatmul.bf16.gmra.mxu0 %v559
      %v1370 = vpop.f32.mrf.mxu0
      %v1371 = vadd.f32 0.0, %v1370
      %v1372 = vpop.f32.mrf.mxu0
      %v1373 = vadd.f32 0.0, %v1372
      %1374 = vmatmul.bf16.gmra.mxu0 %v560
      %v1375 = vpop.f32.mrf.mxu0
      %v1376 = vadd.f32 0.0, %v1375
      %v1377 = vpop.f32.mrf.mxu0
      %v1378 = vadd.f32 0.0, %v1377
      %1379 = vdwg.mxu0
      %1380 = vmatpush.bf16.msra.mxu0 %v511
      %1381 = vmatpush.bf16.msra.mxu0 %v510
      %1382 = vmatpush.bf16.msra.mxu0 %v509
      %1383 = vmatpush.bf16.msra.mxu0 %v508
      %1384 = vmatpush.bf16.msra.mxu0 %v507
      %1385 = vmatpush.bf16.msra.mxu0 %v506
      %1386 = vmatpush.bf16.msra.mxu0 %v505
      %1387 = vmatpush.bf16.msra.mxu0 %v504
      %1388 = vmatmul.bf16.gmra.mxu0 %v374
      %v1389 = vpop.f32.mrf.mxu0
      %v1390 = vadd.f32 %v1361, %v1389
      %v1391 = vpop.f32.mrf.mxu0
      %v1392 = vadd.f32 %v1363, %v1391
      %1393 = vmatmul.bf16.gmra.mxu0 %v375
      %v1394 = vpop.f32.mrf.mxu0
      %v1395 = vadd.f32 %v1366, %v1394
      %v1396 = vpop.f32.mrf.mxu0
      %v1397 = vadd.f32 %v1368, %v1396
      %1398 = vmatmul.bf16.gmra.mxu0 %v376
      %v1399 = vpop.f32.mrf.mxu0
      %v1400 = vadd.f32 %v1371, %v1399
      %v1401 = vpop.f32.mrf.mxu0
      %v1402 = vadd.f32 %v1373, %v1401
      %1403 = vmatmul.bf16.gmra.mxu0 %v377
      %v1404 = vpop.f32.mrf.mxu0
      %v1405 = vadd.f32 %v1376, %v1404
      %v1406 = vpop.f32.mrf.mxu0
      %v1407 = vadd.f32 %v1378, %v1406
      %1408 = vdwg.mxu0
      %v1409 = vld [vmem:[%s365 + $0x1] sm:$0xff]
      %v1410 = vld [vmem:[%s365 + $0x11] sm:$0xff]
      %v1411 = vld [vmem:[%s365 + $0x21] sm:$0xff]
      %v1412 = vld [vmem:[%s365 + $0x31] sm:$0xff]
      %v1413 = vld [vmem:[%s365 + $0x41] sm:$0xff]
      %v1414 = vld [vmem:[%s365 + $0x51] sm:$0xff]
      %v1415 = vld [vmem:[%s365 + $0x61] sm:$0xff]
      %v1416 = vld [vmem:[%s365 + $0x71] sm:$0xff]
      %v1417 = vpack.c.bf16 %v1410, %v1409
      %v1418 = vpack.c.bf16 %v1412, %v1411
      %v1419 = vpack.c.bf16 %v1414, %v1413
      %v1420 = vpack.c.bf16 %v1416, %v1415
      %1421 = vmatpush.bf16.msra.mxu0 %v617
      %1422 = vmatpush.bf16.msra.mxu0 %v616
      %1423 = vmatpush.bf16.msra.mxu0 %v615
      %1424 = vmatpush.bf16.msra.mxu0 %v614
      %1425 = vmatpush.bf16.msra.mxu0 %v613
      %1426 = vmatpush.bf16.msra.mxu0 %v612
      %1427 = vmatpush.bf16.msra.mxu0 %v611
      %1428 = vmatpush.bf16.msra.mxu0 %v610
      %1429 = vmatmul.bf16.gmra.mxu0 %v1417
      %v1430 = vpop.f32.mrf.mxu0
      %v1431 = vadd.f32 0.0, %v1430
      %v1432 = vpop.f32.mrf.mxu0
      %v1433 = vadd.f32 0.0, %v1432
      %1434 = vmatmul.bf16.gmra.mxu0 %v1418
      %v1435 = vpop.f32.mrf.mxu0
      %v1436 = vadd.f32 0.0, %v1435
      %v1437 = vpop.f32.mrf.mxu0
      %v1438 = vadd.f32 0.0, %v1437
      %1439 = vmatmul.bf16.gmra.mxu0 %v1419
      %v1440 = vpop.f32.mrf.mxu0
      %v1441 = vadd.f32 0.0, %v1440
      %v1442 = vpop.f32.mrf.mxu0
      %v1443 = vadd.f32 0.0, %v1442
      %1444 = vmatmul.bf16.gmra.mxu0 %v1420
      %v1445 = vpop.f32.mrf.mxu0
      %v1446 = vadd.f32 0.0, %v1445
      %v1447 = vpop.f32.mrf.mxu0
      %v1448 = vadd.f32 0.0, %v1447
      %1449 = vdwg.mxu0
      %v1450 = vadd.f32 %v1390, %v1431
      %v1451 = vadd.f32 %v1392, %v1433
      %v1452 = vadd.f32 %v1395, %v1436
      %v1453 = vadd.f32 %v1397, %v1438
      %v1454 = vadd.f32 %v1400, %v1441
      %v1455 = vadd.f32 %v1402, %v1443
      %v1456 = vadd.f32 %v1405, %v1446
      %v1457 = vadd.f32 %v1407, %v1448
      %1458 = vmatpush.bf16.msra.mxu0 %v732
      %1459 = vmatpush.bf16.msra.mxu0 %v731
      %1460 = vmatpush.bf16.msra.mxu0 %v730
      %1461 = vmatpush.bf16.msra.mxu0 %v729
      %1462 = vmatpush.bf16.msra.mxu0 %v728
      %1463 = vmatpush.bf16.msra.mxu0 %v727
      %1464 = vmatpush.bf16.msra.mxu0 %v726
      %1465 = vmatpush.bf16.msra.mxu0 %v725
      %1466 = vmatmul.bf16.gmra.mxu0 %v787
      %v1467 = vpop.f32.mrf.mxu0
      %v1468 = vadd.f32 0.0, %v1467
      %v1469 = vpop.f32.mrf.mxu0
      %v1470 = vadd.f32 0.0, %v1469
      %1471 = vmatmul.bf16.gmra.mxu0 %v788
      %v1472 = vpop.f32.mrf.mxu0
      %v1473 = vadd.f32 0.0, %v1472
      %v1474 = vpop.f32.mrf.mxu0
      %v1475 = vadd.f32 0.0, %v1474
      %1476 = vmatmul.bf16.gmra.mxu0 %v789
      %v1477 = vpop.f32.mrf.mxu0
      %v1478 = vadd.f32 0.0, %v1477
      %v1479 = vpop.f32.mrf.mxu0
      %v1480 = vadd.f32 0.0, %v1479
      %1481 = vmatmul.bf16.gmra.mxu0 %v790
      %v1482 = vpop.f32.mrf.mxu0
      %v1483 = vadd.f32 0.0, %v1482
      %v1484 = vpop.f32.mrf.mxu0
      %v1485 = vadd.f32 0.0, %v1484
      %1486 = vdwg.mxu0
      %v1487 = vadd.f32 %v1450, %v1468
      %v1488 = vadd.f32 %v1451, %v1470
      %v1489 = vadd.f32 %v1452, %v1473
      %v1490 = vadd.f32 %v1453, %v1475
      %v1491 = vadd.f32 %v1454, %v1478
      %v1492 = vadd.f32 %v1455, %v1480
      %v1493 = vadd.f32 %v1456, %v1483
      %v1494 = vadd.f32 %v1457, %v1485
      %1495 = vmatpush.bf16.msra.mxu0 %v847
      %1496 = vmatpush.bf16.msra.mxu0 %v846
      %1497 = vmatpush.bf16.msra.mxu0 %v845
      %1498 = vmatpush.bf16.msra.mxu0 %v844
      %1499 = vmatpush.bf16.msra.mxu0 %v843
      %1500 = vmatpush.bf16.msra.mxu0 %v842
      %1501 = vmatpush.bf16.msra.mxu0 %v841
      %1502 = vmatpush.bf16.msra.mxu0 %v840
      %1503 = vmatmul.bf16.gmra.mxu0 %v901
      %v1504 = vpop.f32.mrf.mxu0
      %v1505 = vadd.f32 0.0, %v1504
      %v1506 = vpop.f32.mrf.mxu0
      %v1507 = vadd.f32 0.0, %v1506
      %1508 = vmatmul.bf16.gmra.mxu0 %v902
      %v1509 = vpop.f32.mrf.mxu0
      %v1510 = vadd.f32 0.0, %v1509
      %v1511 = vpop.f32.mrf.mxu0
      %v1512 = vadd.f32 0.0, %v1511
      %1513 = vmatmul.bf16.gmra.mxu0 %v903
      %v1514 = vpop.f32.mrf.mxu0
      %v1515 = vadd.f32 0.0, %v1514
      %v1516 = vpop.f32.mrf.mxu0
      %v1517 = vadd.f32 0.0, %v1516
      %1518 = vmatmul.bf16.gmra.mxu0 %v904
      %v1519 = vpop.f32.mrf.mxu0
      %v1520 = vadd.f32 0.0, %v1519
      %v1521 = vpop.f32.mrf.mxu0
      %v1522 = vadd.f32 0.0, %v1521
      %1523 = vdwg.mxu0
      %v1524 = vadd.f32 %v1487, %v1505
      %v1525 = vadd.f32 %v1488, %v1507
      %v1526 = vadd.f32 %v1489, %v1510
      %v1527 = vadd.f32 %v1490, %v1512
      %v1528 = vadd.f32 %v1491, %v1515
      %v1529 = vadd.f32 %v1492, %v1517
      %v1530 = vadd.f32 %v1493, %v1520
      %v1531 = vadd.f32 %v1494, %v1522
      %v1532 = vld [vmem:[%s778 + $0x1] sm:$0xff]
      %v1533 = vld [vmem:[%s778 + $0x11] sm:$0xff]
      %v1534 = vld [vmem:[%s778 + $0x21] sm:$0xff]
      %v1535 = vld [vmem:[%s778 + $0x31] sm:$0xff]
      %v1536 = vld [vmem:[%s778 + $0x41] sm:$0xff]
      %v1537 = vld [vmem:[%s778 + $0x51] sm:$0xff]
      %v1538 = vld [vmem:[%s778 + $0x61] sm:$0xff]
      %v1539 = vld [vmem:[%s778 + $0x71] sm:$0xff]
      %v1540 = vpack.c.bf16 %v1533, %v1532
      %v1541 = vpack.c.bf16 %v1535, %v1534
      %v1542 = vpack.c.bf16 %v1537, %v1536
      %v1543 = vpack.c.bf16 %v1539, %v1538
      %1544 = vmatpush.bf16.msra.mxu0 %v961
      %1545 = vmatpush.bf16.msra.mxu0 %v960
      %1546 = vmatpush.bf16.msra.mxu0 %v959
      %1547 = vmatpush.bf16.msra.mxu0 %v958
      %1548 = vmatpush.bf16.msra.mxu0 %v957
      %1549 = vmatpush.bf16.msra.mxu0 %v956
      %1550 = vmatpush.bf16.msra.mxu0 %v955
      %1551 = vmatpush.bf16.msra.mxu0 %v954
      %1552 = vmatmul.bf16.gmra.mxu0 %v1540
      %v1553 = vpop.f32.mrf.mxu0
      %v1554 = vadd.f32 0.0, %v1553
      %v1555 = vpop.f32.mrf.mxu0
      %v1556 = vadd.f32 0.0, %v1555
      %1557 = vmatmul.bf16.gmra.mxu0 %v1541
      %v1558 = vpop.f32.mrf.mxu0
      %v1559 = vadd.f32 0.0, %v1558
      %v1560 = vpop.f32.mrf.mxu0
      %v1561 = vadd.f32 0.0, %v1560
      %1562 = vmatmul.bf16.gmra.mxu0 %v1542
      %v1563 = vpop.f32.mrf.mxu0
      %v1564 = vadd.f32 0.0, %v1563
      %v1565 = vpop.f32.mrf.mxu0
      %v1566 = vadd.f32 0.0, %v1565
      %1567 = vmatmul.bf16.gmra.mxu0 %v1543
      %v1568 = vpop.f32.mrf.mxu0
      %v1569 = vadd.f32 0.0, %v1568
      %v1570 = vpop.f32.mrf.mxu0
      %v1571 = vadd.f32 0.0, %v1570
      %1572 = vdwg.mxu0
      %v1573 = vadd.f32 %v1524, %v1554
      %v1574 = vadd.f32 %v1525, %v1556
      %v1575 = vadd.f32 %v1526, %v1559
      %v1576 = vadd.f32 %v1527, %v1561
      %v1577 = vadd.f32 %v1528, %v1564
      %v1578 = vadd.f32 %v1529, %v1566
      %v1579 = vadd.f32 %v1530, %v1569
      %v1580 = vadd.f32 %v1531, %v1571
      %1581 = vmatpush.bf16.msra.mxu0 %v1076
      %1582 = vmatpush.bf16.msra.mxu0 %v1075
      %1583 = vmatpush.bf16.msra.mxu0 %v1074
      %1584 = vmatpush.bf16.msra.mxu0 %v1073
      %1585 = vmatpush.bf16.msra.mxu0 %v1072
      %1586 = vmatpush.bf16.msra.mxu0 %v1071
      %1587 = vmatpush.bf16.msra.mxu0 %v1070
      %1588 = vmatpush.bf16.msra.mxu0 %v1069
      %1589 = vmatmul.bf16.gmra.mxu0 %v1131
      %v1590 = vpop.f32.mrf.mxu0
      %v1591 = vadd.f32 0.0, %v1590
      %v1592 = vpop.f32.mrf.mxu0
      %v1593 = vadd.f32 0.0, %v1592
      %1594 = vmatmul.bf16.gmra.mxu0 %v1132
      %v1595 = vpop.f32.mrf.mxu0
      %v1596 = vadd.f32 0.0, %v1595
      %v1597 = vpop.f32.mrf.mxu0
      %v1598 = vadd.f32 0.0, %v1597
      %1599 = vmatmul.bf16.gmra.mxu0 %v1133
      %v1600 = vpop.f32.mrf.mxu0
      %v1601 = vadd.f32 0.0, %v1600
      %v1602 = vpop.f32.mrf.mxu0
      %v1603 = vadd.f32 0.0, %v1602
      %1604 = vmatmul.bf16.gmra.mxu0 %v1134
      %v1605 = vpop.f32.mrf.mxu0
      %v1606 = vadd.f32 0.0, %v1605
      %v1607 = vpop.f32.mrf.mxu0
      %v1608 = vadd.f32 0.0, %v1607
      %1609 = vdwg.mxu0
      %v1610 = vadd.f32 %v1573, %v1591
      %v1611 = vadd.f32 %v1574, %v1593
      %v1612 = vadd.f32 %v1575, %v1596
      %v1613 = vadd.f32 %v1576, %v1598
      %v1614 = vadd.f32 %v1577, %v1601
      %v1615 = vadd.f32 %v1578, %v1603
      %v1616 = vadd.f32 %v1579, %v1606
      %v1617 = vadd.f32 %v1580, %v1608
      %1618 = vmatpush.bf16.msra.mxu0 %v1191
      %1619 = vmatpush.bf16.msra.mxu0 %v1190
      %1620 = vmatpush.bf16.msra.mxu0 %v1189
      %1621 = vmatpush.bf16.msra.mxu0 %v1188
      %1622 = vmatpush.bf16.msra.mxu0 %v1187
      %1623 = vmatpush.bf16.msra.mxu0 %v1186
      %1624 = vmatpush.bf16.msra.mxu0 %v1185
      %1625 = vmatpush.bf16.msra.mxu0 %v1184
      %1626 = vmatmul.bf16.gmra.mxu0 %v1245
      %v1627 = vpop.f32.mrf.mxu0
      %v1628 = vadd.f32 0.0, %v1627
      %v1629 = vpop.f32.mrf.mxu0
      %v1630 = vadd.f32 0.0, %v1629
      %1631 = vmatmul.bf16.gmra.mxu0 %v1246
      %v1632 = vpop.f32.mrf.mxu0
      %v1633 = vadd.f32 0.0, %v1632
      %v1634 = vpop.f32.mrf.mxu0
      %v1635 = vadd.f32 0.0, %v1634
      %1636 = vmatmul.bf16.gmra.mxu0 %v1247
      %v1637 = vpop.f32.mrf.mxu0
      %v1638 = vadd.f32 0.0, %v1637
      %v1639 = vpop.f32.mrf.mxu0
      %v1640 = vadd.f32 0.0, %v1639
      %1641 = vmatmul.bf16.gmra.mxu0 %v1248
      %v1642 = vpop.f32.mrf.mxu0
      %v1643 = vadd.f32 0.0, %v1642
      %v1644 = vpop.f32.mrf.mxu0
      %v1645 = vadd.f32 0.0, %v1644
      %1646 = vdwg.mxu0
      %v1647 = vadd.f32 %v1610, %v1628
      %v1648 = vadd.f32 %v1611, %v1630
      %v1649 = vadd.f32 %v1612, %v1633
      %v1650 = vadd.f32 %v1613, %v1635
      %v1651 = vadd.f32 %v1614, %v1638
      %v1652 = vadd.f32 %v1615, %v1640
      %v1653 = vadd.f32 %v1616, %v1643
      %v1654 = vadd.f32 %v1617, %v1645
      %v1655 = vld [vmem:[%s1122 + $0x1] sm:$0xff]
      %v1656 = vld [vmem:[%s1122 + $0x11] sm:$0xff]
      %v1657 = vld [vmem:[%s1122 + $0x21] sm:$0xff]
      %v1658 = vld [vmem:[%s1122 + $0x31] sm:$0xff]
      %v1659 = vld [vmem:[%s1122 + $0x41] sm:$0xff]
      %v1660 = vld [vmem:[%s1122 + $0x51] sm:$0xff]
      %v1661 = vld [vmem:[%s1122 + $0x61] sm:$0xff]
      %v1662 = vld [vmem:[%s1122 + $0x71] sm:$0xff]
      %v1663 = vpack.c.bf16 %v1656, %v1655
      %v1664 = vpack.c.bf16 %v1658, %v1657
      %v1665 = vpack.c.bf16 %v1660, %v1659
      %v1666 = vpack.c.bf16 %v1662, %v1661
      %1667 = vmatpush.bf16.msra.mxu0 %v1305
      %1668 = vmatpush.bf16.msra.mxu0 %v1304
      %1669 = vmatpush.bf16.msra.mxu0 %v1303
      %1670 = vmatpush.bf16.msra.mxu0 %v1302
      %1671 = vmatpush.bf16.msra.mxu0 %v1301
      %1672 = vmatpush.bf16.msra.mxu0 %v1300
      %1673 = vmatpush.bf16.msra.mxu0 %v1299
      %1674 = vmatpush.bf16.msra.mxu0 %v1298
      %1675 = vmatmul.bf16.gmra.mxu0 %v1663
      %v1676 = vpop.f32.mrf.mxu0
      %v1677 = vadd.f32 0.0, %v1676
      %v1678 = vpop.f32.mrf.mxu0
      %v1679 = vadd.f32 0.0, %v1678
      %1680 = vmatmul.bf16.gmra.mxu0 %v1664
      %v1681 = vpop.f32.mrf.mxu0
      %v1682 = vadd.f32 0.0, %v1681
      %v1683 = vpop.f32.mrf.mxu0
      %v1684 = vadd.f32 0.0, %v1683
      %1685 = vmatmul.bf16.gmra.mxu0 %v1665
      %v1686 = vpop.f32.mrf.mxu0
      %v1687 = vadd.f32 0.0, %v1686
      %v1688 = vpop.f32.mrf.mxu0
      %v1689 = vadd.f32 0.0, %v1688
      %1690 = vmatmul.bf16.gmra.mxu0 %v1666
      %v1691 = vpop.f32.mrf.mxu0
      %v1692 = vadd.f32 0.0, %v1691
      %v1693 = vpop.f32.mrf.mxu0
      %v1694 = vadd.f32 0.0, %v1693
      %1695 = vdwg.mxu0
      %v1696 = vadd.f32 %v1647, %v1677
      %v1697 = vadd.f32 %v1648, %v1679
      %v1698 = vadd.f32 %v1649, %v1682
      %v1699 = vadd.f32 %v1650, %v1684
      %v1700 = vadd.f32 %v1651, %v1687
      %v1701 = vadd.f32 %v1652, %v1689
      %v1702 = vadd.f32 %v1653, %v1692
      %v1703 = vadd.f32 %v1654, %v1694
      %v1704 = vmax.f32 %v1343, %v1696
      %v1705 = vmax.f32 %v1344, %v1697
      %v1706 = vmax.f32 %v1345, %v1698
      %v1707 = vmax.f32 %v1346, %v1699
      %v1708 = vmax.f32 %v1347, %v1700
      %v1709 = vmax.f32 %v1348, %v1701
      %v1710 = vmax.f32 %v1349, %v1702
      %v1711 = vmax.f32 %v1350, %v1703
      %1712 = vmatpush.bf16.msra.mxu0 %v434
      %1713 = vmatpush.bf16.msra.mxu0 %v433
      %1714 = vmatpush.bf16.msra.mxu0 %v432
      %1715 = vmatpush.bf16.msra.mxu0 %v431
      %1716 = vmatpush.bf16.msra.mxu0 %v430
      %1717 = vmatpush.bf16.msra.mxu0 %v429
      %1718 = vmatpush.bf16.msra.mxu0 %v428
      %1719 = vmatpush.bf16.msra.mxu0 %v427
      %1720 = vmatmul.bf16.gmra.mxu0 %v787
      %v1721 = vpop.f32.mrf.mxu0
      %v1722 = vadd.f32 0.0, %v1721
      %v1723 = vpop.f32.mrf.mxu0
      %v1724 = vadd.f32 0.0, %v1723
      %1725 = vmatmul.bf16.gmra.mxu0 %v788
      %v1726 = vpop.f32.mrf.mxu0
      %v1727 = vadd.f32 0.0, %v1726
      %v1728 = vpop.f32.mrf.mxu0
      %v1729 = vadd.f32 0.0, %v1728
      %1730 = vmatmul.bf16.gmra.mxu0 %v789
      %v1731 = vpop.f32.mrf.mxu0
      %v1732 = vadd.f32 0.0, %v1731
      %v1733 = vpop.f32.mrf.mxu0
      %v1734 = vadd.f32 0.0, %v1733
      %1735 = vmatmul.bf16.gmra.mxu0 %v790
      %v1736 = vpop.f32.mrf.mxu0
      %v1737 = vadd.f32 0.0, %v1736
      %v1738 = vpop.f32.mrf.mxu0
      %v1739 = vadd.f32 0.0, %v1738
      %1740 = vdwg.mxu0
      %1741 = vmatpush.bf16.msra.mxu0 %v511
      %1742 = vmatpush.bf16.msra.mxu0 %v510
      %1743 = vmatpush.bf16.msra.mxu0 %v509
      %1744 = vmatpush.bf16.msra.mxu0 %v508
      %1745 = vmatpush.bf16.msra.mxu0 %v507
      %1746 = vmatpush.bf16.msra.mxu0 %v506
      %1747 = vmatpush.bf16.msra.mxu0 %v505
      %1748 = vmatpush.bf16.msra.mxu0 %v504
      %1749 = vmatmul.bf16.gmra.mxu0 %v672
      %v1750 = vpop.f32.mrf.mxu0
      %v1751 = vadd.f32 %v1722, %v1750
      %v1752 = vpop.f32.mrf.mxu0
      %v1753 = vadd.f32 %v1724, %v1752
      %1754 = vmatmul.bf16.gmra.mxu0 %v673
      %v1755 = vpop.f32.mrf.mxu0
      %v1756 = vadd.f32 %v1727, %v1755
      %v1757 = vpop.f32.mrf.mxu0
      %v1758 = vadd.f32 %v1729, %v1757
      %1759 = vmatmul.bf16.gmra.mxu0 %v674
      %v1760 = vpop.f32.mrf.mxu0
      %v1761 = vadd.f32 %v1732, %v1760
      %v1762 = vpop.f32.mrf.mxu0
      %v1763 = vadd.f32 %v1734, %v1762
      %1764 = vmatmul.bf16.gmra.mxu0 %v675
      %v1765 = vpop.f32.mrf.mxu0
      %v1766 = vadd.f32 %v1737, %v1765
      %v1767 = vpop.f32.mrf.mxu0
      %v1768 = vadd.f32 %v1739, %v1767
      %1769 = vdwg.mxu0
      %1770 = vmatpush.bf16.msra.mxu0 %v617
      %1771 = vmatpush.bf16.msra.mxu0 %v616
      %1772 = vmatpush.bf16.msra.mxu0 %v615
      %1773 = vmatpush.bf16.msra.mxu0 %v614
      %1774 = vmatpush.bf16.msra.mxu0 %v613
      %1775 = vmatpush.bf16.msra.mxu0 %v612
      %1776 = vmatpush.bf16.msra.mxu0 %v611
      %1777 = vmatpush.bf16.msra.mxu0 %v610
      %1778 = vmatmul.bf16.gmra.mxu0 %v901
      %v1779 = vpop.f32.mrf.mxu0
      %v1780 = vadd.f32 0.0, %v1779
      %v1781 = vpop.f32.mrf.mxu0
      %v1782 = vadd.f32 0.0, %v1781
      %1783 = vmatmul.bf16.gmra.mxu0 %v902
      %v1784 = vpop.f32.mrf.mxu0
      %v1785 = vadd.f32 0.0, %v1784
      %v1786 = vpop.f32.mrf.mxu0
      %v1787 = vadd.f32 0.0, %v1786
      %1788 = vmatmul.bf16.gmra.mxu0 %v903
      %v1789 = vpop.f32.mrf.mxu0
      %v1790 = vadd.f32 0.0, %v1789
      %v1791 = vpop.f32.mrf.mxu0
      %v1792 = vadd.f32 0.0, %v1791
      %1793 = vmatmul.bf16.gmra.mxu0 %v904
      %v1794 = vpop.f32.mrf.mxu0
      %v1795 = vadd.f32 0.0, %v1794
      %v1796 = vpop.f32.mrf.mxu0
      %v1797 = vadd.f32 0.0, %v1796
      %1798 = vdwg.mxu0
      %v1799 = vadd.f32 %v1751, %v1780
      %v1800 = vadd.f32 %v1753, %v1782
      %v1801 = vadd.f32 %v1756, %v1785
      %v1802 = vadd.f32 %v1758, %v1787
      %v1803 = vadd.f32 %v1761, %v1790
      %v1804 = vadd.f32 %v1763, %v1792
      %v1805 = vadd.f32 %v1766, %v1795
      %v1806 = vadd.f32 %v1768, %v1797
      %1807 = vmatpush.bf16.msra.mxu0 %v732
      %1808 = vmatpush.bf16.msra.mxu0 %v731
      %1809 = vmatpush.bf16.msra.mxu0 %v730
      %1810 = vmatpush.bf16.msra.mxu0 %v729
      %1811 = vmatpush.bf16.msra.mxu0 %v728
      %1812 = vmatpush.bf16.msra.mxu0 %v727
      %1813 = vmatpush.bf16.msra.mxu0 %v726
      %1814 = vmatpush.bf16.msra.mxu0 %v725
      %1815 = vmatmul.bf16.gmra.mxu0 %v1016
      %v1816 = vpop.f32.mrf.mxu0
      %v1817 = vadd.f32 0.0, %v1816
      %v1818 = vpop.f32.mrf.mxu0
      %v1819 = vadd.f32 0.0, %v1818
      %1820 = vmatmul.bf16.gmra.mxu0 %v1017
      %v1821 = vpop.f32.mrf.mxu0
      %v1822 = vadd.f32 0.0, %v1821
      %v1823 = vpop.f32.mrf.mxu0
      %v1824 = vadd.f32 0.0, %v1823
      %1825 = vmatmul.bf16.gmra.mxu0 %v1018
      %v1826 = vpop.f32.mrf.mxu0
      %v1827 = vadd.f32 0.0, %v1826
      %v1828 = vpop.f32.mrf.mxu0
      %v1829 = vadd.f32 0.0, %v1828
      %1830 = vmatmul.bf16.gmra.mxu0 %v1019
      %v1831 = vpop.f32.mrf.mxu0
      %v1832 = vadd.f32 0.0, %v1831
      %v1833 = vpop.f32.mrf.mxu0
      %v1834 = vadd.f32 0.0, %v1833
      %1835 = vdwg.mxu0
      %v1836 = vadd.f32 %v1799, %v1817
      %v1837 = vadd.f32 %v1800, %v1819
      %v1838 = vadd.f32 %v1801, %v1822
      %v1839 = vadd.f32 %v1802, %v1824
      %v1840 = vadd.f32 %v1803, %v1827
      %v1841 = vadd.f32 %v1804, %v1829
      %v1842 = vadd.f32 %v1805, %v1832
      %v1843 = vadd.f32 %v1806, %v1834
      %1844 = vmatpush.bf16.msra.mxu0 %v847
      %1845 = vmatpush.bf16.msra.mxu0 %v846
      %1846 = vmatpush.bf16.msra.mxu0 %v845
      %1847 = vmatpush.bf16.msra.mxu0 %v844
      %1848 = vmatpush.bf16.msra.mxu0 %v843
      %1849 = vmatpush.bf16.msra.mxu0 %v842
      %1850 = vmatpush.bf16.msra.mxu0 %v841
      %1851 = vmatpush.bf16.msra.mxu0 %v840
      %1852 = vmatmul.bf16.gmra.mxu0 %v1131
      %v1853 = vpop.f32.mrf.mxu0
      %v1854 = vadd.f32 0.0, %v1853
      %v1855 = vpop.f32.mrf.mxu0
      %v1856 = vadd.f32 0.0, %v1855
      %1857 = vmatmul.bf16.gmra.mxu0 %v1132
      %v1858 = vpop.f32.mrf.mxu0
      %v1859 = vadd.f32 0.0, %v1858
      %v1860 = vpop.f32.mrf.mxu0
      %v1861 = vadd.f32 0.0, %v1860
      %1862 = vmatmul.bf16.gmra.mxu0 %v1133
      %v1863 = vpop.f32.mrf.mxu0
      %v1864 = vadd.f32 0.0, %v1863
      %v1865 = vpop.f32.mrf.mxu0
      %v1866 = vadd.f32 0.0, %v1865
      %1867 = vmatmul.bf16.gmra.mxu0 %v1134
      %v1868 = vpop.f32.mrf.mxu0
      %v1869 = vadd.f32 0.0, %v1868
      %v1870 = vpop.f32.mrf.mxu0
      %v1871 = vadd.f32 0.0, %v1870
      %1872 = vdwg.mxu0
      %v1873 = vadd.f32 %v1836, %v1854
      %v1874 = vadd.f32 %v1837, %v1856
      %v1875 = vadd.f32 %v1838, %v1859
      %v1876 = vadd.f32 %v1839, %v1861
      %v1877 = vadd.f32 %v1840, %v1864
      %v1878 = vadd.f32 %v1841, %v1866
      %v1879 = vadd.f32 %v1842, %v1869
      %v1880 = vadd.f32 %v1843, %v1871
      %1881 = vmatpush.bf16.msra.mxu0 %v961
      %1882 = vmatpush.bf16.msra.mxu0 %v960
      %1883 = vmatpush.bf16.msra.mxu0 %v959
      %1884 = vmatpush.bf16.msra.mxu0 %v958
      %1885 = vmatpush.bf16.msra.mxu0 %v957
      %1886 = vmatpush.bf16.msra.mxu0 %v956
      %1887 = vmatpush.bf16.msra.mxu0 %v955
      %1888 = vmatpush.bf16.msra.mxu0 %v954
      %1889 = vmatmul.bf16.gmra.mxu0 %v1245
      %v1890 = vpop.f32.mrf.mxu0
      %v1891 = vadd.f32 0.0, %v1890
      %v1892 = vpop.f32.mrf.mxu0
      %v1893 = vadd.f32 0.0, %v1892
      %1894 = vmatmul.bf16.gmra.mxu0 %v1246
      %v1895 = vpop.f32.mrf.mxu0
      %v1896 = vadd.f32 0.0, %v1895
      %v1897 = vpop.f32.mrf.mxu0
      %v1898 = vadd.f32 0.0, %v1897
      %1899 = vmatmul.bf16.gmra.mxu0 %v1247
      %v1900 = vpop.f32.mrf.mxu0
      %v1901 = vadd.f32 0.0, %v1900
      %v1902 = vpop.f32.mrf.mxu0
      %v1903 = vadd.f32 0.0, %v1902
      %1904 = vmatmul.bf16.gmra.mxu0 %v1248
      %v1905 = vpop.f32.mrf.mxu0
      %v1906 = vadd.f32 0.0, %v1905
      %v1907 = vpop.f32.mrf.mxu0
      %v1908 = vadd.f32 0.0, %v1907
      %1909 = vdwg.mxu0
      %v1910 = vadd.f32 %v1873, %v1891
      %v1911 = vadd.f32 %v1874, %v1893
      %v1912 = vadd.f32 %v1875, %v1896
      %v1913 = vadd.f32 %v1876, %v1898
      %v1914 = vadd.f32 %v1877, %v1901
      %v1915 = vadd.f32 %v1878, %v1903
      %v1916 = vadd.f32 %v1879, %v1906
      %v1917 = vadd.f32 %v1880, %v1908
      %s1918 = scalar_lea.vmem %s331, 304
      %v1919 = vld [vmem:[%s1918] sm:$0xff]
      %v1920 = vld [vmem:[%s1918 + $0x10] sm:$0xff]
      %v1921 = vld [vmem:[%s1918 + $0x20] sm:$0xff]
      %v1922 = vld [vmem:[%s1918 + $0x30] sm:$0xff]
      %v1923 = vld [vmem:[%s1918 + $0x40] sm:$0xff]
      %v1924 = vld [vmem:[%s1918 + $0x50] sm:$0xff]
      %v1925 = vld [vmem:[%s1918 + $0x60] sm:$0xff]
      %v1926 = vld [vmem:[%s1918 + $0x70] sm:$0xff]
      %v1927 = vpack.c.bf16 %v1920, %v1919
      %v1928 = vpack.c.bf16 %v1922, %v1921
      %v1929 = vpack.c.bf16 %v1924, %v1923
      %v1930 = vpack.c.bf16 %v1926, %v1925
      %1931 = vmatpush.bf16.msra.mxu0 %v1076
      %1932 = vmatpush.bf16.msra.mxu0 %v1075
      %1933 = vmatpush.bf16.msra.mxu0 %v1074
      %1934 = vmatpush.bf16.msra.mxu0 %v1073
      %1935 = vmatpush.bf16.msra.mxu0 %v1072
      %1936 = vmatpush.bf16.msra.mxu0 %v1071
      %1937 = vmatpush.bf16.msra.mxu0 %v1070
      %1938 = vmatpush.bf16.msra.mxu0 %v1069
      %1939 = vmatmul.bf16.gmra.mxu0 %v1927
      %v1940 = vpop.f32.mrf.mxu0
      %v1941 = vadd.f32 0.0, %v1940
      %v1942 = vpop.f32.mrf.mxu0
      %v1943 = vadd.f32 0.0, %v1942
      %1944 = vmatmul.bf16.gmra.mxu0 %v1928
      %v1945 = vpop.f32.mrf.mxu0
      %v1946 = vadd.f32 0.0, %v1945
      %v1947 = vpop.f32.mrf.mxu0
      %v1948 = vadd.f32 0.0, %v1947
      %1949 = vmatmul.bf16.gmra.mxu0 %v1929
      %v1950 = vpop.f32.mrf.mxu0
      %v1951 = vadd.f32 0.0, %v1950
      %v1952 = vpop.f32.mrf.mxu0
      %v1953 = vadd.f32 0.0, %v1952
      %1954 = vmatmul.bf16.gmra.mxu0 %v1930
      %v1955 = vpop.f32.mrf.mxu0
      %v1956 = vadd.f32 0.0, %v1955
      %v1957 = vpop.f32.mrf.mxu0
      %v1958 = vadd.f32 0.0, %v1957
      %1959 = vdwg.mxu0
      %v1960 = vadd.f32 %v1910, %v1941
      %v1961 = vadd.f32 %v1911, %v1943
      %v1962 = vadd.f32 %v1912, %v1946
      %v1963 = vadd.f32 %v1913, %v1948
      %v1964 = vadd.f32 %v1914, %v1951
      %v1965 = vadd.f32 %v1915, %v1953
      %v1966 = vadd.f32 %v1916, %v1956
      %v1967 = vadd.f32 %v1917, %v1958
      %s1968 = scalar_lea.vmem %s331, 448
      %v1969 = vld [vmem:[%s1968] sm:$0xff]
      %v1970 = vld [vmem:[%s1968 + $0x10] sm:$0xff]
      %v1971 = vld [vmem:[%s1968 + $0x20] sm:$0xff]
      %v1972 = vld [vmem:[%s1968 + $0x30] sm:$0xff]
      %v1973 = vld [vmem:[%s1968 + $0x40] sm:$0xff]
      %v1974 = vld [vmem:[%s1968 + $0x50] sm:$0xff]
      %v1975 = vld [vmem:[%s1968 + $0x60] sm:$0xff]
      %v1976 = vld [vmem:[%s1968 + $0x70] sm:$0xff]
      %v1977 = vpack.c.bf16 %v1970, %v1969
      %v1978 = vpack.c.bf16 %v1972, %v1971
      %v1979 = vpack.c.bf16 %v1974, %v1973
      %v1980 = vpack.c.bf16 %v1976, %v1975
      %1981 = vmatpush.bf16.msra.mxu0 %v1191
      %1982 = vmatpush.bf16.msra.mxu0 %v1190
      %1983 = vmatpush.bf16.msra.mxu0 %v1189
      %1984 = vmatpush.bf16.msra.mxu0 %v1188
      %1985 = vmatpush.bf16.msra.mxu0 %v1187
      %1986 = vmatpush.bf16.msra.mxu0 %v1186
      %1987 = vmatpush.bf16.msra.mxu0 %v1185
      %1988 = vmatpush.bf16.msra.mxu0 %v1184
      %1989 = vmatmul.bf16.gmra.mxu0 %v1977
      %v1990 = vpop.f32.mrf.mxu0
      %v1991 = vadd.f32 0.0, %v1990
      %v1992 = vpop.f32.mrf.mxu0
      %v1993 = vadd.f32 0.0, %v1992
      %1994 = vmatmul.bf16.gmra.mxu0 %v1978
      %v1995 = vpop.f32.mrf.mxu0
      %v1996 = vadd.f32 0.0, %v1995
      %v1997 = vpop.f32.mrf.mxu0
      %v1998 = vadd.f32 0.0, %v1997
      %1999 = vmatmul.bf16.gmra.mxu0 %v1979
      %v2000 = vpop.f32.mrf.mxu0
      %v2001 = vadd.f32 0.0, %v2000
      %v2002 = vpop.f32.mrf.mxu0
      %v2003 = vadd.f32 0.0, %v2002
      %2004 = vmatmul.bf16.gmra.mxu0 %v1980
      %v2005 = vpop.f32.mrf.mxu0
      %v2006 = vadd.f32 0.0, %v2005
      %v2007 = vpop.f32.mrf.mxu0
      %v2008 = vadd.f32 0.0, %v2007
      %2009 = vdwg.mxu0
      %v2010 = vadd.f32 %v1960, %v1991
      %v2011 = vadd.f32 %v1961, %v1993
      %v2012 = vadd.f32 %v1962, %v1996
      %v2013 = vadd.f32 %v1963, %v1998
      %v2014 = vadd.f32 %v1964, %v2001
      %v2015 = vadd.f32 %v1965, %v2003
      %v2016 = vadd.f32 %v1966, %v2006
      %v2017 = vadd.f32 %v1967, %v2008
      %v2018 = vld [vmem:[%s1918 + $0x1] sm:$0xff]
      %v2019 = vld [vmem:[%s1918 + $0x11] sm:$0xff]
      %v2020 = vld [vmem:[%s1918 + $0x21] sm:$0xff]
      %v2021 = vld [vmem:[%s1918 + $0x31] sm:$0xff]
      %v2022 = vld [vmem:[%s1918 + $0x41] sm:$0xff]
      %v2023 = vld [vmem:[%s1918 + $0x51] sm:$0xff]
      %v2024 = vld [vmem:[%s1918 + $0x61] sm:$0xff]
      %v2025 = vld [vmem:[%s1918 + $0x71] sm:$0xff]
      %v2026 = vpack.c.bf16 %v2019, %v2018
      %v2027 = vpack.c.bf16 %v2021, %v2020
      %v2028 = vpack.c.bf16 %v2023, %v2022
      %v2029 = vpack.c.bf16 %v2025, %v2024
      %2030 = vmatpush.bf16.msra.mxu0 %v1305
      %2031 = vmatpush.bf16.msra.mxu0 %v1304
      %2032 = vmatpush.bf16.msra.mxu0 %v1303
      %2033 = vmatpush.bf16.msra.mxu0 %v1302
      %2034 = vmatpush.bf16.msra.mxu0 %v1301
      %2035 = vmatpush.bf16.msra.mxu0 %v1300
      %2036 = vmatpush.bf16.msra.mxu0 %v1299
      %2037 = vmatpush.bf16.msra.mxu0 %v1298
      %2038 = vmatmul.bf16.gmra.mxu0 %v2026
      %v2039 = vpop.f32.mrf.mxu0
      %v2040 = vadd.f32 0.0, %v2039
      %v2041 = vpop.f32.mrf.mxu0
      %v2042 = vadd.f32 0.0, %v2041
      %2043 = vmatmul.bf16.gmra.mxu0 %v2027
      %v2044 = vpop.f32.mrf.mxu0
      %v2045 = vadd.f32 0.0, %v2044
      %v2046 = vpop.f32.mrf.mxu0
      %v2047 = vadd.f32 0.0, %v2046
      %2048 = vmatmul.bf16.gmra.mxu0 %v2028
      %v2049 = vpop.f32.mrf.mxu0
      %v2050 = vadd.f32 0.0, %v2049
      %v2051 = vpop.f32.mrf.mxu0
      %v2052 = vadd.f32 0.0, %v2051
      %2053 = vmatmul.bf16.gmra.mxu0 %v2029
      %v2054 = vpop.f32.mrf.mxu0
      %v2055 = vadd.f32 0.0, %v2054
      %v2056 = vpop.f32.mrf.mxu0
      %v2057 = vadd.f32 0.0, %v2056
      %2058 = vdwg.mxu0
      %v2059 = vadd.f32 %v2010, %v2040
      %v2060 = vadd.f32 %v2011, %v2042
      %v2061 = vadd.f32 %v2012, %v2045
      %v2062 = vadd.f32 %v2013, %v2047
      %v2063 = vadd.f32 %v2014, %v2050
      %v2064 = vadd.f32 %v2015, %v2052
      %v2065 = vadd.f32 %v2016, %v2055
      %v2066 = vadd.f32 %v2017, %v2057
      %v2067 = vmax.f32 %v1704, %v2059
      %v2068 = vmax.f32 %v1705, %v2060
      %v2069 = vmax.f32 %v1706, %v2061
      %v2070 = vmax.f32 %v1707, %v2062
      %v2071 = vmax.f32 %v1708, %v2063
      %v2072 = vmax.f32 %v1709, %v2064
      %v2073 = vmax.f32 %v1710, %v2065
      %v2074 = vmax.f32 %v1711, %v2066
      %2075 = vmatpush.bf16.msra.mxu0 %v434
      %2076 = vmatpush.bf16.msra.mxu0 %v433
      %2077 = vmatpush.bf16.msra.mxu0 %v432
      %2078 = vmatpush.bf16.msra.mxu0 %v431
      %2079 = vmatpush.bf16.msra.mxu0 %v430
      %2080 = vmatpush.bf16.msra.mxu0 %v429
      %2081 = vmatpush.bf16.msra.mxu0 %v428
      %2082 = vmatpush.bf16.msra.mxu0 %v427
      %2083 = vmatmul.bf16.gmra.mxu0 %v901
      %v2084 = vpop.f32.mrf.mxu0
      %v2085 = vadd.f32 0.0, %v2084
      %v2086 = vpop.f32.mrf.mxu0
      %v2087 = vadd.f32 0.0, %v2086
      %2088 = vmatmul.bf16.gmra.mxu0 %v902
      %v2089 = vpop.f32.mrf.mxu0
      %v2090 = vadd.f32 0.0, %v2089
      %v2091 = vpop.f32.mrf.mxu0
      %v2092 = vadd.f32 0.0, %v2091
      %2093 = vmatmul.bf16.gmra.mxu0 %v903
      %v2094 = vpop.f32.mrf.mxu0
      %v2095 = vadd.f32 0.0, %v2094
      %v2096 = vpop.f32.mrf.mxu0
      %v2097 = vadd.f32 0.0, %v2096
      %2098 = vmatmul.bf16.gmra.mxu0 %v904
      %v2099 = vpop.f32.mrf.mxu0
      %v2100 = vadd.f32 0.0, %v2099
      %v2101 = vpop.f32.mrf.mxu0
      %v2102 = vadd.f32 0.0, %v2101
      %2103 = vdwg.mxu0
      %2104 = vmatpush.bf16.msra.mxu0 %v511
      %2105 = vmatpush.bf16.msra.mxu0 %v510
      %2106 = vmatpush.bf16.msra.mxu0 %v509
      %2107 = vmatpush.bf16.msra.mxu0 %v508
      %2108 = vmatpush.bf16.msra.mxu0 %v507
      %2109 = vmatpush.bf16.msra.mxu0 %v506
      %2110 = vmatpush.bf16.msra.mxu0 %v505
      %2111 = vmatpush.bf16.msra.mxu0 %v504
      %2112 = vmatmul.bf16.gmra.mxu0 %v787
      %v2113 = vpop.f32.mrf.mxu0
      %v2114 = vadd.f32 %v2085, %v2113
      %v2115 = vpop.f32.mrf.mxu0
      %v2116 = vadd.f32 %v2087, %v2115
      %2117 = vmatmul.bf16.gmra.mxu0 %v788
      %v2118 = vpop.f32.mrf.mxu0
      %v2119 = vadd.f32 %v2090, %v2118
      %v2120 = vpop.f32.mrf.mxu0
      %v2121 = vadd.f32 %v2092, %v2120
      %2122 = vmatmul.bf16.gmra.mxu0 %v789
      %v2123 = vpop.f32.mrf.mxu0
      %v2124 = vadd.f32 %v2095, %v2123
      %v2125 = vpop.f32.mrf.mxu0
      %v2126 = vadd.f32 %v2097, %v2125
      %2127 = vmatmul.bf16.gmra.mxu0 %v790
      %v2128 = vpop.f32.mrf.mxu0
      %v2129 = vadd.f32 %v2100, %v2128
      %v2130 = vpop.f32.mrf.mxu0
      %v2131 = vadd.f32 %v2102, %v2130
      %2132 = vdwg.mxu0
      %2133 = vmatpush.bf16.msra.mxu0 %v617
      %2134 = vmatpush.bf16.msra.mxu0 %v616
      %2135 = vmatpush.bf16.msra.mxu0 %v615
      %2136 = vmatpush.bf16.msra.mxu0 %v614
      %2137 = vmatpush.bf16.msra.mxu0 %v613
      %2138 = vmatpush.bf16.msra.mxu0 %v612
      %2139 = vmatpush.bf16.msra.mxu0 %v611
      %2140 = vmatpush.bf16.msra.mxu0 %v610
      %2141 = vmatmul.bf16.gmra.mxu0 %v1540
      %v2142 = vpop.f32.mrf.mxu0
      %v2143 = vadd.f32 0.0, %v2142
      %v2144 = vpop.f32.mrf.mxu0
      %v2145 = vadd.f32 0.0, %v2144
      %2146 = vmatmul.bf16.gmra.mxu0 %v1541
      %v2147 = vpop.f32.mrf.mxu0
      %v2148 = vadd.f32 0.0, %v2147
      %v2149 = vpop.f32.mrf.mxu0
      %v2150 = vadd.f32 0.0, %v2149
      %2151 = vmatmul.bf16.gmra.mxu0 %v1542
      %v2152 = vpop.f32.mrf.mxu0
      %v2153 = vadd.f32 0.0, %v2152
      %v2154 = vpop.f32.mrf.mxu0
      %v2155 = vadd.f32 0.0, %v2154
      %2156 = vmatmul.bf16.gmra.mxu0 %v1543
      %v2157 = vpop.f32.mrf.mxu0
      %v2158 = vadd.f32 0.0, %v2157
      %v2159 = vpop.f32.mrf.mxu0
      %v2160 = vadd.f32 0.0, %v2159
      %2161 = vdwg.mxu0
      %v2162 = vadd.f32 %v2114, %v2143
      %v2163 = vadd.f32 %v2116, %v2145
      %v2164 = vadd.f32 %v2119, %v2148
      %v2165 = vadd.f32 %v2121, %v2150
      %v2166 = vadd.f32 %v2124, %v2153
      %v2167 = vadd.f32 %v2126, %v2155
      %v2168 = vadd.f32 %v2129, %v2158
      %v2169 = vadd.f32 %v2131, %v2160
      %2170 = vmatpush.bf16.msra.mxu0 %v732
      %2171 = vmatpush.bf16.msra.mxu0 %v731
      %2172 = vmatpush.bf16.msra.mxu0 %v730
      %2173 = vmatpush.bf16.msra.mxu0 %v729
      %2174 = vmatpush.bf16.msra.mxu0 %v728
      %2175 = vmatpush.bf16.msra.mxu0 %v727
      %2176 = vmatpush.bf16.msra.mxu0 %v726
      %2177 = vmatpush.bf16.msra.mxu0 %v725
      %2178 = vmatmul.bf16.gmra.mxu0 %v1131
      %v2179 = vpop.f32.mrf.mxu0
      %v2180 = vadd.f32 0.0, %v2179
      %v2181 = vpop.f32.mrf.mxu0
      %v2182 = vadd.f32 0.0, %v2181
      %2183 = vmatmul.bf16.gmra.mxu0 %v1132
      %v2184 = vpop.f32.mrf.mxu0
      %v2185 = vadd.f32 0.0, %v2184
      %v2186 = vpop.f32.mrf.mxu0
      %v2187 = vadd.f32 0.0, %v2186
      %2188 = vmatmul.bf16.gmra.mxu0 %v1133
      %v2189 = vpop.f32.mrf.mxu0
      %v2190 = vadd.f32 0.0, %v2189
      %v2191 = vpop.f32.mrf.mxu0
      %v2192 = vadd.f32 0.0, %v2191
      %2193 = vmatmul.bf16.gmra.mxu0 %v1134
      %v2194 = vpop.f32.mrf.mxu0
      %v2195 = vadd.f32 0.0, %v2194
      %v2196 = vpop.f32.mrf.mxu0
      %v2197 = vadd.f32 0.0, %v2196
      %2198 = vdwg.mxu0
      %v2199 = vadd.f32 %v2162, %v2180
      %v2200 = vadd.f32 %v2163, %v2182
      %v2201 = vadd.f32 %v2164, %v2185
      %v2202 = vadd.f32 %v2165, %v2187
      %v2203 = vadd.f32 %v2166, %v2190
      %v2204 = vadd.f32 %v2167, %v2192
      %v2205 = vadd.f32 %v2168, %v2195
      %v2206 = vadd.f32 %v2169, %v2197
      %2207 = vmatpush.bf16.msra.mxu0 %v847
      %2208 = vmatpush.bf16.msra.mxu0 %v846
      %2209 = vmatpush.bf16.msra.mxu0 %v845
      %2210 = vmatpush.bf16.msra.mxu0 %v844
      %2211 = vmatpush.bf16.msra.mxu0 %v843
      %2212 = vmatpush.bf16.msra.mxu0 %v842
      %2213 = vmatpush.bf16.msra.mxu0 %v841
      %2214 = vmatpush.bf16.msra.mxu0 %v840
      %2215 = vmatmul.bf16.gmra.mxu0 %v1245
      %v2216 = vpop.f32.mrf.mxu0
      %v2217 = vadd.f32 0.0, %v2216
      %v2218 = vpop.f32.mrf.mxu0
      %v2219 = vadd.f32 0.0, %v2218
      %2220 = vmatmul.bf16.gmra.mxu0 %v1246
      %v2221 = vpop.f32.mrf.mxu0
      %v2222 = vadd.f32 0.0, %v2221
      %v2223 = vpop.f32.mrf.mxu0
      %v2224 = vadd.f32 0.0, %v2223
      %2225 = vmatmul.bf16.gmra.mxu0 %v1247
      %v2226 = vpop.f32.mrf.mxu0
      %v2227 = vadd.f32 0.0, %v2226
      %v2228 = vpop.f32.mrf.mxu0
      %v2229 = vadd.f32 0.0, %v2228
      %2230 = vmatmul.bf16.gmra.mxu0 %v1248
      %v2231 = vpop.f32.mrf.mxu0
      %v2232 = vadd.f32 0.0, %v2231
      %v2233 = vpop.f32.mrf.mxu0
      %v2234 = vadd.f32 0.0, %v2233
      %2235 = vdwg.mxu0
      %v2236 = vadd.f32 %v2199, %v2217
      %v2237 = vadd.f32 %v2200, %v2219
      %v2238 = vadd.f32 %v2201, %v2222
      %v2239 = vadd.f32 %v2202, %v2224
      %v2240 = vadd.f32 %v2203, %v2227
      %v2241 = vadd.f32 %v2204, %v2229
      %v2242 = vadd.f32 %v2205, %v2232
      %v2243 = vadd.f32 %v2206, %v2234
      %2244 = vmatpush.bf16.msra.mxu0 %v961
      %2245 = vmatpush.bf16.msra.mxu0 %v960
      %2246 = vmatpush.bf16.msra.mxu0 %v959
      %2247 = vmatpush.bf16.msra.mxu0 %v958
      %2248 = vmatpush.bf16.msra.mxu0 %v957
      %2249 = vmatpush.bf16.msra.mxu0 %v956
      %2250 = vmatpush.bf16.msra.mxu0 %v955
      %2251 = vmatpush.bf16.msra.mxu0 %v954
      %2252 = vmatmul.bf16.gmra.mxu0 %v1663
      %v2253 = vpop.f32.mrf.mxu0
      %v2254 = vadd.f32 0.0, %v2253
      %v2255 = vpop.f32.mrf.mxu0
      %v2256 = vadd.f32 0.0, %v2255
      %2257 = vmatmul.bf16.gmra.mxu0 %v1664
      %v2258 = vpop.f32.mrf.mxu0
      %v2259 = vadd.f32 0.0, %v2258
      %v2260 = vpop.f32.mrf.mxu0
      %v2261 = vadd.f32 0.0, %v2260
      %2262 = vmatmul.bf16.gmra.mxu0 %v1665
      %v2263 = vpop.f32.mrf.mxu0
      %v2264 = vadd.f32 0.0, %v2263
      %v2265 = vpop.f32.mrf.mxu0
      %v2266 = vadd.f32 0.0, %v2265
      %2267 = vmatmul.bf16.gmra.mxu0 %v1666
      %v2268 = vpop.f32.mrf.mxu0
      %v2269 = vadd.f32 0.0, %v2268
      %v2270 = vpop.f32.mrf.mxu0
      %v2271 = vadd.f32 0.0, %v2270
      %2272 = vdwg.mxu0
      %v2273 = vadd.f32 %v2236, %v2254
      %v2274 = vadd.f32 %v2237, %v2256
      %v2275 = vadd.f32 %v2238, %v2259
      %v2276 = vadd.f32 %v2239, %v2261
      %v2277 = vadd.f32 %v2240, %v2264
      %v2278 = vadd.f32 %v2241, %v2266
      %v2279 = vadd.f32 %v2242, %v2269
      %v2280 = vadd.f32 %v2243, %v2271
      %2281 = vmatpush.bf16.msra.mxu0 %v1076
      %2282 = vmatpush.bf16.msra.mxu0 %v1075
      %2283 = vmatpush.bf16.msra.mxu0 %v1074
      %2284 = vmatpush.bf16.msra.mxu0 %v1073
      %2285 = vmatpush.bf16.msra.mxu0 %v1072
      %2286 = vmatpush.bf16.msra.mxu0 %v1071
      %2287 = vmatpush.bf16.msra.mxu0 %v1070
      %2288 = vmatpush.bf16.msra.mxu0 %v1069
      %2289 = vmatmul.bf16.gmra.mxu0 %v1977
      %v2290 = vpop.f32.mrf.mxu0
      %v2291 = vadd.f32 0.0, %v2290
      %v2292 = vpop.f32.mrf.mxu0
      %v2293 = vadd.f32 0.0, %v2292
      %2294 = vmatmul.bf16.gmra.mxu0 %v1978
      %v2295 = vpop.f32.mrf.mxu0
      %v2296 = vadd.f32 0.0, %v2295
      %v2297 = vpop.f32.mrf.mxu0
      %v2298 = vadd.f32 0.0, %v2297
      %2299 = vmatmul.bf16.gmra.mxu0 %v1979
      %v2300 = vpop.f32.mrf.mxu0
      %v2301 = vadd.f32 0.0, %v2300
      %v2302 = vpop.f32.mrf.mxu0
      %v2303 = vadd.f32 0.0, %v2302
      %2304 = vmatmul.bf16.gmra.mxu0 %v1980
      %v2305 = vpop.f32.mrf.mxu0
      %v2306 = vadd.f32 0.0, %v2305
      %v2307 = vpop.f32.mrf.mxu0
      %v2308 = vadd.f32 0.0, %v2307
      %2309 = vdwg.mxu0
      %v2310 = vadd.f32 %v2273, %v2291
      %v2311 = vadd.f32 %v2274, %v2293
      %v2312 = vadd.f32 %v2275, %v2296
      %v2313 = vadd.f32 %v2276, %v2298
      %v2314 = vadd.f32 %v2277, %v2301
      %v2315 = vadd.f32 %v2278, %v2303
      %v2316 = vadd.f32 %v2279, %v2306
      %v2317 = vadd.f32 %v2280, %v2308
      %2318 = vmatpush.bf16.msra.mxu0 %v1191
      %2319 = vmatpush.bf16.msra.mxu0 %v1190
      %2320 = vmatpush.bf16.msra.mxu0 %v1189
      %2321 = vmatpush.bf16.msra.mxu0 %v1188
      %2322 = vmatpush.bf16.msra.mxu0 %v1187
      %2323 = vmatpush.bf16.msra.mxu0 %v1186
      %2324 = vmatpush.bf16.msra.mxu0 %v1185
      %2325 = vmatpush.bf16.msra.mxu0 %v1184
      %2326 = vmatmul.bf16.gmra.mxu0 %v2026
      %v2327 = vpop.f32.mrf.mxu0
      %v2328 = vadd.f32 0.0, %v2327
      %v2329 = vpop.f32.mrf.mxu0
      %v2330 = vadd.f32 0.0, %v2329
      %2331 = vmatmul.bf16.gmra.mxu0 %v2027
      %v2332 = vpop.f32.mrf.mxu0
      %v2333 = vadd.f32 0.0, %v2332
      %v2334 = vpop.f32.mrf.mxu0
      %v2335 = vadd.f32 0.0, %v2334
      %2336 = vmatmul.bf16.gmra.mxu0 %v2028
      %v2337 = vpop.f32.mrf.mxu0
      %v2338 = vadd.f32 0.0, %v2337
      %v2339 = vpop.f32.mrf.mxu0
      %v2340 = vadd.f32 0.0, %v2339
      %2341 = vmatmul.bf16.gmra.mxu0 %v2029
      %v2342 = vpop.f32.mrf.mxu0
      %v2343 = vadd.f32 0.0, %v2342
      %v2344 = vpop.f32.mrf.mxu0
      %v2345 = vadd.f32 0.0, %v2344
      %2346 = vdwg.mxu0
      %v2347 = vadd.f32 %v2310, %v2328
      %v2348 = vadd.f32 %v2311, %v2330
      %v2349 = vadd.f32 %v2312, %v2333
      %v2350 = vadd.f32 %v2313, %v2335
      %v2351 = vadd.f32 %v2314, %v2338
      %v2352 = vadd.f32 %v2315, %v2340
      %v2353 = vadd.f32 %v2316, %v2343
      %v2354 = vadd.f32 %v2317, %v2345
      %v2355 = vld [vmem:[%s1968 + $0x1] sm:$0xff]
      %v2356 = vld [vmem:[%s1968 + $0x11] sm:$0xff]
      %v2357 = vld [vmem:[%s1968 + $0x21] sm:$0xff]
      %v2358 = vld [vmem:[%s1968 + $0x31] sm:$0xff]
      %v2359 = vld [vmem:[%s1968 + $0x41] sm:$0xff]
      %v2360 = vld [vmem:[%s1968 + $0x51] sm:$0xff]
      %v2361 = vld [vmem:[%s1968 + $0x61] sm:$0xff]
      %v2362 = vld [vmem:[%s1968 + $0x71] sm:$0xff]
      %v2363 = vpack.c.bf16 %v2356, %v2355
      %v2364 = vpack.c.bf16 %v2358, %v2357
      %v2365 = vpack.c.bf16 %v2360, %v2359
      %v2366 = vpack.c.bf16 %v2362, %v2361
      %2367 = vmatpush.bf16.msra.mxu0 %v1305
      %2368 = vmatpush.bf16.msra.mxu0 %v1304
      %2369 = vmatpush.bf16.msra.mxu0 %v1303
      %2370 = vmatpush.bf16.msra.mxu0 %v1302
      %2371 = vmatpush.bf16.msra.mxu0 %v1301
      %2372 = vmatpush.bf16.msra.mxu0 %v1300
      %2373 = vmatpush.bf16.msra.mxu0 %v1299
      %2374 = vmatpush.bf16.msra.mxu0 %v1298
      %2375 = vmatmul.bf16.gmra.mxu0 %v2363
      %v2376 = vpop.f32.mrf.mxu0
      %v2377 = vadd.f32 0.0, %v2376
      %v2378 = vpop.f32.mrf.mxu0
      %v2379 = vadd.f32 0.0, %v2378
      %2380 = vmatmul.bf16.gmra.mxu0 %v2364
      %v2381 = vpop.f32.mrf.mxu0
      %v2382 = vadd.f32 0.0, %v2381
      %v2383 = vpop.f32.mrf.mxu0
      %v2384 = vadd.f32 0.0, %v2383
      %2385 = vmatmul.bf16.gmra.mxu0 %v2365
      %v2386 = vpop.f32.mrf.mxu0
      %v2387 = vadd.f32 0.0, %v2386
      %v2388 = vpop.f32.mrf.mxu0
      %v2389 = vadd.f32 0.0, %v2388
      %2390 = vmatmul.bf16.gmra.mxu0 %v2366
      %v2391 = vpop.f32.mrf.mxu0
      %v2392 = vadd.f32 0.0, %v2391
      %v2393 = vpop.f32.mrf.mxu0
      %v2394 = vadd.f32 0.0, %v2393
      %2395 = vdwg.mxu0
      %v2396 = vadd.f32 %v2347, %v2377
      %v2397 = vadd.f32 %v2348, %v2379
      %v2398 = vadd.f32 %v2349, %v2382
      %v2399 = vadd.f32 %v2350, %v2384
      %v2400 = vadd.f32 %v2351, %v2387
      %v2401 = vadd.f32 %v2352, %v2389
      %v2402 = vadd.f32 %v2353, %v2392
      %v2403 = vadd.f32 %v2354, %v2394
      %v2404 = vmax.f32 %v2067, %v2396
      %v2405 = vmax.f32 %v2068, %v2397
      %v2406 = vmax.f32 %v2069, %v2398
      %v2407 = vmax.f32 %v2070, %v2399
      %v2408 = vmax.f32 %v2071, %v2400
      %v2409 = vmax.f32 %v2072, %v2401
      %v2410 = vmax.f32 %v2073, %v2402
      %v2411 = vmax.f32 %v2074, %v2403
      %v2412 = vld [vmem:[%s2] sm:$0x1]
      %v2414 = vperm.slane %v2412, 0
      %v2416 = vadd.f32 %v2404, %v2414
      %v2417 = vadd.f32 %v2405, %v2414
      %v2418 = vadd.f32 %v2406, %v2414
      %v2419 = vadd.f32 %v2407, %v2414
      %v2420 = vadd.f32 %v2408, %v2414
      %v2421 = vadd.f32 %v2409, %v2414
      %v2422 = vadd.f32 %v2410, %v2414
      %v2423 = vadd.f32 %v2411, %v2414
      %v2424 = vmax.f32 %v2416, 0.0
      %v2425 = vmax.f32 %v2417, 0.0
      %v2426 = vmax.f32 %v2418, 0.0
      %v2427 = vmax.f32 %v2419, 0.0
      %v2428 = vmax.f32 %v2420, 0.0
      %v2429 = vmax.f32 %v2421, 0.0
      %v2430 = vmax.f32 %v2422, 0.0
      %v2431 = vmax.f32 %v2423, 0.0
      %v2432 = vpack.c.bf16 %v2424, %v2424
      %v2433 = vpack.c.bf16 %v2425, %v2425
      %v2434 = vpack.c.bf16 %v2426, %v2426
      %v2435 = vpack.c.bf16 %v2427, %v2427
      %v2436 = vpack.c.bf16 %v2428, %v2428
      %v2437 = vpack.c.bf16 %v2429, %v2429
      %v2438 = vpack.c.bf16 %v2430, %v2430
      %v2439 = vpack.c.bf16 %v2431, %v2431
      %vm2440 = vcmask 519168
      %2441 = vst.msk [vmem:[#allocation2] sm:$0xf] %vm2440, %v2432
      %2442 = vst.msk [vmem:[#allocation2 + $0x4] sm:$0xf] %vm2440, %v2433
      %2443 = vst.msk [vmem:[#allocation2 + $0x8] sm:$0xf] %vm2440, %v2434
      %2444 = vst.msk [vmem:[#allocation2 + $0xc] sm:$0xf] %vm2440, %v2435
      %2445 = vst.msk [vmem:[#allocation2 + $0x10] sm:$0xf] %vm2440, %v2436
      %2446 = vst.msk [vmem:[#allocation2 + $0x14] sm:$0xf] %vm2440, %v2437
      %2447 = vst.msk [vmem:[#allocation2 + $0x18] sm:$0xf] %vm2440, %v2438
      %2448 = vst.msk [vmem:[#allocation2 + $0x1c] sm:$0xf] %vm2440, %v2439
      %v2449 = vld [vmem:[#allocation2] sm:$0xf]
      %v2450 = vld [vmem:[#allocation2 + $0x4] sm:$0xf]
      %v2451 = vld [vmem:[#allocation2 + $0x8] sm:$0xf]
      %v2452 = vld [vmem:[#allocation2 + $0xc] sm:$0xf]
      %v2453 = vld [vmem:[#allocation2 + $0x10] sm:$0xf]
      %v2454 = vld [vmem:[#allocation2 + $0x14] sm:$0xf]
      %v2455 = vld [vmem:[%s3] sm:$0xf]
      %v2456 = vld [vmem:[%s3 + $0x4] sm:$0xf]
      %v2457 = vld [vmem:[%s3 + $0x8] sm:$0xf]
      %v2458 = vld [vmem:[%s3 + $0xc] sm:$0xf]
      %v2459 = vld [vmem:[%s3 + $0x10] sm:$0xf]
      %v2460 = vld [vmem:[%s3 + $0x14] sm:$0xf]
      %v2461 = vld [vmem:[%s3 + $0x18] sm:$0xf]
      %v2462 = vld [vmem:[%s3 + $0x1c] sm:$0xf]
      %s2463 = scalar_lea.vmem %s3, 32
      %v2464 = vld [vmem:[%s2463] sm:$0xf]
      %v2465 = vld [vmem:[%s2463 + $0x4] sm:$0xf]
      %v2466 = vld [vmem:[%s2463 + $0x8] sm:$0xf]
      %v2467 = vld [vmem:[%s2463 + $0xc] sm:$0xf]
      %v2468 = vld [vmem:[%s2463 + $0x10] sm:$0xf]
      %v2469 = vld [vmem:[%s2463 + $0x14] sm:$0xf]
      %v2470 = vld [vmem:[%s2463 + $0x18] sm:$0xf]
      %v2471 = vld [vmem:[%s2463 + $0x1c] sm:$0xf]
      %s2472 = scalar_lea.vmem %s3, 64
      %v2473 = vld [vmem:[%s2472] sm:$0xf]
      %v2474 = vld [vmem:[%s2472 + $0x4] sm:$0xf]
      %v2475 = vld [vmem:[%s2472 + $0x8] sm:$0xf]
      %v2476 = vld [vmem:[%s2472 + $0xc] sm:$0xf]
      %v2477 = vld [vmem:[%s2472 + $0x10] sm:$0xf]
      %v2478 = vld [vmem:[%s2472 + $0x14] sm:$0xf]
      %v2479 = vld [vmem:[%s2472 + $0x18] sm:$0xf]
      %v2480 = vld [vmem:[%s2472 + $0x1c] sm:$0xf]
      %v2481 = vld [vmem:[#allocation2 + $0x18] sm:$0xf]
      %s2482 = scalar_lea.vmem %s3, 96
      %v2483 = vld [vmem:[%s2482] sm:$0xf]
      %v2484 = vld [vmem:[%s2482 + $0x4] sm:$0xf]
      %v2485 = vld [vmem:[%s2482 + $0x8] sm:$0xf]
      %v2486 = vld [vmem:[%s2482 + $0xc] sm:$0xf]
      %v2487 = vld [vmem:[%s2482 + $0x10] sm:$0xf]
      %v2488 = vld [vmem:[%s2482 + $0x14] sm:$0xf]
      %v2489 = vld [vmem:[%s2482 + $0x18] sm:$0xf]
      %v2490 = vld [vmem:[%s2482 + $0x1c] sm:$0xf]
      %v2497 = vunpack.c.l.b16 %v2450
      %v2498 = vunpack.c.l.b16 %v2451
      %v2499 = vunpack.c.l.b16 %v2452
      %v2500 = vunpack.c.l.b16 %v2453
      %v2501 = vunpack.c.l.b16 %v2454
      %v2502 = vunpack.c.l.b16 %v2481
      %v2503 = vpack.c.b16 %v2498, %v2497
      %v2504 = vpack.c.b16 %v2500, %v2499
      %v2505 = vpack.c.b16 %v2502, %v2501
      %v2514 = vunpack.c.l.b16 %v2483
      %v2515 = vunpack.c.l.b16 %v2484
      %v2516 = vunpack.c.l.b16 %v2485
      %v2517 = vunpack.c.l.b16 %v2486
      %v2518 = vunpack.c.l.b16 %v2487
      %v2519 = vunpack.c.l.b16 %v2488
      %v2520 = vunpack.c.l.b16 %v2489
      %v2521 = vunpack.c.l.b16 %v2490
      %v2522 = vpack.c.b16 %v2515, %v2514
      %v2523 = vpack.c.b16 %v2517, %v2516
      %v2524 = vpack.c.b16 %v2519, %v2518
      %v2525 = vpack.c.b16 %v2521, %v2520
      %vm2530 = vcmask 523264
      %v2532 = vsel %vm2530, %v2503, 0
      %v2535 = vsel %vm2530, %v2504, 0
      %v2538 = vsel %vm2530, %v2505, 0
      %2540 = vmatpush.bf16.msra.mxu0 0
      %2541 = vmatpush.bf16.msra.mxu0 0
      %2542 = vmatpush.bf16.msra.mxu0 0
      %2543 = vmatpush.bf16.msra.mxu0 0
      %2544 = vmatpush.bf16.msra.mxu0 %v2525
      %2545 = vmatpush.bf16.msra.mxu0 %v2524
      %2546 = vmatpush.bf16.msra.mxu0 %v2523
      %2547 = vmatpush.bf16.msra.mxu0 %v2522
      %2548 = vmatmul.bf16.gmra.mxu0 %v2532
      %v2549 = vpop.f32.mrf.mxu0
      %v2550 = vadd.f32 0.0, %v2549
      %v2551 = vpop.f32.mrf.mxu0
      %v2552 = vadd.f32 0.0, %v2551
      %2553 = vmatmul.bf16.gmra.mxu0 %v2535
      %v2554 = vpop.f32.mrf.mxu0
      %v2555 = vadd.f32 0.0, %v2554
      %v2556 = vpop.f32.mrf.mxu0
      %v2557 = vadd.f32 0.0, %v2556
      %2558 = vmatmul.bf16.gmra.mxu0 %v2538
      %v2559 = vpop.f32.mrf.mxu0
      %v2560 = vadd.f32 0.0, %v2559
      %v2561 = vpop.f32.mrf.mxu0
      %v2562 = vadd.f32 0.0, %v2561
      %2563 = vdwg.mxu0
      %v2565 = vunpack.c.l.b16 %v2449
      %v2566 = vpack.c.b16 %v2497, %v2565
      %v2567 = vpack.c.b16 %v2499, %v2498
      %v2568 = vpack.c.b16 %v2501, %v2500
      %v2577 = vunpack.c.l.b16 %v2455
      %v2578 = vunpack.c.l.b16 %v2456
      %v2579 = vunpack.c.l.b16 %v2457
      %v2580 = vunpack.c.l.b16 %v2458
      %v2581 = vunpack.c.l.b16 %v2459
      %v2582 = vunpack.c.l.b16 %v2460
      %v2583 = vunpack.c.l.b16 %v2461
      %v2584 = vunpack.c.l.b16 %v2462
      %v2585 = vpack.c.b16 %v2578, %v2577
      %v2586 = vpack.c.b16 %v2580, %v2579
      %v2587 = vpack.c.b16 %v2582, %v2581
      %v2588 = vpack.c.b16 %v2584, %v2583
      %v2594 = vsel %vm2530, %v2566, 0
      %v2597 = vsel %vm2530, %v2567, 0
      %v2600 = vsel %vm2530, %v2568, 0
      %2602 = vmatpush.bf16.msra.mxu0 0
      %2603 = vmatpush.bf16.msra.mxu0 0
      %2604 = vmatpush.bf16.msra.mxu0 0
      %2605 = vmatpush.bf16.msra.mxu0 0
      %2606 = vmatpush.bf16.msra.mxu0 %v2588
      %2607 = vmatpush.bf16.msra.mxu0 %v2587
      %2608 = vmatpush.bf16.msra.mxu0 %v2586
      %2609 = vmatpush.bf16.msra.mxu0 %v2585
      %2610 = vmatmul.bf16.gmra.mxu0 %v2594
      %v2611 = vpop.f32.mrf.mxu0
      %v2612 = vadd.f32 %v2550, %v2611
      %v2613 = vpop.f32.mrf.mxu0
      %v2614 = vadd.f32 %v2552, %v2613
      %2615 = vmatmul.bf16.gmra.mxu0 %v2597
      %v2616 = vpop.f32.mrf.mxu0
      %v2617 = vadd.f32 %v2555, %v2616
      %v2618 = vpop.f32.mrf.mxu0
      %v2619 = vadd.f32 %v2557, %v2618
      %2620 = vmatmul.bf16.gmra.mxu0 %v2600
      %v2621 = vpop.f32.mrf.mxu0
      %v2622 = vadd.f32 %v2560, %v2621
      %v2623 = vpop.f32.mrf.mxu0
      %v2624 = vadd.f32 %v2562, %v2623
      %2625 = vdwg.mxu0
      %s2626 = scalar_lea.vmem %s3, 128
      %v2627 = vld [vmem:[%s2626] sm:$0xf]
      %v2628 = vld [vmem:[%s2626 + $0x4] sm:$0xf]
      %v2629 = vld [vmem:[%s2626 + $0x8] sm:$0xf]
      %v2630 = vld [vmem:[%s2626 + $0xc] sm:$0xf]
      %v2631 = vld [vmem:[%s2626 + $0x10] sm:$0xf]
      %v2632 = vld [vmem:[%s2626 + $0x14] sm:$0xf]
      %v2633 = vld [vmem:[%s2626 + $0x18] sm:$0xf]
      %v2634 = vld [vmem:[%s2626 + $0x1c] sm:$0xf]
      %v2643 = vunpack.c.l.b16 %v2627
      %v2644 = vunpack.c.l.b16 %v2628
      %v2645 = vunpack.c.l.b16 %v2629
      %v2646 = vunpack.c.l.b16 %v2630
      %v2647 = vunpack.c.l.b16 %v2631
      %v2648 = vunpack.c.l.b16 %v2632
      %v2649 = vunpack.c.l.b16 %v2633
      %v2650 = vunpack.c.l.b16 %v2634
      %v2651 = vpack.c.b16 %v2644, %v2643
      %v2652 = vpack.c.b16 %v2646, %v2645
      %v2653 = vpack.c.b16 %v2648, %v2647
      %v2654 = vpack.c.b16 %v2650, %v2649
      %2659 = vmatpush.bf16.msra.mxu0 0
      %2660 = vmatpush.bf16.msra.mxu0 0
      %2661 = vmatpush.bf16.msra.mxu0 0
      %2662 = vmatpush.bf16.msra.mxu0 0
      %2663 = vmatpush.bf16.msra.mxu0 %v2654
      %2664 = vmatpush.bf16.msra.mxu0 %v2653
      %2665 = vmatpush.bf16.msra.mxu0 %v2652
      %2666 = vmatpush.bf16.msra.mxu0 %v2651
      %2667 = vmatmul.bf16.gmra.mxu0 %v2532
      %v2668 = vpop.f32.mrf.mxu0
      %v2669 = vadd.f32 0.0, %v2668
      %v2670 = vpop.f32.mrf.mxu0
      %v2671 = vadd.f32 0.0, %v2670
      %2672 = vmatmul.bf16.gmra.mxu0 %v2535
      %v2673 = vpop.f32.mrf.mxu0
      %v2674 = vadd.f32 0.0, %v2673
      %v2675 = vpop.f32.mrf.mxu0
      %v2676 = vadd.f32 0.0, %v2675
      %2677 = vmatmul.bf16.gmra.mxu0 %v2538
      %v2678 = vpop.f32.mrf.mxu0
      %v2679 = vadd.f32 0.0, %v2678
      %v2680 = vpop.f32.mrf.mxu0
      %v2681 = vadd.f32 0.0, %v2680
      %2682 = vdwg.mxu0
      %v2691 = vunpack.c.l.b16 %v2464
      %v2692 = vunpack.c.l.b16 %v2465
      %v2693 = vunpack.c.l.b16 %v2466
      %v2694 = vunpack.c.l.b16 %v2467
      %v2695 = vunpack.c.l.b16 %v2468
      %v2696 = vunpack.c.l.b16 %v2469
      %v2697 = vunpack.c.l.b16 %v2470
      %v2698 = vunpack.c.l.b16 %v2471
      %v2699 = vpack.c.b16 %v2692, %v2691
      %v2700 = vpack.c.b16 %v2694, %v2693
      %v2701 = vpack.c.b16 %v2696, %v2695
      %v2702 = vpack.c.b16 %v2698, %v2697
      %2707 = vmatpush.bf16.msra.mxu0 0
      %2708 = vmatpush.bf16.msra.mxu0 0
      %2709 = vmatpush.bf16.msra.mxu0 0
      %2710 = vmatpush.bf16.msra.mxu0 0
      %2711 = vmatpush.bf16.msra.mxu0 %v2702
      %2712 = vmatpush.bf16.msra.mxu0 %v2701
      %2713 = vmatpush.bf16.msra.mxu0 %v2700
      %2714 = vmatpush.bf16.msra.mxu0 %v2699
      %2715 = vmatmul.bf16.gmra.mxu0 %v2594
      %v2716 = vpop.f32.mrf.mxu0
      %v2717 = vadd.f32 %v2669, %v2716
      %v2718 = vpop.f32.mrf.mxu0
      %v2719 = vadd.f32 %v2671, %v2718
      %2720 = vmatmul.bf16.gmra.mxu0 %v2597
      %v2721 = vpop.f32.mrf.mxu0
      %v2722 = vadd.f32 %v2674, %v2721
      %v2723 = vpop.f32.mrf.mxu0
      %v2724 = vadd.f32 %v2676, %v2723
      %2725 = vmatmul.bf16.gmra.mxu0 %v2600
      %v2726 = vpop.f32.mrf.mxu0
      %v2727 = vadd.f32 %v2679, %v2726
      %v2728 = vpop.f32.mrf.mxu0
      %v2729 = vadd.f32 %v2681, %v2728
      %2730 = vdwg.mxu0
      %s2731 = scalar_lea.vmem %s3, 160
      %v2732 = vld [vmem:[%s2731] sm:$0xf]
      %v2733 = vld [vmem:[%s2731 + $0x4] sm:$0xf]
      %v2734 = vld [vmem:[%s2731 + $0x8] sm:$0xf]
      %v2735 = vld [vmem:[%s2731 + $0xc] sm:$0xf]
      %v2736 = vld [vmem:[%s2731 + $0x10] sm:$0xf]
      %v2737 = vld [vmem:[%s2731 + $0x14] sm:$0xf]
      %v2738 = vld [vmem:[%s2731 + $0x18] sm:$0xf]
      %v2739 = vld [vmem:[%s2731 + $0x1c] sm:$0xf]
      %v2748 = vunpack.c.l.b16 %v2732
      %v2749 = vunpack.c.l.b16 %v2733
      %v2750 = vunpack.c.l.b16 %v2734
      %v2751 = vunpack.c.l.b16 %v2735
      %v2752 = vunpack.c.l.b16 %v2736
      %v2753 = vunpack.c.l.b16 %v2737
      %v2754 = vunpack.c.l.b16 %v2738
      %v2755 = vunpack.c.l.b16 %v2739
      %v2756 = vpack.c.b16 %v2749, %v2748
      %v2757 = vpack.c.b16 %v2751, %v2750
      %v2758 = vpack.c.b16 %v2753, %v2752
      %v2759 = vpack.c.b16 %v2755, %v2754
      %2764 = vmatpush.bf16.msra.mxu0 0
      %2765 = vmatpush.bf16.msra.mxu0 0
      %2766 = vmatpush.bf16.msra.mxu0 0
      %2767 = vmatpush.bf16.msra.mxu0 0
      %2768 = vmatpush.bf16.msra.mxu0 %v2759
      %2769 = vmatpush.bf16.msra.mxu0 %v2758
      %2770 = vmatpush.bf16.msra.mxu0 %v2757
      %2771 = vmatpush.bf16.msra.mxu0 %v2756
      %2772 = vmatmul.bf16.gmra.mxu0 %v2532
      %v2773 = vpop.f32.mrf.mxu0
      %v2774 = vadd.f32 0.0, %v2773
      %v2775 = vpop.f32.mrf.mxu0
      %v2776 = vadd.f32 0.0, %v2775
      %2777 = vmatmul.bf16.gmra.mxu0 %v2535
      %v2778 = vpop.f32.mrf.mxu0
      %v2779 = vadd.f32 0.0, %v2778
      %v2780 = vpop.f32.mrf.mxu0
      %v2781 = vadd.f32 0.0, %v2780
      %2782 = vmatmul.bf16.gmra.mxu0 %v2538
      %v2783 = vpop.f32.mrf.mxu0
      %v2784 = vadd.f32 0.0, %v2783
      %v2785 = vpop.f32.mrf.mxu0
      %v2786 = vadd.f32 0.0, %v2785
      %2787 = vdwg.mxu0
      %v2796 = vunpack.c.l.b16 %v2473
      %v2797 = vunpack.c.l.b16 %v2474
      %v2798 = vunpack.c.l.b16 %v2475
      %v2799 = vunpack.c.l.b16 %v2476
      %v2800 = vunpack.c.l.b16 %v2477
      %v2801 = vunpack.c.l.b16 %v2478
      %v2802 = vunpack.c.l.b16 %v2479
      %v2803 = vunpack.c.l.b16 %v2480
      %v2804 = vpack.c.b16 %v2797, %v2796
      %v2805 = vpack.c.b16 %v2799, %v2798
      %v2806 = vpack.c.b16 %v2801, %v2800
      %v2807 = vpack.c.b16 %v2803, %v2802
      %2812 = vmatpush.bf16.msra.mxu0 0
      %2813 = vmatpush.bf16.msra.mxu0 0
      %2814 = vmatpush.bf16.msra.mxu0 0
      %2815 = vmatpush.bf16.msra.mxu0 0
      %2816 = vmatpush.bf16.msra.mxu0 %v2807
      %2817 = vmatpush.bf16.msra.mxu0 %v2806
      %2818 = vmatpush.bf16.msra.mxu0 %v2805
      %2819 = vmatpush.bf16.msra.mxu0 %v2804
      %2820 = vmatmul.bf16.gmra.mxu0 %v2594
      %v2821 = vpop.f32.mrf.mxu0
      %v2822 = vadd.f32 %v2774, %v2821
      %v2823 = vpop.f32.mrf.mxu0
      %v2824 = vadd.f32 %v2776, %v2823
      %2825 = vmatmul.bf16.gmra.mxu0 %v2597
      %v2826 = vpop.f32.mrf.mxu0
      %v2827 = vadd.f32 %v2779, %v2826
      %v2828 = vpop.f32.mrf.mxu0
      %v2829 = vadd.f32 %v2781, %v2828
      %2830 = vmatmul.bf16.gmra.mxu0 %v2600
      %v2831 = vpop.f32.mrf.mxu0
      %v2832 = vadd.f32 %v2784, %v2831
      %v2833 = vpop.f32.mrf.mxu0
      %v2834 = vadd.f32 %v2786, %v2833
      %2835 = vdwg.mxu0
      %v2836 = vld [vmem:[#allocation2 + $0x8] sm:$0xf]
      %v2837 = vld [vmem:[#allocation2 + $0xc] sm:$0xf]
      %v2838 = vld [vmem:[#allocation2 + $0x10] sm:$0xf]
      %v2839 = vld [vmem:[#allocation2 + $0x14] sm:$0xf]
      %v2840 = vld [vmem:[#allocation2 + $0x18] sm:$0xf]
      %v2841 = vld [vmem:[#allocation2 + $0x1c] sm:$0xf]
      %s2842 = scalar_lea.vmem %s3, 192
      %v2843 = vld [vmem:[%s2842] sm:$0xf]
      %v2844 = vld [vmem:[%s2842 + $0x4] sm:$0xf]
      %v2845 = vld [vmem:[%s2842 + $0x8] sm:$0xf]
      %v2846 = vld [vmem:[%s2842 + $0xc] sm:$0xf]
      %v2847 = vld [vmem:[%s2842 + $0x10] sm:$0xf]
      %v2848 = vld [vmem:[%s2842 + $0x14] sm:$0xf]
      %v2849 = vld [vmem:[%s2842 + $0x18] sm:$0xf]
      %v2850 = vld [vmem:[%s2842 + $0x1c] sm:$0xf]
      %v2857 = vunpack.c.l.b16 %v2836
      %v2858 = vunpack.c.l.b16 %v2837
      %v2859 = vunpack.c.l.b16 %v2838
      %v2860 = vunpack.c.l.b16 %v2839
      %v2861 = vunpack.c.l.b16 %v2840
      %v2862 = vunpack.c.l.b16 %v2841
      %v2863 = vpack.c.b16 %v2858, %v2857
      %v2864 = vpack.c.b16 %v2860, %v2859
      %v2865 = vpack.c.b16 %v2862, %v2861
      %v2874 = vunpack.c.l.b16 %v2843
      %v2875 = vunpack.c.l.b16 %v2844
      %v2876 = vunpack.c.l.b16 %v2845
      %v2877 = vunpack.c.l.b16 %v2846
      %v2878 = vunpack.c.l.b16 %v2847
      %v2879 = vunpack.c.l.b16 %v2848
      %v2880 = vunpack.c.l.b16 %v2849
      %v2881 = vunpack.c.l.b16 %v2850
      %v2882 = vpack.c.b16 %v2875, %v2874
      %v2883 = vpack.c.b16 %v2877, %v2876
      %v2884 = vpack.c.b16 %v2879, %v2878
      %v2885 = vpack.c.b16 %v2881, %v2880
      %v2891 = vsel %vm2530, %v2863, 0
      %v2894 = vsel %vm2530, %v2864, 0
      %v2897 = vsel %vm2530, %v2865, 0
      %2899 = vmatpush.bf16.msra.mxu0 0
      %2900 = vmatpush.bf16.msra.mxu0 0
      %2901 = vmatpush.bf16.msra.mxu0 0
      %2902 = vmatpush.bf16.msra.mxu0 0
      %2903 = vmatpush.bf16.msra.mxu0 %v2885
      %2904 = vmatpush.bf16.msra.mxu0 %v2884
      %2905 = vmatpush.bf16.msra.mxu0 %v2883
      %2906 = vmatpush.bf16.msra.mxu0 %v2882
      %2907 = vmatmul.bf16.gmra.mxu0 %v2891
      %v2908 = vpop.f32.mrf.mxu0
      %v2909 = vadd.f32 0.0, %v2908
      %v2910 = vpop.f32.mrf.mxu0
      %v2911 = vadd.f32 0.0, %v2910
      %2912 = vmatmul.bf16.gmra.mxu0 %v2894
      %v2913 = vpop.f32.mrf.mxu0
      %v2914 = vadd.f32 0.0, %v2913
      %v2915 = vpop.f32.mrf.mxu0
      %v2916 = vadd.f32 0.0, %v2915
      %2917 = vmatmul.bf16.gmra.mxu0 %v2897
      %v2918 = vpop.f32.mrf.mxu0
      %v2919 = vadd.f32 0.0, %v2918
      %v2920 = vpop.f32.mrf.mxu0
      %v2921 = vadd.f32 0.0, %v2920
      %2922 = vdwg.mxu0
      %v2923 = vadd.f32 %v2612, %v2909
      %v2924 = vadd.f32 %v2614, %v2911
      %v2925 = vadd.f32 %v2617, %v2914
      %v2926 = vadd.f32 %v2619, %v2916
      %v2927 = vadd.f32 %v2622, %v2919
      %v2928 = vadd.f32 %v2624, %v2921
      %s2929 = scalar_lea.vmem %s3, 224
      %v2930 = vld [vmem:[%s2929] sm:$0xf]
      %v2931 = vld [vmem:[%s2929 + $0x4] sm:$0xf]
      %v2932 = vld [vmem:[%s2929 + $0x8] sm:$0xf]
      %v2933 = vld [vmem:[%s2929 + $0xc] sm:$0xf]
      %v2934 = vld [vmem:[%s2929 + $0x10] sm:$0xf]
      %v2935 = vld [vmem:[%s2929 + $0x14] sm:$0xf]
      %v2936 = vld [vmem:[%s2929 + $0x18] sm:$0xf]
      %v2937 = vld [vmem:[%s2929 + $0x1c] sm:$0xf]
      %v2946 = vunpack.c.l.b16 %v2930
      %v2947 = vunpack.c.l.b16 %v2931
      %v2948 = vunpack.c.l.b16 %v2932
      %v2949 = vunpack.c.l.b16 %v2933
      %v2950 = vunpack.c.l.b16 %v2934
      %v2951 = vunpack.c.l.b16 %v2935
      %v2952 = vunpack.c.l.b16 %v2936
      %v2953 = vunpack.c.l.b16 %v2937
      %v2954 = vpack.c.b16 %v2947, %v2946
      %v2955 = vpack.c.b16 %v2949, %v2948
      %v2956 = vpack.c.b16 %v2951, %v2950
      %v2957 = vpack.c.b16 %v2953, %v2952
      %2962 = vmatpush.bf16.msra.mxu0 0
      %2963 = vmatpush.bf16.msra.mxu0 0
      %2964 = vmatpush.bf16.msra.mxu0 0
      %2965 = vmatpush.bf16.msra.mxu0 0
      %2966 = vmatpush.bf16.msra.mxu0 %v2957
      %2967 = vmatpush.bf16.msra.mxu0 %v2956
      %2968 = vmatpush.bf16.msra.mxu0 %v2955
      %2969 = vmatpush.bf16.msra.mxu0 %v2954
      %2970 = vmatmul.bf16.gmra.mxu0 %v2891
      %v2971 = vpop.f32.mrf.mxu0
      %v2972 = vadd.f32 0.0, %v2971
      %v2973 = vpop.f32.mrf.mxu0
      %v2974 = vadd.f32 0.0, %v2973
      %2975 = vmatmul.bf16.gmra.mxu0 %v2894
      %v2976 = vpop.f32.mrf.mxu0
      %v2977 = vadd.f32 0.0, %v2976
      %v2978 = vpop.f32.mrf.mxu0
      %v2979 = vadd.f32 0.0, %v2978
      %2980 = vmatmul.bf16.gmra.mxu0 %v2897
      %v2981 = vpop.f32.mrf.mxu0
      %v2982 = vadd.f32 0.0, %v2981
      %v2983 = vpop.f32.mrf.mxu0
      %v2984 = vadd.f32 0.0, %v2983
      %2985 = vdwg.mxu0
      %v2986 = vadd.f32 %v2717, %v2972
      %v2987 = vadd.f32 %v2719, %v2974
      %v2988 = vadd.f32 %v2722, %v2977
      %v2989 = vadd.f32 %v2724, %v2979
      %v2990 = vadd.f32 %v2727, %v2982
      %v2991 = vadd.f32 %v2729, %v2984
      %s2992 = scalar_lea.vmem %s3, 256
      %v2993 = vld [vmem:[%s2992] sm:$0xf]
      %v2994 = vld [vmem:[%s2992 + $0x4] sm:$0xf]
      %v2995 = vld [vmem:[%s2992 + $0x8] sm:$0xf]
      %v2996 = vld [vmem:[%s2992 + $0xc] sm:$0xf]
      %v2997 = vld [vmem:[%s2992 + $0x10] sm:$0xf]
      %v2998 = vld [vmem:[%s2992 + $0x14] sm:$0xf]
      %v2999 = vld [vmem:[%s2992 + $0x18] sm:$0xf]
      %v3000 = vld [vmem:[%s2992 + $0x1c] sm:$0xf]
      %v3009 = vunpack.c.l.b16 %v2993
      %v3010 = vunpack.c.l.b16 %v2994
      %v3011 = vunpack.c.l.b16 %v2995
      %v3012 = vunpack.c.l.b16 %v2996
      %v3013 = vunpack.c.l.b16 %v2997
      %v3014 = vunpack.c.l.b16 %v2998
      %v3015 = vunpack.c.l.b16 %v2999
      %v3016 = vunpack.c.l.b16 %v3000
      %v3017 = vpack.c.b16 %v3010, %v3009
      %v3018 = vpack.c.b16 %v3012, %v3011
      %v3019 = vpack.c.b16 %v3014, %v3013
      %v3020 = vpack.c.b16 %v3016, %v3015
      %3025 = vmatpush.bf16.msra.mxu0 0
      %3026 = vmatpush.bf16.msra.mxu0 0
      %3027 = vmatpush.bf16.msra.mxu0 0
      %3028 = vmatpush.bf16.msra.mxu0 0
      %3029 = vmatpush.bf16.msra.mxu0 %v3020
      %3030 = vmatpush.bf16.msra.mxu0 %v3019
      %3031 = vmatpush.bf16.msra.mxu0 %v3018
      %3032 = vmatpush.bf16.msra.mxu0 %v3017
      %3033 = vmatmul.bf16.gmra.mxu0 %v2891
      %v3034 = vpop.f32.mrf.mxu0
      %v3035 = vadd.f32 0.0, %v3034
      %v3036 = vpop.f32.mrf.mxu0
      %v3037 = vadd.f32 0.0, %v3036
      %3038 = vmatmul.bf16.gmra.mxu0 %v2894
      %v3039 = vpop.f32.mrf.mxu0
      %v3040 = vadd.f32 0.0, %v3039
      %v3041 = vpop.f32.mrf.mxu0
      %v3042 = vadd.f32 0.0, %v3041
      %3043 = vmatmul.bf16.gmra.mxu0 %v2897
      %v3044 = vpop.f32.mrf.mxu0
      %v3045 = vadd.f32 0.0, %v3044
      %v3046 = vpop.f32.mrf.mxu0
      %v3047 = vadd.f32 0.0, %v3046
      %3048 = vdwg.mxu0
      %v3049 = vadd.f32 %v2822, %v3035
      %v3050 = vadd.f32 %v2824, %v3037
      %v3051 = vadd.f32 %v2827, %v3040
      %v3052 = vadd.f32 %v2829, %v3042
      %v3053 = vadd.f32 %v2832, %v3045
      %v3054 = vadd.f32 %v2834, %v3047
      %3055 = vst.msk [vmem:[#allocation3] sm:$0xff] %vm2530, %v2923
      %3056 = vst.msk [vmem:[#allocation3 + $0x8] sm:$0xff] %vm2530, %v2924
      %3057 = vst.msk [vmem:[#allocation3 + $0x10] sm:$0xff] %vm2530, %v2925
      %3058 = vst.msk [vmem:[#allocation3 + $0x18] sm:$0xff] %vm2530, %v2926
      %3059 = vst.msk [vmem:[#allocation3 + $0x20] sm:$0xff] %vm2530, %v2927
      %3060 = vst.msk [vmem:[#allocation3 + $0x28] sm:$0xff] %vm2530, %v2928
      %s3061 = scalar_lea.vmem [#allocation3], 48
      %3062 = vst.msk [vmem:[%s3061] sm:$0xff] %vm2530, %v2986
      %3063 = vst.msk [vmem:[%s3061 + $0x8] sm:$0xff] %vm2530, %v2987
      %3064 = vst.msk [vmem:[%s3061 + $0x10] sm:$0xff] %vm2530, %v2988
      %3065 = vst.msk [vmem:[%s3061 + $0x18] sm:$0xff] %vm2530, %v2989
      %3066 = vst.msk [vmem:[%s3061 + $0x20] sm:$0xff] %vm2530, %v2990
      %3067 = vst.msk [vmem:[%s3061 + $0x28] sm:$0xff] %vm2530, %v2991
      %s3068 = scalar_lea.vmem [#allocation3], 96
      %3069 = vst.msk [vmem:[%s3068] sm:$0xff] %vm2530, %v3049
      %3070 = vst.msk [vmem:[%s3068 + $0x8] sm:$0xff] %vm2530, %v3050
      %3071 = vst.msk [vmem:[%s3068 + $0x10] sm:$0xff] %vm2530, %v3051
      %3072 = vst.msk [vmem:[%s3068 + $0x18] sm:$0xff] %vm2530, %v3052
      %3073 = vst.msk [vmem:[%s3068 + $0x20] sm:$0xff] %vm2530, %v3053
      %3074 = vst.msk [vmem:[%s3068 + $0x28] sm:$0xff] %vm2530, %v3054
      %v3075 = vld [vmem:[#allocation3] sm:$0x3f]
      %v3076 = vld [vmem:[%s3061 + $0x1] sm:$0x3f]
      %v3077 = vadd.f32 %v3075, %v3076
      %v3078 = vld [vmem:[%s3068 + $0x2] sm:$0x3f]
      %v3079 = vadd.f32 %v3077, %v3078
      %v3080 = vld [vmem:[#allocation3 + $0x8] sm:$0x3f]
      %v3081 = vld [vmem:[%s3061 + $0x9] sm:$0x3f]
      %v3082 = vadd.f32 %v3080, %v3081
      %v3083 = vld [vmem:[%s3068 + $0xa] sm:$0x3f]
      %v3084 = vadd.f32 %v3082, %v3083
      %v3085 = vmax.f32 %v3079, %v3084
      %vm3086 = vcmask 521216
      %3087 = vst.msk [vmem:[#allocation4] sm:$0x3f] %vm3086, %v3085
      %v3088 = vld [vmem:[#allocation4] sm:$0x1]
      %v3089 = vld [vmem:[#allocation4 + $0x1] sm:$0x1]
      %v3090 = vmax.f32 %v3088, %v3089
      %v3091 = vld [vmem:[%s4] sm:$0x1]
      %v3092 = vadd.f32 %v3090, %v3091
      %v3093 = vmax.f32 %v3092, 0.0
      %v3094 = vld [vmem:[%s5] sm:$0xff]
      %v3095 = vld [vmem:[%s5 + $0x8] sm:$0xff]
      %v3096 = vld [vmem:[%s5 + $0x10] sm:$0xff]
      %v3097 = vld [vmem:[%s5 + $0x18] sm:$0xff]
      %v3098 = vld [vmem:[%s5 + $0x20] sm:$0xff]
      %v3099 = vld [vmem:[%s5 + $0x28] sm:$0xff]
      %v3100 = vld [vmem:[%s5 + $0x30] sm:$0xff]
      %v3101 = vld [vmem:[%s5 + $0x38] sm:$0xff]
      %v3102 = vld [vmem:[#allocation4 + $0x2] sm:$0x1]
      %v3103 = vld [vmem:[#allocation4 + $0x3] sm:$0x1]
      %v3104 = vmax.f32 %v3102, %v3103
      %v3105 = vadd.f32 %v3104, %v3091
      %v3106 = vmax.f32 %v3105, 0.0
      %s3107 = scalar_lea.vmem %s5, 64
      %v3108 = vld [vmem:[%s3107] sm:$0xff]
      %v3109 = vld [vmem:[%s3107 + $0x8] sm:$0xff]
      %v3110 = vld [vmem:[%s3107 + $0x10] sm:$0xff]
      %v3111 = vld [vmem:[%s3107 + $0x18] sm:$0xff]
      %v3112 = vld [vmem:[%s3107 + $0x20] sm:$0xff]
      %v3113 = vld [vmem:[%s3107 + $0x28] sm:$0xff]
      %v3114 = vld [vmem:[%s3107 + $0x30] sm:$0xff]
      %v3115 = vld [vmem:[%s3107 + $0x38] sm:$0xff]
      %v3117 = vsel %vm2530, %v3106, 0
      %3119 = vmatpush.msra.mxu0 0.0
      %3120 = vmatpush.msra.mxu0 0.0
      %3121 = vmatpush.msra.mxu0 0.0
      %3122 = vmatpush.msra.mxu0 0.0
      %3123 = vmatpush.msra.mxu0 0.0
      %3124 = vmatpush.msra.mxu0 0.0
      %3125 = vmatpush.msra.mxu0 0.0
      %3126 = vmatpush.msra.mxu0 0.0
      %3127 = vmatpush.msra.mxu0 %v3115
      %3128 = vmatpush.msra.mxu0 %v3114
      %3129 = vmatpush.msra.mxu0 %v3113
      %3130 = vmatpush.msra.mxu0 %v3112
      %3131 = vmatpush.msra.mxu0 %v3111
      %3132 = vmatpush.msra.mxu0 %v3110
      %3133 = vmatpush.msra.mxu0 %v3109
      %3134 = vmatpush.msra.mxu0 %v3108
      %3135 = vmatmul.f32.gmra.mxu0 %v3117
      %v3136 = vpop.f32.mrf.mxu0
      %v3137 = vadd.f32 0.0, %v3136
      %3138 = vdwg.mxu0
      %v3140 = vsel %vm2530, %v3093, 0
      %3142 = vmatpush.msra.mxu0 0.0
      %3143 = vmatpush.msra.mxu0 0.0
      %3144 = vmatpush.msra.mxu0 0.0
      %3145 = vmatpush.msra.mxu0 0.0
      %3146 = vmatpush.msra.mxu0 0.0
      %3147 = vmatpush.msra.mxu0 0.0
      %3148 = vmatpush.msra.mxu0 0.0
      %3149 = vmatpush.msra.mxu0 0.0
      %3150 = vmatpush.msra.mxu0 %v3101
      %3151 = vmatpush.msra.mxu0 %v3100
      %3152 = vmatpush.msra.mxu0 %v3099
      %3153 = vmatpush.msra.mxu0 %v3098
      %3154 = vmatpush.msra.mxu0 %v3097
      %3155 = vmatpush.msra.mxu0 %v3096
      %3156 = vmatpush.msra.mxu0 %v3095
      %3157 = vmatpush.msra.mxu0 %v3094
      %3158 = vmatmul.f32.gmra.mxu0 %v3140
      %v3159 = vpop.f32.mrf.mxu0
      %v3160 = vadd.f32 %v3137, %v3159
      %3161 = vdwg.mxu0
      %v3162 = vld [vmem:[#allocation4 + $0x4] sm:$0x1]
      %v3163 = vld [vmem:[#allocation4 + $0x5] sm:$0x1]
      %v3164 = vmax.f32 %v3162, %v3163
      %v3165 = vadd.f32 %v3164, %v3091
      %v3166 = vmax.f32 %v3165, 0.0
      %s3167 = scalar_lea.vmem %s5, 128
      %v3168 = vld [vmem:[%s3167] sm:$0xff]
      %v3169 = vld [vmem:[%s3167 + $0x8] sm:$0xff]
      %v3170 = vld [vmem:[%s3167 + $0x10] sm:$0xff]
      %v3171 = vld [vmem:[%s3167 + $0x18] sm:$0xff]
      %v3172 = vld [vmem:[%s3167 + $0x20] sm:$0xff]
      %v3173 = vld [vmem:[%s3167 + $0x28] sm:$0xff]
      %v3174 = vld [vmem:[%s3167 + $0x30] sm:$0xff]
      %v3175 = vld [vmem:[%s3167 + $0x38] sm:$0xff]
      %v3177 = vsel %vm2530, %v3166, 0
      %3179 = vmatpush.msra.mxu0 0.0
      %3180 = vmatpush.msra.mxu0 0.0
      %3181 = vmatpush.msra.mxu0 0.0
      %3182 = vmatpush.msra.mxu0 0.0
      %3183 = vmatpush.msra.mxu0 0.0
      %3184 = vmatpush.msra.mxu0 0.0
      %3185 = vmatpush.msra.mxu0 0.0
      %3186 = vmatpush.msra.mxu0 0.0
      %3187 = vmatpush.msra.mxu0 %v3175
      %3188 = vmatpush.msra.mxu0 %v3174
      %3189 = vmatpush.msra.mxu0 %v3173
      %3190 = vmatpush.msra.mxu0 %v3172
      %3191 = vmatpush.msra.mxu0 %v3171
      %3192 = vmatpush.msra.mxu0 %v3170
      %3193 = vmatpush.msra.mxu0 %v3169
      %3194 = vmatpush.msra.mxu0 %v3168
      %3195 = vmatmul.f32.gmra.mxu0 %v3177
      %v3196 = vpop.f32.mrf.mxu0
      %v3197 = vadd.f32 0.0, %v3196
      %3198 = vdwg.mxu0
      %v3199 = vadd.f32 %v3160, %v3197
      %v3200 = vld [vmem:[#allocation3 + $0x10] sm:$0x3f]
      %v3201 = vld [vmem:[%s3061 + $0x11] sm:$0x3f]
      %v3202 = vadd.f32 %v3200, %v3201
      %v3203 = vld [vmem:[%s3068 + $0x12] sm:$0x3f]
      %v3204 = vadd.f32 %v3202, %v3203
      %v3205 = vld [vmem:[#allocation3 + $0x18] sm:$0x3f]
      %v3206 = vld [vmem:[%s3061 + $0x19] sm:$0x3f]
      %v3207 = vadd.f32 %v3205, %v3206
      %v3208 = vld [vmem:[%s3068 + $0x1a] sm:$0x3f]
      %v3209 = vadd.f32 %v3207, %v3208
      %v3210 = vmax.f32 %v3204, %v3209
      %3211 = vst.msk [vmem:[#allocation4] sm:$0x3f] %vm3086, %v3210
      %v3212 = vld [vmem:[#allocation4] sm:$0x1]
      %v3213 = vld [vmem:[#allocation4 + $0x1] sm:$0x1]
      %v3214 = vmax.f32 %v3212, %v3213
      %v3215 = vld [vmem:[%s4] sm:$0x1]
      %v3216 = vadd.f32 %v3214, %v3215
      %v3217 = vmax.f32 %v3216, 0.0
      %s3218 = scalar_lea.vmem %s5, 192
      %v3219 = vld [vmem:[%s3218] sm:$0xff]
      %v3220 = vld [vmem:[%s3218 + $0x8] sm:$0xff]
      %v3221 = vld [vmem:[%s3218 + $0x10] sm:$0xff]
      %v3222 = vld [vmem:[%s3218 + $0x18] sm:$0xff]
      %v3223 = vld [vmem:[%s3218 + $0x20] sm:$0xff]
      %v3224 = vld [vmem:[%s3218 + $0x28] sm:$0xff]
      %v3225 = vld [vmem:[%s3218 + $0x30] sm:$0xff]
      %v3226 = vld [vmem:[%s3218 + $0x38] sm:$0xff]
      %v3228 = vsel %vm2530, %v3217, 0
      %3230 = vmatpush.msra.mxu0 0.0
      %3231 = vmatpush.msra.mxu0 0.0
      %3232 = vmatpush.msra.mxu0 0.0
      %3233 = vmatpush.msra.mxu0 0.0
      %3234 = vmatpush.msra.mxu0 0.0
      %3235 = vmatpush.msra.mxu0 0.0
      %3236 = vmatpush.msra.mxu0 0.0
      %3237 = vmatpush.msra.mxu0 0.0
      %3238 = vmatpush.msra.mxu0 %v3226
      %3239 = vmatpush.msra.mxu0 %v3225
      %3240 = vmatpush.msra.mxu0 %v3224
      %3241 = vmatpush.msra.mxu0 %v3223
      %3242 = vmatpush.msra.mxu0 %v3222
      %3243 = vmatpush.msra.mxu0 %v3221
      %3244 = vmatpush.msra.mxu0 %v3220
      %3245 = vmatpush.msra.mxu0 %v3219
      %3246 = vmatmul.f32.gmra.mxu0 %v3228
      %v3247 = vpop.f32.mrf.mxu0
      %v3248 = vadd.f32 0.0, %v3247
      %3249 = vdwg.mxu0
      %v3250 = vadd.f32 %v3199, %v3248
      %v3251 = vld [vmem:[#allocation4 + $0x2] sm:$0x1]
      %v3252 = vld [vmem:[#allocation4 + $0x3] sm:$0x1]
      %v3253 = vmax.f32 %v3251, %v3252
      %v3254 = vadd.f32 %v3253, %v3215
      %v3255 = vmax.f32 %v3254, 0.0
      %s3256 = scalar_lea.vmem %s5, 256
      %v3257 = vld [vmem:[%s3256] sm:$0xff]
      %v3258 = vld [vmem:[%s3256 + $0x8] sm:$0xff]
      %v3259 = vld [vmem:[%s3256 + $0x10] sm:$0xff]
      %v3260 = vld [vmem:[%s3256 + $0x18] sm:$0xff]
      %v3261 = vld [vmem:[%s3256 + $0x20] sm:$0xff]
      %v3262 = vld [vmem:[%s3256 + $0x28] sm:$0xff]
      %v3263 = vld [vmem:[%s3256 + $0x30] sm:$0xff]
      %v3264 = vld [vmem:[%s3256 + $0x38] sm:$0xff]
      %v3266 = vsel %vm2530, %v3255, 0
      %3268 = vmatpush.msra.mxu0 0.0
      %3269 = vmatpush.msra.mxu0 0.0
      %3270 = vmatpush.msra.mxu0 0.0
      %3271 = vmatpush.msra.mxu0 0.0
      %3272 = vmatpush.msra.mxu0 0.0
      %3273 = vmatpush.msra.mxu0 0.0
      %3274 = vmatpush.msra.mxu0 0.0
      %3275 = vmatpush.msra.mxu0 0.0
      %3276 = vmatpush.msra.mxu0 %v3264
      %3277 = vmatpush.msra.mxu0 %v3263
      %3278 = vmatpush.msra.mxu0 %v3262
      %3279 = vmatpush.msra.mxu0 %v3261
      %3280 = vmatpush.msra.mxu0 %v3260
      %3281 = vmatpush.msra.mxu0 %v3259
      %3282 = vmatpush.msra.mxu0 %v3258
      %3283 = vmatpush.msra.mxu0 %v3257
      %3284 = vmatmul.f32.gmra.mxu0 %v3266
      %v3285 = vpop.f32.mrf.mxu0
      %v3286 = vadd.f32 0.0, %v3285
      %3287 = vdwg.mxu0
      %v3288 = vadd.f32 %v3250, %v3286
      %v3289 = vld [vmem:[#allocation4 + $0x4] sm:$0x1]
      %v3290 = vld [vmem:[#allocation4 + $0x5] sm:$0x1]
      %v3291 = vmax.f32 %v3289, %v3290
      %v3292 = vadd.f32 %v3291, %v3215
      %v3293 = vmax.f32 %v3292, 0.0
      %s3294 = scalar_lea.vmem %s5, 320
      %v3295 = vld [vmem:[%s3294] sm:$0xff]
      %v3296 = vld [vmem:[%s3294 + $0x8] sm:$0xff]
      %v3297 = vld [vmem:[%s3294 + $0x10] sm:$0xff]
      %v3298 = vld [vmem:[%s3294 + $0x18] sm:$0xff]
      %v3299 = vld [vmem:[%s3294 + $0x20] sm:$0xff]
      %v3300 = vld [vmem:[%s3294 + $0x28] sm:$0xff]
      %v3301 = vld [vmem:[%s3294 + $0x30] sm:$0xff]
      %v3302 = vld [vmem:[%s3294 + $0x38] sm:$0xff]
      %v3304 = vsel %vm2530, %v3293, 0
      %3306 = vmatpush.msra.mxu0 0.0
      %3307 = vmatpush.msra.mxu0 0.0
      %3308 = vmatpush.msra.mxu0 0.0
      %3309 = vmatpush.msra.mxu0 0.0
      %3310 = vmatpush.msra.mxu0 0.0
      %3311 = vmatpush.msra.mxu0 0.0
      %3312 = vmatpush.msra.mxu0 0.0
      %3313 = vmatpush.msra.mxu0 0.0
      %3314 = vmatpush.msra.mxu0 %v3302
      %3315 = vmatpush.msra.mxu0 %v3301
      %3316 = vmatpush.msra.mxu0 %v3300
      %3317 = vmatpush.msra.mxu0 %v3299
      %3318 = vmatpush.msra.mxu0 %v3298
      %3319 = vmatpush.msra.mxu0 %v3297
      %3320 = vmatpush.msra.mxu0 %v3296
      %3321 = vmatpush.msra.mxu0 %v3295
      %3322 = vmatmul.f32.gmra.mxu0 %v3304
      %v3323 = vpop.f32.mrf.mxu0
      %v3324 = vadd.f32 0.0, %v3323
      %3325 = vdwg.mxu0
      %v3326 = vadd.f32 %v3288, %v3324
      %v3327 = vld [vmem:[#allocation3 + $0x20] sm:$0x3f]
      %v3328 = vld [vmem:[%s3061 + $0x21] sm:$0x3f]
      %v3329 = vadd.f32 %v3327, %v3328
      %v3330 = vld [vmem:[%s3068 + $0x22] sm:$0x3f]
      %v3331 = vadd.f32 %v3329, %v3330
      %v3332 = vld [vmem:[#allocation3 + $0x28] sm:$0x3f]
      %v3333 = vld [vmem:[%s3061 + $0x29] sm:$0x3f]
      %v3334 = vadd.f32 %v3332, %v3333
      %v3335 = vld [vmem:[%s3068 + $0x2a] sm:$0x3f]
      %v3336 = vadd.f32 %v3334, %v3335
      %v3337 = vmax.f32 %v3331, %v3336
      %3338 = vst.msk [vmem:[#allocation4] sm:$0x3f] %vm3086, %v3337
      %v3339 = vld [vmem:[#allocation4] sm:$0x1]
      %v3340 = vld [vmem:[#allocation4 + $0x1] sm:$0x1]
      %v3341 = vmax.f32 %v3339, %v3340
      %v3342 = vld [vmem:[%s4] sm:$0x1]
      %v3343 = vadd.f32 %v3341, %v3342
      %v3344 = vmax.f32 %v3343, 0.0
      %s3345 = scalar_lea.vmem %s5, 384
      %v3346 = vld [vmem:[%s3345] sm:$0xff]
      %v3347 = vld [vmem:[%s3345 + $0x8] sm:$0xff]
      %v3348 = vld [vmem:[%s3345 + $0x10] sm:$0xff]
      %v3349 = vld [vmem:[%s3345 + $0x18] sm:$0xff]
      %v3350 = vld [vmem:[%s3345 + $0x20] sm:$0xff]
      %v3351 = vld [vmem:[%s3345 + $0x28] sm:$0xff]
      %v3352 = vld [vmem:[%s3345 + $0x30] sm:$0xff]
      %v3353 = vld [vmem:[%s3345 + $0x38] sm:$0xff]
      %v3355 = vsel %vm2530, %v3344, 0
      %3357 = vmatpush.msra.mxu0 0.0
      %3358 = vmatpush.msra.mxu0 0.0
      %3359 = vmatpush.msra.mxu0 0.0
      %3360 = vmatpush.msra.mxu0 0.0
      %3361 = vmatpush.msra.mxu0 0.0
      %3362 = vmatpush.msra.mxu0 0.0
      %3363 = vmatpush.msra.mxu0 0.0
      %3364 = vmatpush.msra.mxu0 0.0
      %3365 = vmatpush.msra.mxu0 %v3353
      %3366 = vmatpush.msra.mxu0 %v3352
      %3367 = vmatpush.msra.mxu0 %v3351
      %3368 = vmatpush.msra.mxu0 %v3350
      %3369 = vmatpush.msra.mxu0 %v3349
      %3370 = vmatpush.msra.mxu0 %v3348
      %3371 = vmatpush.msra.mxu0 %v3347
      %3372 = vmatpush.msra.mxu0 %v3346
      %3373 = vmatmul.f32.gmra.mxu0 %v3355
      %v3374 = vpop.f32.mrf.mxu0
      %v3375 = vadd.f32 0.0, %v3374
      %3376 = vdwg.mxu0
      %v3377 = vadd.f32 %v3326, %v3375
      %v3378 = vld [vmem:[#allocation4 + $0x2] sm:$0x1]
      %v3379 = vld [vmem:[#allocation4 + $0x3] sm:$0x1]
      %v3380 = vmax.f32 %v3378, %v3379
      %v3381 = vadd.f32 %v3380, %v3342
      %v3382 = vmax.f32 %v3381, 0.0
      %s3383 = scalar_lea.vmem %s5, 448
      %v3384 = vld [vmem:[%s3383] sm:$0xff]
      %v3385 = vld [vmem:[%s3383 + $0x8] sm:$0xff]
      %v3386 = vld [vmem:[%s3383 + $0x10] sm:$0xff]
      %v3387 = vld [vmem:[%s3383 + $0x18] sm:$0xff]
      %v3388 = vld [vmem:[%s3383 + $0x20] sm:$0xff]
      %v3389 = vld [vmem:[%s3383 + $0x28] sm:$0xff]
      %v3390 = vld [vmem:[%s3383 + $0x30] sm:$0xff]
      %v3391 = vld [vmem:[%s3383 + $0x38] sm:$0xff]
      %v3393 = vsel %vm2530, %v3382, 0
      %3395 = vmatpush.msra.mxu0 0.0
      %3396 = vmatpush.msra.mxu0 0.0
      %3397 = vmatpush.msra.mxu0 0.0
      %3398 = vmatpush.msra.mxu0 0.0
      %3399 = vmatpush.msra.mxu0 0.0
      %3400 = vmatpush.msra.mxu0 0.0
      %3401 = vmatpush.msra.mxu0 0.0
      %3402 = vmatpush.msra.mxu0 0.0
      %3403 = vmatpush.msra.mxu0 %v3391
      %3404 = vmatpush.msra.mxu0 %v3390
      %3405 = vmatpush.msra.mxu0 %v3389
      %3406 = vmatpush.msra.mxu0 %v3388
      %3407 = vmatpush.msra.mxu0 %v3387
      %3408 = vmatpush.msra.mxu0 %v3386
      %3409 = vmatpush.msra.mxu0 %v3385
      %3410 = vmatpush.msra.mxu0 %v3384
      %3411 = vmatmul.f32.gmra.mxu0 %v3393
      %v3412 = vpop.f32.mrf.mxu0
      %v3413 = vadd.f32 0.0, %v3412
      %3414 = vdwg.mxu0
      %v3415 = vadd.f32 %v3377, %v3413
      %v3416 = vld [vmem:[#allocation4 + $0x4] sm:$0x1]
      %v3417 = vld [vmem:[#allocation4 + $0x5] sm:$0x1]
      %v3418 = vmax.f32 %v3416, %v3417
      %v3419 = vadd.f32 %v3418, %v3342
      %v3420 = vmax.f32 %v3419, 0.0
      %s3421 = scalar_lea.vmem %s5, 512
      %v3422 = vld [vmem:[%s3421] sm:$0xff]
      %v3423 = vld [vmem:[%s3421 + $0x8] sm:$0xff]
      %v3424 = vld [vmem:[%s3421 + $0x10] sm:$0xff]
      %v3425 = vld [vmem:[%s3421 + $0x18] sm:$0xff]
      %v3426 = vld [vmem:[%s3421 + $0x20] sm:$0xff]
      %v3427 = vld [vmem:[%s3421 + $0x28] sm:$0xff]
      %v3428 = vld [vmem:[%s3421 + $0x30] sm:$0xff]
      %v3429 = vld [vmem:[%s3421 + $0x38] sm:$0xff]
      %v3431 = vsel %vm2530, %v3420, 0
      %3433 = vmatpush.msra.mxu0 0.0
      %3434 = vmatpush.msra.mxu0 0.0
      %3435 = vmatpush.msra.mxu0 0.0
      %3436 = vmatpush.msra.mxu0 0.0
      %3437 = vmatpush.msra.mxu0 0.0
      %3438 = vmatpush.msra.mxu0 0.0
      %3439 = vmatpush.msra.mxu0 0.0
      %3440 = vmatpush.msra.mxu0 0.0
      %3441 = vmatpush.msra.mxu0 %v3429
      %3442 = vmatpush.msra.mxu0 %v3428
      %3443 = vmatpush.msra.mxu0 %v3427
      %3444 = vmatpush.msra.mxu0 %v3426
      %3445 = vmatpush.msra.mxu0 %v3425
      %3446 = vmatpush.msra.mxu0 %v3424
      %3447 = vmatpush.msra.mxu0 %v3423
      %3448 = vmatpush.msra.mxu0 %v3422
      %3449 = vmatmul.f32.gmra.mxu0 %v3431
      %v3450 = vpop.f32.mrf.mxu0
      %v3451 = vadd.f32 0.0, %v3450
      %3452 = vdwg.mxu0
      %v3453 = vadd.f32 %v3415, %v3451
      %v3454 = vld [vmem:[%s6] sm:$0x1]
      %v3455 = vadd.f32 %v3453, %v3454
      %v3456 = vmax.f32 %v3455, 0.0
      %v3457 = vld [vmem:[%s7] sm:$0x1]
      %v3458 = vmul.f32 %v3456, %v3457
      %vm3459 = vcmask 57344
      %v3460 = vsel %vm3459, %v3458, 0.0
      %3461 = vadd.xlane.f32.xlu0 %v3460
      %v3462 = vpop.xlane.xlu0 %3461
      %v3463 = vld [vmem:[#allocation5] sm:$0x1]
      %v3464 = vadd.f32 %v3462, %v3463
      %v3465 = vsub.f32 0.0, %v3464
      %v3466 = vmul.f32 %v3465, 1.442695
      %v3467 = vpow.pop %v3466
      %v3468 = vadd.f32 %v3467, 1.0
      %v3469 = vrcp.pop %v3468
      %v3470 = vmul.f32 %v3468, %v3469
      %v3471 = vsub.f32 1.0, %v3470
      %v3472 = vmul.f32 %v3469, %v3471
      %v3473 = vadd.f32 %v3469, %v3472
      %vm3474 = vweird.f32 %v3468
      %vm3475 = vweird.f32 %v3469
      %vm3476 = vmor %vm3474, %vm3475
      %v3477 = vsel %vm3476, %v3469, %v3473
      %v3478 = vand.u32 2147483647, %v3468
      %vm3479 = vcmp.eq.f32.partialorder %v3478, 8.507059e+37
      %v3480 = vand.u32 %v3468, 2147483648
      %v3481 = vor.u32 1.1754944e-38, %v3480
      %v3482 = vsel %vm3479, %v3481, %v3477
      %v3483 = vmul.f32 1.0, %v3482
      %vm3484 = vcmask 0
      %3485 = vst.msk [vmem:[%s335] sm:$0x1] %vm3484, %v3483
      %p3486 = scmp.lt.s32.totalorder %s22, 1
      %s3487 = scalar_select %p3486, %s22, 1
      %s3488 = scalar_lea.vmem %s9, %s3487
      // Predicated region
      $region57: #{tpu_custom_call.1} parent=55 // pred_check
        %p3489 = pneg %p234
      $region58: #{tpu_custom_call.1} parent=55 // pred_check_branch
        %3491 = sbr.rel (%p3489) target = $region60
      $region59: #{tpu_custom_call.1} parent=55 // pred_region
        _
      $region60: #{tpu_custom_call.1} parent=55 // pred_fallthru
        _
    $region56: #{tpu_custom_call.1} parent=5 // pred_fallthru
      _
    %p3492 = scmp.le.s32.totalorder 2, %s17
    // Predicated region
    $region61: #{tpu_custom_call.1} parent=5 // pred_check
      %p3493 = pneg %p3492
    $region62: #{tpu_custom_call.1} parent=5 // pred_check_branch
      %3495 = sbr.rel (%p3493) target = $region64
    $region63: #{tpu_custom_call.1} parent=5 // pred_region
      %s3496 = ssub.s32 %s17, 2
      // Predicated region
      $region65: #{tpu_custom_call.1} parent=63 // pred_check
        %p3497 = pneg %p240
      $region66: #{tpu_custom_call.1} parent=63 // pred_check_branch
        %3499 = sbr.rel (%p3497) target = $region68
      $region67: #{tpu_custom_call.1} parent=63 // pred_region
        %p3500 = scmp.lt.s32.totalorder %s23, 1
        %s3501 = scalar_select %p3500, %s23, 1
        %s3502 = scalar_lea.vmem %s9, %s3501
      $region68: #{tpu_custom_call.1} parent=63 // pred_fallthru
        _
    $region64: #{tpu_custom_call.1} parent=5 // pred_fallthru
      _
  $region6: #{tpu_custom_call.1} parent=0 // loop_footer
    %s21 = sadd.s32 1, %s17
  $region7: #{tpu_custom_call.1} parent=0 // loop_footer_branch
    %16 = sbr.rel target = $region3
  $region8: #{tpu_custom_call.1} parent=0 // loop_exit
    _

</llo_original>
